<compile_context>
chip_gen: v7x
topology: tpu7x:2x2x1
jax: 0.10.0
libtpu: 0.0.40
codegen_flags: <defaults>
</compile_context>

<pallas_src>
import functools
import math

import numpy as np
import jax
import jax.numpy as jnp
from jax import lax
from jax.experimental import pallas as pl
from jax.experimental.pallas import tpu as pltpu

_EPS = 1e-5   # nn.BatchNorm2d default


def _vmem_limit_bytes():
    """Generation-aware scoped-VMEM budget (v7x: 64 MiB/TC, v5e/v6e: 128 MiB)."""
    try:
        cap = int(pltpu.get_tpu_info().vmem_capacity_bytes)
    except Exception:
        cap = 64 * 1024 * 1024
    return max(32 * 1024 * 1024, min((cap * 3) // 4, 100 * 1024 * 1024))


# --------------------------------------------------------------------------- #
# Kernels
# --------------------------------------------------------------------------- #
def _conv1_kernel(x2p_ref, upp_ref, wa_ref, wb_ref, y1_ref, st_ref, *, H2):
    """conv1 over two channel-contiguous halo-padded slabs (x2 | upsampled x1)
    as banded MXU matmuls, plus per-sample BN1 lane partial sums."""
    acc = None
    for dy in range(3):
        for src_ref, w_ref in ((x2p_ref, wa_ref), (upp_ref, wb_ref)):
            part = jnp.dot(src_ref[0, dy:dy + H2, :], w_ref[dy],
                           preferred_element_type=jnp.float32)
            acc = part if acc is None else acc + part
    wc = acc.shape[-1]
    # bf16 intermediate (halves HBM writeback / pass-2 reads).
    y1_ref[...] = acc.astype(y1_ref.dtype).reshape(1, H2, wc)
    # Lane-dense BN1 partial sums (channel fold happens on tiny data in the
    # wrapper), taken from the f32 accumulator.
    s = jnp.sum(acc, axis=0, keepdims=True)
    q = jnp.sum(acc * acc, axis=0, keepdims=True)
    st_ref[...] = jnp.concatenate([s, q], axis=0).reshape(1, 2, wc)


def _conv2_bn_kernel(y1_ref, s1_ref, b1_ref, w2_ref, g2t_ref, b2t_ref, out_ref,
                     pad_ref, st_ref, *, H2, W2, c_mid, c_out, count):
    """BN1+ReLU -> halo slab -> conv2 (banded matmuls) -> BN2 stats, with the
    final BN2+ReLU applied in a last-step epilogue on the resident output."""
    n = pl.program_id(0)
    wc_out = W2 * c_out

    @pl.when(n == 0)
    def _init():
        # One full lane-dense zero of the halo slab (the interior is fully
        # overwritten every step; the 1-pixel border stays zero) and of the
        # BN2 accumulators.  Safe because this grid axis is "arbitrary".
        pad_ref[...] = jnp.zeros(pad_ref.shape, pad_ref.dtype)
        st_ref[...] = jnp.zeros(st_ref.shape, st_ref.dtype)

    # BatchNorm1 + ReLU with pre-folded, W-tiled scale/bias, written straight
    # into the slab interior (lane-dense store, no per-channel relayout).
    a1 = jnp.maximum(y1_ref[0].astype(jnp.float32) * s1_ref[...] + b1_ref[...],
                     0.0)
    pad_ref[1:H2 + 1, c_mid:(W2 + 1) * c_mid] = a1.astype(pad_ref.dtype)

    # conv2 as three banded matmuls (one per kernel row), f32 accumulation.
    acc = None
    for dy in range(3):
        part = jnp.dot(pad_ref[dy:dy + H2, :], w2_ref[dy],
                       preferred_element_type=jnp.float32)
        acc = part if acc is None else acc + part

    # Raw conv2 output goes straight into the VMEM-resident output block.
    out_ref[n] = acc

    # BN2 batch-statistic partial sums accumulated across the batch in VMEM.
    st_ref[0:1, :] = st_ref[0:1, :] + jnp.sum(acc, axis=0, keepdims=True)
    st_ref[1:2, :] = st_ref[1:2, :] + jnp.sum(acc * acc, axis=0, keepdims=True)

    @pl.when(n == pl.num_programs(0) - 1)
    def _epilogue():
        # Fold the per-(w, channel) lane sums down to per-channel totals and
        # broadcast them back to the tiled lane layout with one tiny MXU
        # matmul against a 0/1 "same channel" matrix (no cross-lane reshapes).
        row_ch = lax.broadcasted_iota(jnp.int32, (wc_out, wc_out), 0) % c_out
        col_ch = lax.broadcasted_iota(jnp.int32, (wc_out, wc_out), 1) % c_out
        fold = (row_ch == col_ch).astype(jnp.float32)
        tot = jnp.dot(st_ref[...], fold, preferred_element_type=jnp.float32)
        inv = 1.0 / count
        mu = tot[0:1, :] * inv
        var = jnp.maximum(tot[1:2, :] * inv - mu * mu, 0.0)   # biased variance
        scale = g2t_ref[...] * lax.rsqrt(var + _EPS)
        bias = b2t_ref[...] - mu * scale
        out_ref[...] = jnp.maximum(
            out_ref[...] * scale.reshape(1, 1, wc_out)
            + bias.reshape(1, 1, wc_out), 0.0)


# --------------------------------------------------------------------------- #
# Host-side helpers
# --------------------------------------------------------------------------- #
def _bilinear_matrix_padded(n_in, n_out, pad_before):
    """(n_out+2, n_in): rows = output pixels including a zero conv-halo row on
    each side.  Encodes nn.Upsample(x2, bilinear, align_corners=True) followed
    by the zero-pad / crop Up.forward applies to match the skip size."""
    n_up = 2 * n_in
    m = np.zeros((n_out + 2, n_in), dtype=np.float32)
    for j in range(n_up):
        o = j + pad_before
        if o < 0 or o >= n_out:
            continue
        src = 0.0 if (n_in <= 1 or n_up <= 1) else j * (n_in - 1) / (n_up - 1)
        i0 = min(int(math.floor(src)), n_in - 1)
        i1 = min(i0 + 1, n_in - 1)
        f = src - i0
        m[o + 1, i0] += 1.0 - f
        m[o + 1, i1] += f
    return jnp.asarray(m)


def _banded_conv_weights(w_hwio, width):
    """(3, 3, ci, co) HWIO weights -> (3, (width+2)*ci, width*co) block-banded
    matrices so a 'SAME' 3x3 conv becomes, per kernel row dy, one lane-dense
    matmul  pad[dy:dy+H, :] @ B[dy]  with output layout (H, width*co)."""
    kh, kw, ci, co = w_hwio.shape
    t = np.zeros((width, (width + 2) * ci, kw * ci), np.float32)
    for x in range(width):
        for dx in range(kw):
            for q in range(ci):
                t[x, (x + dx) * ci + q, dx * ci + q] = 1.0
    w_flat = w_hwio.astype(jnp.float32).reshape(kh, kw * ci, co)
    banded = jnp.einsum('xpr,drj->dpxj', jnp.asarray(t), w_flat)
    return banded.reshape(kh, (width + 2) * ci, width * co)


def _bn1_fold(stat, gamma, beta, count, width):
    """Per-sample lane partial sums (N, 2, width*c) -> BN scale/bias tiled to
    the lane-dense (1, width*c) layout consumed by pass 2."""
    c = gamma.size
    tot_lane = jnp.sum(stat.astype(jnp.float32), axis=0)          # (2, width*c)
    tot = jnp.sum(tot_lane.reshape(2, width, c), axis=1)          # (2, c)
    mu = tot[0] / count
    var = jnp.maximum(tot[1] / count - mu * mu, 0.0)              # biased var
    scale = gamma.reshape(-1).astype(jnp.float32) * lax.rsqrt(var + _EPS)
    bias = beta.reshape(-1).astype(jnp.float32) - mu * scale
    return (jnp.tile(scale, width).reshape(1, width * c),
            jnp.tile(bias, width).reshape(1, width * c))


def init_params(key, in_channels, skip_channels, out_channels):
    """DoubleConv(in+skip -> out): conv weights in HWIO, BN gamma/beta at init.
    (The spec's Up passes no mid_channels, so mid == out_channels.)"""
    c_cat = in_channels + skip_channels
    c_mid = max(1, out_channels)
    k1, k2 = jax.random.split(key)
    w1 = jax.random.normal(k1, (3, 3, c_cat, c_mid), jnp.float32) * 0.1
    w2 = jax.random.normal(k2, (3, 3, c_mid, out_channels), jnp.float32) * 0.1
    g1 = jnp.ones((1, c_mid), jnp.float32)
    b1 = jnp.zeros((1, c_mid), jnp.float32)
    g2 = jnp.ones((1, out_channels), jnp.float32)
    b2 = jnp.zeros((1, out_channels), jnp.float32)
    return (w1, g1, b1, w2, g2, b2)


# --------------------------------------------------------------------------- #
# Forward
# --------------------------------------------------------------------------- #
@jax.jit
def up_forward(x1_nchw, x2_nchw, params):
    """Pallas implementation of Up.forward. Inputs/outputs are NCHW (PyTorch)."""
    w1, g1, b1, w2, g2, b2 = params
    N, c_in, H1, W1 = x1_nchw.shape
    _, c_skip, H2, W2 = x2_nchw.shape
    c_mid = w1.shape[-1]
    c_out = w2.shape[-1]
    count = N * H2 * W2

    # bf16 before the NCHW->NHWC relayout (halves transpose traffic).  The
    # bilinear x2 upsample (+ the pad/crop to x2's HW) is two small dense
    # interpolation matmuls whose matrices also carry the conv halo (zero
    # border rows/cols), so both conv inputs arrive pre-halo-padded.
    x1 = jnp.transpose(x1_nchw.astype(jnp.bfloat16), (0, 2, 3, 1))   # NHWC bf16
    x2 = jnp.transpose(x2_nchw.astype(jnp.bfloat16), (0, 2, 3, 1))
    uy = _bilinear_matrix_padded(H1, H2, (H2 - 2 * H1) // 2)          # (H2+2, H1)
    ux = _bilinear_matrix_padded(W1, W2, (W2 - 2 * W1) // 2)          # (W2+2, W1)
    up_d = jnp.einsum('yh,nhwc,xw->nyxc', uy, x1, ux
                      ).astype(jnp.bfloat16).reshape(N, H2 + 2, (W2 + 2) * c_in)
    x2_d = jnp.pad(x2, ((0, 0), (1, 1), (1, 1), (0, 0))
                   ).reshape(N, H2 + 2, (W2 + 2) * c_skip)

    # Block-banded conv weights; conv1's are split into the x2 / up channel
    # regions so the concat never happens in-kernel.
    w1a = _banded_conv_weights(w1[:, :, :c_skip, :], W2).astype(jnp.bfloat16)
    w1b = _banded_conv_weights(w1[:, :, c_skip:, :], W2).astype(jnp.bfloat16)
    w2b = _banded_conv_weights(w2, W2).astype(jnp.bfloat16)

    vmem_limit = _vmem_limit_bytes()
    cparams_par = pltpu.CompilerParams(
        dimension_semantics=("parallel",), vmem_limit_bytes=vmem_limit)
    cparams_arb = pltpu.CompilerParams(
        dimension_semantics=("arbitrary",), vmem_limit_bytes=vmem_limit)

    # ---- pass 1: conv1 (banded matmuls) + BN1 lane partial sums ------------
    y1_d, st1 = pl.pallas_call(
        functools.partial(_conv1_kernel, H2=H2),
        out_shape=(jax.ShapeDtypeStruct((N, H2, W2 * c_mid), jnp.bfloat16),
                   jax.ShapeDtypeStruct((N, 2, W2 * c_mid), jnp.float32)),
        grid=(N,),
        in_specs=[
            pl.BlockSpec((1, H2 + 2, (W2 + 2) * c_skip), lambda n: (n, 0, 0)),
            pl.BlockSpec((1, H2 + 2, (W2 + 2) * c_in), lambda n: (n, 0, 0)),
            pl.BlockSpec((3, (W2 + 2) * c_skip, W2 * c_mid), lambda n: (0, 0, 0)),
            pl.BlockSpec((3, (W2 + 2) * c_in, W2 * c_mid), lambda n: (0, 0, 0)),
        ],
        out_specs=(
            pl.BlockSpec((1, H2, W2 * c_mid), lambda n: (n, 0, 0)),
            pl.BlockSpec((1, 2, W2 * c_mid), lambda n: (n, 0, 0)),
        ),
        compiler_params=cparams_par,
    )(x2_d, up_d, w1a, w1b)

    # Fold BN1 batch statistics into W-tiled per-channel scale/bias (tiny XLA).
    s1_t, b1_t = _bn1_fold(st1, g1, b1, count, W2)

    # BN2 affine params pre-tiled to the lane-dense layout (the BN2 statistics
    # themselves are produced inside pass 2's epilogue).
    g2_t = jnp.tile(g2.reshape(-1).astype(jnp.float32), W2).reshape(1, W2 * c_out)
    b2_t = jnp.tile(b2.reshape(-1).astype(jnp.float32), W2).reshape(1, W2 * c_out)

    # ---- pass 2 (old passes 2+3 fused): BN1+ReLU -> conv2 -> BN2+ReLU -------
    out_d = pl.pallas_call(
        functools.partial(_conv2_bn_kernel, H2=H2, W2=W2, c_mid=c_mid,
                          c_out=c_out, count=count),
        out_shape=jax.ShapeDtypeStruct((N, H2, W2 * c_out), jnp.float32),
        grid=(N,),
        in_specs=[
            pl.BlockSpec((1, H2, W2 * c_mid), lambda n: (n, 0, 0)),
            pl.BlockSpec((1, W2 * c_mid), lambda n: (0, 0)),
            pl.BlockSpec((1, W2 * c_mid), lambda n: (0, 0)),
            pl.BlockSpec((3, (W2 + 2) * c_mid, W2 * c_out), lambda n: (0, 0, 0)),
            pl.BlockSpec((1, W2 * c_out), lambda n: (0, 0)),
            pl.BlockSpec((1, W2 * c_out), lambda n: (0, 0)),
        ],
        # Constant index_map -> the whole output stays resident in VMEM across
        # the batch and is written back to HBM once after the epilogue.
        out_specs=pl.BlockSpec((N, H2, W2 * c_out), lambda n: (0, 0, 0)),
        scratch_shapes=[
            pltpu.VMEM((H2 + 2, (W2 + 2) * c_mid), jnp.bfloat16),   # halo slab
            pltpu.VMEM((2, W2 * c_out), jnp.float32),               # BN2 sums
        ],
        compiler_params=cparams_arb,
    )(y1_d, s1_t, b1_t, w2b, g2_t, b2_t)

    out = out_d.reshape(N, H2, W2, c_out)
    return jnp.transpose(out, (0, 3, 1, 2))                          # back to NCHW


# --------------------------------------------------------------------------- #
# Pure-JAX reference (f32 module semantics) for validation
# --------------------------------------------------------------------------- #
def up_forward_ref(x1_nchw, x2_nchw, params):
    w1, g1, b1, w2, g2, b2 = params
    x1 = jnp.transpose(x1_nchw, (0, 2, 3, 1)).astype(jnp.float32)
    x2 = jnp.transpose(x2_nchw, (0, 2, 3, 1)).astype(jnp.float32)
    _, H1, W1, _ = x1.shape
    _, H2, W2, _ = x2.shape
    uy = _bilinear_matrix_padded(H1, H2, (H2 - 2 * H1) // 2)[1:-1]
    ux = _bilinear_matrix_padded(W1, W2, (W2 - 2 * W1) // 2)[1:-1]
    up = jnp.einsum('yh,nhwc,xw->nyxc', uy, x1, ux)
    x = jnp.concatenate([x2, up], axis=-1)

    def conv(x, w):
        return lax.conv_general_dilated(x, w, (1, 1), 'SAME',
                                        dimension_numbers=('NHWC', 'HWIO', 'NHWC'))

    def bn_relu(y, g, b):
        mu = y.mean(axis=(0, 1, 2), keepdims=True)
        var = ((y - mu) ** 2).mean(axis=(0, 1, 2), keepdims=True)
        yh = (y - mu) / jnp.sqrt(var + _EPS) * g.reshape(1, 1, 1, -1) + b.reshape(1, 1, 1, -1)
        return jnp.maximum(yh, 0.0)

    y = bn_relu(conv(x, w1), g1, b1)
    y = bn_relu(conv(y, w2), g2, b2)
    return jnp.transpose(y, (0, 3, 1, 2))


# --------------------------------------------------------------------------- #
# Test
# --------------------------------------------------------------------------- #
if __name__ == "__main__":
    key = jax.random.PRNGKey(0)
    kx1, kx2, kp = jax.random.split(key, 3)

    # Up(in_channels=4, skip_channels=4, out_channels=8, bilinear=True)
    N, c_in, c_skip, c_out = 2, 4, 4, 8
    H1 = W1 = 16                       # x1: 16x16 -> concat/convs run at 32x32

    # Make test data exactly bf16-representable so the f32 reference and the
    # bf16-fed kernel see identical operands; the remaining difference comes
    # only from bf16 storage of the upsample / intermediate activations.
    def bf16_round(a):
        return a.astype(jnp.bfloat16).astype(jnp.float32)

    x1 = bf16_round(jax.random.normal(kx1, (N, c_in, H1, W1), jnp.float32))
    x2 = bf16_round(jax.random.normal(kx2, (N, c_skip, 2 * H1, 2 * W1), jnp.float32))
    params = tuple(bf16_round(p) for p in init_params(kp, c_in, c_skip, c_out))

    out = jax.block_until_ready(up_forward(x1, x2, params))
    ref = jax.block_until_ready(up_forward_ref(x1, x2, params))

    assert out.shape == (N, c_out, 2 * H1, 2 * W1), out.shape
    # Tolerance reflects bf16 storage of the upsample + mid activations.
    np.testing.assert_allclose(np.asarray(out), np.asarray(ref), atol=4e-2, rtol=4e-2)
    print("KERNEL_OK")
</pallas_src>

<mosaic_0001>
module attributes {stable_mosaic.version = 11 : i64} {
  func.func @_conv1_kernel(%arg0: i32, %arg1: memref<1x34x136xbf16, #tpu.memory_space<vmem>>, %arg2: memref<1x34x136xbf16, #tpu.memory_space<vmem>>, %arg3: memref<3x136x256xbf16, #tpu.memory_space<vmem>>, %arg4: memref<3x136x256xbf16, #tpu.memory_space<vmem>>, %arg5: memref<1x32x256xbf16, #tpu.memory_space<vmem>>, %arg6: memref<1x2x256xf32, #tpu.memory_space<vmem>>) attributes {dimension_semantics = [#tpu.dimension_semantics<parallel>], iteration_bounds = array<i64: 2>, scalar_prefetch = 0 : i64, scratch_operands = 0 : i64, tpu.core_type = #tpu.core_type<tc>, window_params = [{transform_indices = @transform_0, window_bounds = array<i64: 1, 34, 136>}, {transform_indices = @transform_1, window_bounds = array<i64: 1, 34, 136>}, {pipeline_mode = #tpu.pipeline_mode<synchronous>, transform_indices = @transform_2, window_bounds = array<i64: 3, 136, 256>}, {pipeline_mode = #tpu.pipeline_mode<synchronous>, transform_indices = @transform_3, window_bounds = array<i64: 3, 136, 256>}, {transform_indices = @transform_4, window_bounds = array<i64: 1, 32, 256>}, {transform_indices = @transform_5, window_bounds = array<i64: 1, 2, 256>}]} {
    %c0 = arith.constant 0 : index
    %c0_0 = arith.constant 0 : index
    %c0_1 = arith.constant 0 : index
    %0 = vector.load %arg1[%c0, %c0_0, %c0_1] : memref<1x34x136xbf16, #tpu.memory_space<vmem>>, vector<1x32x136xbf16>
    %1 = vector.shape_cast %0 : vector<1x32x136xbf16> to vector<32x136xbf16>
    %c0_2 = arith.constant 0 : index
    %c0_3 = arith.constant 0 : index
    %c0_4 = arith.constant 0 : index
    %2 = vector.load %arg3[%c0_2, %c0_3, %c0_4] : memref<3x136x256xbf16, #tpu.memory_space<vmem>>, vector<1x136x256xbf16>
    %3 = vector.shape_cast %2 : vector<1x136x256xbf16> to vector<136x256xbf16>
    %cst = arith.constant dense<0.000000e+00> : vector<32x256xf32>
    %4 = tpu.matmul %1, %3, %cst {dimension_numbers = #tpu.dot_dimension_numbers<[1], [0], [0], [1], [0, 0, 1, 1], [], []>} : vector<32x136xbf16>, vector<136x256xbf16>, vector<32x256xf32> -> vector<32x256xf32>
    %c0_5 = arith.constant 0 : index
    %c0_6 = arith.constant 0 : index
    %c0_7 = arith.constant 0 : index
    %5 = vector.load %arg2[%c0_5, %c0_6, %c0_7] : memref<1x34x136xbf16, #tpu.memory_space<vmem>>, vector<1x32x136xbf16>
    %6 = vector.shape_cast %5 : vector<1x32x136xbf16> to vector<32x136xbf16>
    %c0_8 = arith.constant 0 : index
    %c0_9 = arith.constant 0 : index
    %c0_10 = arith.constant 0 : index
    %7 = vector.load %arg4[%c0_8, %c0_9, %c0_10] : memref<3x136x256xbf16, #tpu.memory_space<vmem>>, vector<1x136x256xbf16>
    %8 = vector.shape_cast %7 : vector<1x136x256xbf16> to vector<136x256xbf16>
    %cst_11 = arith.constant dense<0.000000e+00> : vector<32x256xf32>
    %9 = tpu.matmul %6, %8, %cst_11 {dimension_numbers = #tpu.dot_dimension_numbers<[1], [0], [0], [1], [0, 0, 1, 1], [], []>} : vector<32x136xbf16>, vector<136x256xbf16>, vector<32x256xf32> -> vector<32x256xf32>
    %10 = arith.addf %4, %9 : vector<32x256xf32>
    %c0_12 = arith.constant 0 : index
    %c1 = arith.constant 1 : index
    %c0_13 = arith.constant 0 : index
    %11 = vector.load %arg1[%c0_12, %c1, %c0_13] : memref<1x34x136xbf16, #tpu.memory_space<vmem>>, vector<1x32x136xbf16>
    %12 = vector.shape_cast %11 : vector<1x32x136xbf16> to vector<32x136xbf16>
    %c1_14 = arith.constant 1 : index
    %c0_15 = arith.constant 0 : index
    %c0_16 = arith.constant 0 : index
    %13 = vector.load %arg3[%c1_14, %c0_15, %c0_16] : memref<3x136x256xbf16, #tpu.memory_space<vmem>>, vector<1x136x256xbf16>
    %14 = vector.shape_cast %13 : vector<1x136x256xbf16> to vector<136x256xbf16>
    %cst_17 = arith.constant dense<0.000000e+00> : vector<32x256xf32>
    %15 = tpu.matmul %12, %14, %cst_17 {dimension_numbers = #tpu.dot_dimension_numbers<[1], [0], [0], [1], [0, 0, 1, 1], [], []>} : vector<32x136xbf16>, vector<136x256xbf16>, vector<32x256xf32> -> vector<32x256xf32>
    %16 = arith.addf %10, %15 : vector<32x256xf32>
    %c0_18 = arith.constant 0 : index
    %c1_19 = arith.constant 1 : index
    %c0_20 = arith.constant 0 : index
    %17 = vector.load %arg2[%c0_18, %c1_19, %c0_20] : memref<1x34x136xbf16, #tpu.memory_space<vmem>>, vector<1x32x136xbf16>
    %18 = vector.shape_cast %17 : vector<1x32x136xbf16> to vector<32x136xbf16>
    %c1_21 = arith.constant 1 : index
    %c0_22 = arith.constant 0 : index
    %c0_23 = arith.constant 0 : index
    %19 = vector.load %arg4[%c1_21, %c0_22, %c0_23] : memref<3x136x256xbf16, #tpu.memory_space<vmem>>, vector<1x136x256xbf16>
    %20 = vector.shape_cast %19 : vector<1x136x256xbf16> to vector<136x256xbf16>
    %cst_24 = arith.constant dense<0.000000e+00> : vector<32x256xf32>
    %21 = tpu.matmul %18, %20, %cst_24 {dimension_numbers = #tpu.dot_dimension_numbers<[1], [0], [0], [1], [0, 0, 1, 1], [], []>} : vector<32x136xbf16>, vector<136x256xbf16>, vector<32x256xf32> -> vector<32x256xf32>
    %22 = arith.addf %16, %21 : vector<32x256xf32>
    %c0_25 = arith.constant 0 : index
    %c2 = arith.constant 2 : index
    %c0_26 = arith.constant 0 : index
    %23 = vector.load %arg1[%c0_25, %c2, %c0_26] : memref<1x34x136xbf16, #tpu.memory_space<vmem>>, vector<1x32x136xbf16>
    %24 = vector.shape_cast %23 : vector<1x32x136xbf16> to vector<32x136xbf16>
    %c2_27 = arith.constant 2 : index
    %c0_28 = arith.constant 0 : index
    %c0_29 = arith.constant 0 : index
    %25 = vector.load %arg3[%c2_27, %c0_28, %c0_29] : memref<3x136x256xbf16, #tpu.memory_space<vmem>>, vector<1x136x256xbf16>
    %26 = vector.shape_cast %25 : vector<1x136x256xbf16> to vector<136x256xbf16>
    %cst_30 = arith.constant dense<0.000000e+00> : vector<32x256xf32>
    %27 = tpu.matmul %24, %26, %cst_30 {dimension_numbers = #tpu.dot_dimension_numbers<[1], [0], [0], [1], [0, 0, 1, 1], [], []>} : vector<32x136xbf16>, vector<136x256xbf16>, vector<32x256xf32> -> vector<32x256xf32>
    %28 = arith.addf %22, %27 : vector<32x256xf32>
    %c0_31 = arith.constant 0 : index
    %c2_32 = arith.constant 2 : index
    %c0_33 = arith.constant 0 : index
    %29 = vector.load %arg2[%c0_31, %c2_32, %c0_33] : memref<1x34x136xbf16, #tpu.memory_space<vmem>>, vector<1x32x136xbf16>
    %30 = vector.shape_cast %29 : vector<1x32x136xbf16> to vector<32x136xbf16>
    %c2_34 = arith.constant 2 : index
    %c0_35 = arith.constant 0 : index
    %c0_36 = arith.constant 0 : index
    %31 = vector.load %arg4[%c2_34, %c0_35, %c0_36] : memref<3x136x256xbf16, #tpu.memory_space<vmem>>, vector<1x136x256xbf16>
    %32 = vector.shape_cast %31 : vector<1x136x256xbf16> to vector<136x256xbf16>
    %cst_37 = arith.constant dense<0.000000e+00> : vector<32x256xf32>
    %33 = tpu.matmul %30, %32, %cst_37 {dimension_numbers = #tpu.dot_dimension_numbers<[1], [0], [0], [1], [0, 0, 1, 1], [], []>} : vector<32x136xbf16>, vector<136x256xbf16>, vector<32x256xf32> -> vector<32x256xf32>
    %34 = arith.addf %28, %33 : vector<32x256xf32>
    %35 = arith.truncf %34 : vector<32x256xf32> to vector<32x256xbf16>
    %36 = vector.shape_cast %35 : vector<32x256xbf16> to vector<1x32x256xbf16>
    %c0_38 = arith.constant 0 : index
    %c0_39 = arith.constant 0 : index
    %c0_40 = arith.constant 0 : index
    %37 = vector.load %arg5[%c0_38, %c0_39, %c0_40] : memref<1x32x256xbf16, #tpu.memory_space<vmem>>, vector<1x32x256xbf16>
    tpu.vector_store %arg5[%c0_38, %c0_39, %c0_40], %36 {strides = array<i32>} : memref<1x32x256xbf16, #tpu.memory_space<vmem>>, vector<1x32x256xbf16>,
    %cst_41 = arith.constant dense<0.000000e+00> : vector<256xf32>
    %38 = vector.multi_reduction <add>, %34, %cst_41 [0] : vector<32x256xf32> to vector<256xf32>
    %39 = vector.shape_cast %38 : vector<256xf32> to vector<1x256xf32>
    %40 = arith.mulf %34, %34 : vector<32x256xf32>
    %cst_42 = arith.constant dense<0.000000e+00> : vector<256xf32>
    %41 = vector.multi_reduction <add>, %40, %cst_42 [0] : vector<32x256xf32> to vector<256xf32>
    %42 = vector.shape_cast %41 : vector<256xf32> to vector<1x256xf32>
    %43 = tpu.concatenate %39, %42 in 0 : vector<1x256xf32>, vector<1x256xf32> -> vector<2x256xf32>
    %44 = vector.shape_cast %43 : vector<2x256xf32> to vector<1x2x256xf32>
    %c0_43 = arith.constant 0 : index
    %c0_44 = arith.constant 0 : index
    %c0_45 = arith.constant 0 : index
    %45 = vector.load %arg6[%c0_43, %c0_44, %c0_45] : memref<1x2x256xf32, #tpu.memory_space<vmem>>, vector<1x2x256xf32>
    tpu.vector_store %arg6[%c0_43, %c0_44, %c0_45], %44 {strides = array<i32>} : memref<1x2x256xf32, #tpu.memory_space<vmem>>, vector<1x2x256xf32>,
    return
  }
  func.func @transform_0(%arg0: i32) -> (i32, i32, i32) {
    %c0_i32 = arith.constant 0 : i32
    %c0_i32_0 = arith.constant 0 : i32
    %c0_i32_1 = arith.constant 0 : i32
    return %arg0, %c0_i32, %c0_i32_0 : i32, i32, i32
  }
  func.func @transform_1(%arg0: i32) -> (i32, i32, i32) {
    %c0_i32 = arith.constant 0 : i32
    %c0_i32_0 = arith.constant 0 : i32
    %c0_i32_1 = arith.constant 0 : i32
    return %arg0, %c0_i32, %c0_i32_0 : i32, i32, i32
  }
  func.func @transform_2(%arg0: i32) -> (i32, i32, i32) {
    %c0_i32 = arith.constant 0 : i32
    %c0_i32_0 = arith.constant 0 : i32
    %c0_i32_1 = arith.constant 0 : i32
    %c0_i32_2 = arith.constant 0 : i32
    return %c0_i32, %c0_i32_0, %c0_i32_1 : i32, i32, i32
  }
  func.func @transform_3(%arg0: i32) -> (i32, i32, i32) {
    %c0_i32 = arith.constant 0 : i32
    %c0_i32_0 = arith.constant 0 : i32
    %c0_i32_1 = arith.constant 0 : i32
    %c0_i32_2 = arith.constant 0 : i32
    return %c0_i32, %c0_i32_0, %c0_i32_1 : i32, i32, i32
  }
  func.func @transform_4(%arg0: i32) -> (i32, i32, i32) {
    %c0_i32 = arith.constant 0 : i32
    %c0_i32_0 = arith.constant 0 : i32
    %c0_i32_1 = arith.constant 0 : i32
    return %arg0, %c0_i32, %c0_i32_0 : i32, i32, i32
  }
  func.func @transform_5(%arg0: i32) -> (i32, i32, i32) {
    %c0_i32 = arith.constant 0 : i32
    %c0_i32_0 = arith.constant 0 : i32
    %c0_i32_1 = arith.constant 0 : i32
    return %arg0, %c0_i32, %c0_i32_0 : i32, i32, i32
  }
}

module attributes {stable_mosaic.version = 11 : i64} {
  func.func @_conv2_bn_kernel(%arg0: i32, %arg1: memref<1x32x256xbf16, #tpu.memory_space<vmem>>, %arg2: memref<1x256xf32, #tpu.memory_space<vmem>>, %arg3: memref<1x256xf32, #tpu.memory_space<vmem>>, %arg4: memref<3x272x256xbf16, #tpu.memory_space<vmem>>, %arg5: memref<1x256xf32, #tpu.memory_space<vmem>>, %arg6: memref<1x256xf32, #tpu.memory_space<vmem>>, %arg7: memref<2x32x256xf32, #tpu.memory_space<vmem>>, %arg8: memref<34x272xbf16, #tpu.memory_space<vmem>>, %arg9: memref<2x256xf32, #tpu.memory_space<vmem>>) attributes {dimension_semantics = [#tpu.dimension_semantics<arbitrary>], iteration_bounds = array<i64: 2>, scalar_prefetch = 0 : i64, scratch_operands = 2 : i64, tpu.core_type = #tpu.core_type<tc>, window_params = [{transform_indices = @transform_0, window_bounds = array<i64: 1, 32, 256>}, {pipeline_mode = #tpu.pipeline_mode<synchronous>, transform_indices = @transform_1, window_bounds = array<i64: 1, 256>}, {pipeline_mode = #tpu.pipeline_mode<synchronous>, transform_indices = @transform_2, window_bounds = array<i64: 1, 256>}, {pipeline_mode = #tpu.pipeline_mode<synchronous>, transform_indices = @transform_3, window_bounds = array<i64: 3, 272, 256>}, {pipeline_mode = #tpu.pipeline_mode<synchronous>, transform_indices = @transform_4, window_bounds = array<i64: 1, 256>}, {pipeline_mode = #tpu.pipeline_mode<synchronous>, transform_indices = @transform_5, window_bounds = array<i64: 1, 256>}, {pipeline_mode = #tpu.pipeline_mode<synchronous>, transform_indices = @transform_6, window_bounds = array<i64: 2, 32, 256>}]} {
    %c0_i32 = arith.constant 0 : i32
    %0 = arith.cmpi eq, %arg0, %c0_i32 : i32
    %1 = arith.extui %0 : i1 to i32
    %c0_i32_0 = arith.constant 0 : i32
    %2 = arith.cmpi ne, %1, %c0_i32_0 : i32
    scf.if %2 {
      %cst_37 = arith.constant 0.000000e+00 : bf16
      %48 = vector.broadcast %cst_37 : bf16 to vector<34x272xbf16>
      %c0_38 = arith.constant 0 : index
      %c0_39 = arith.constant 0 : index
      %49 = vector.load %arg8[%c0_38, %c0_39] : memref<34x272xbf16, #tpu.memory_space<vmem>>, vector<34x272xbf16>
      tpu.vector_store %arg8[%c0_38, %c0_39], %48 {strides = array<i32>} : memref<34x272xbf16, #tpu.memory_space<vmem>>, vector<34x272xbf16>,
      %cst_40 = arith.constant 0.000000e+00 : f32
      %50 = vector.broadcast %cst_40 : f32 to vector<2x256xf32>
      %c0_41 = arith.constant 0 : index
      %c0_42 = arith.constant 0 : index
      %51 = vector.load %arg9[%c0_41, %c0_42] : memref<2x256xf32, #tpu.memory_space<vmem>>, vector<2x256xf32>
      tpu.vector_store %arg9[%c0_41, %c0_42], %50 {strides = array<i32>} : memref<2x256xf32, #tpu.memory_space<vmem>>, vector<2x256xf32>,
    } else {
    }
    %c0 = arith.constant 0 : index
    %c0_1 = arith.constant 0 : index
    %c0_2 = arith.constant 0 : index
    %3 = vector.load %arg1[%c0, %c0_1, %c0_2] : memref<1x32x256xbf16, #tpu.memory_space<vmem>>, vector<1x32x256xbf16>
    %4 = vector.shape_cast %3 : vector<1x32x256xbf16> to vector<32x256xbf16>
    %5 = arith.extf %4 : vector<32x256xbf16> to vector<32x256xf32>
    %c0_3 = arith.constant 0 : index
    %c0_4 = arith.constant 0 : index
    %6 = vector.load %arg2[%c0_3, %c0_4] : memref<1x256xf32, #tpu.memory_space<vmem>>, vector<1x256xf32>
    %7 = vector.broadcast %6 : vector<1x256xf32> to vector<32x256xf32>
    %8 = arith.mulf %5, %7 : vector<32x256xf32>
    %c0_5 = arith.constant 0 : index
    %c0_6 = arith.constant 0 : index
    %9 = vector.load %arg3[%c0_5, %c0_6] : memref<1x256xf32, #tpu.memory_space<vmem>>, vector<1x256xf32>
    %10 = vector.broadcast %9 : vector<1x256xf32> to vector<32x256xf32>
    %11 = arith.addf %8, %10 : vector<32x256xf32>
    %cst = arith.constant 0.000000e+00 : f32
    %12 = vector.broadcast %cst : f32 to vector<32x256xf32>
    %13 = arith.maximumf %11, %12 : vector<32x256xf32>
    %14 = arith.truncf %13 : vector<32x256xf32> to vector<32x256xbf16>
    %c1 = arith.constant 1 : index
    %c8 = arith.constant 8 : index
    %15 = vector.load %arg8[%c1, %c8] : memref<34x272xbf16, #tpu.memory_space<vmem>>, vector<32x256xbf16>
    tpu.vector_store %arg8[%c1, %c8], %14 {strides = array<i32>} : memref<34x272xbf16, #tpu.memory_space<vmem>>, vector<32x256xbf16>,
    %c0_7 = arith.constant 0 : index
    %c0_8 = arith.constant 0 : index
    %16 = vector.load %arg8[%c0_7, %c0_8] : memref<34x272xbf16, #tpu.memory_space<vmem>>, vector<32x272xbf16>
    %c0_9 = arith.constant 0 : index
    %c0_10 = arith.constant 0 : index
    %c0_11 = arith.constant 0 : index
    %17 = vector.load %arg4[%c0_9, %c0_10, %c0_11] : memref<3x272x256xbf16, #tpu.memory_space<vmem>>, vector<1x272x256xbf16>
    %18 = vector.shape_cast %17 : vector<1x272x256xbf16> to vector<272x256xbf16>
    %cst_12 = arith.constant dense<0.000000e+00> : vector<32x256xf32>
    %19 = tpu.matmul %16, %18, %cst_12 {dimension_numbers = #tpu.dot_dimension_numbers<[1], [0], [0], [1], [0, 0, 1, 1], [], []>} : vector<32x272xbf16>, vector<272x256xbf16>, vector<32x256xf32> -> vector<32x256xf32>
    %c1_13 = arith.constant 1 : index
    %c0_14 = arith.constant 0 : index
    %20 = vector.load %arg8[%c1_13, %c0_14] : memref<34x272xbf16, #tpu.memory_space<vmem>>, vector<32x272xbf16>
    %c1_15 = arith.constant 1 : index
    %c0_16 = arith.constant 0 : index
    %c0_17 = arith.constant 0 : index
    %21 = vector.load %arg4[%c1_15, %c0_16, %c0_17] : memref<3x272x256xbf16, #tpu.memory_space<vmem>>, vector<1x272x256xbf16>
    %22 = vector.shape_cast %21 : vector<1x272x256xbf16> to vector<272x256xbf16>
    %cst_18 = arith.constant dense<0.000000e+00> : vector<32x256xf32>
    %23 = tpu.matmul %20, %22, %cst_18 {dimension_numbers = #tpu.dot_dimension_numbers<[1], [0], [0], [1], [0, 0, 1, 1], [], []>} : vector<32x272xbf16>, vector<272x256xbf16>, vector<32x256xf32> -> vector<32x256xf32>
    %24 = arith.addf %19, %23 : vector<32x256xf32>
    %c2 = arith.constant 2 : index
    %c0_19 = arith.constant 0 : index
    %25 = vector.load %arg8[%c2, %c0_19] : memref<34x272xbf16, #tpu.memory_space<vmem>>, vector<32x272xbf16>
    %c2_20 = arith.constant 2 : index
    %c0_21 = arith.constant 0 : index
    %c0_22 = arith.constant 0 : index
    %26 = vector.load %arg4[%c2_20, %c0_21, %c0_22] : memref<3x272x256xbf16, #tpu.memory_space<vmem>>, vector<1x272x256xbf16>
    %27 = vector.shape_cast %26 : vector<1x272x256xbf16> to vector<272x256xbf16>
    %cst_23 = arith.constant dense<0.000000e+00> : vector<32x256xf32>
    %28 = tpu.matmul %25, %27, %cst_23 {dimension_numbers = #tpu.dot_dimension_numbers<[1], [0], [0], [1], [0, 0, 1, 1], [], []>} : vector<32x272xbf16>, vector<272x256xbf16>, vector<32x256xf32> -> vector<32x256xf32>
    %29 = arith.addf %24, %28 : vector<32x256xf32>
    %30 = arith.index_cast %arg0 : i32 to index
    %c0_24 = arith.constant 0 : index
    %c0_25 = arith.constant 0 : index
    %31 = vector.load %arg7[%30, %c0_24, %c0_25] : memref<2x32x256xf32, #tpu.memory_space<vmem>>, vector<1x32x256xf32>
    %32 = vector.shape_cast %31 : vector<1x32x256xf32> to vector<32x256xf32>
    %33 = vector.shape_cast %29 : vector<32x256xf32> to vector<1x32x256xf32>
    tpu.vector_store %arg7[%30, %c0_24, %c0_25], %33 {strides = array<i32>} : memref<2x32x256xf32, #tpu.memory_space<vmem>>, vector<1x32x256xf32>,
    %c0_26 = arith.constant 0 : index
    %c0_27 = arith.constant 0 : index
    %34 = vector.load %arg9[%c0_26, %c0_27] : memref<2x256xf32, #tpu.memory_space<vmem>>, vector<1x256xf32>
    %cst_28 = arith.constant dense<0.000000e+00> : vector<256xf32>
    %35 = vector.multi_reduction <add>, %29, %cst_28 [0] : vector<32x256xf32> to vector<256xf32>
    %36 = vector.shape_cast %35 : vector<256xf32> to vector<1x256xf32>
    %37 = arith.addf %34, %36 : vector<1x256xf32>
    %c0_29 = arith.constant 0 : index
    %c0_30 = arith.constant 0 : index
    %38 = vector.load %arg9[%c0_29, %c0_30] : memref<2x256xf32, #tpu.memory_space<vmem>>, vector<1x256xf32>
    tpu.vector_store %arg9[%c0_29, %c0_30], %37 {strides = array<i32>} : memref<2x256xf32, #tpu.memory_space<vmem>>, vector<1x256xf32>,
    %c1_31 = arith.constant 1 : index
    %c0_32 = arith.constant 0 : index
    %39 = vector.load %arg9[%c1_31, %c0_32] : memref<2x256xf32, #tpu.memory_space<vmem>>, vector<1x256xf32>
    %40 = arith.mulf %29, %29 : vector<32x256xf32>
    %cst_33 = arith.constant dense<0.000000e+00> : vector<256xf32>
    %41 = vector.multi_reduction <add>, %40, %cst_33 [0] : vector<32x256xf32> to vector<256xf32>
    %42 = vector.shape_cast %41 : vector<256xf32> to vector<1x256xf32>
    %43 = arith.addf %39, %42 : vector<1x256xf32>
    %c1_34 = arith.constant 1 : index
    %c0_35 = arith.constant 0 : index
    %44 = vector.load %arg9[%c1_34, %c0_35] : memref<2x256xf32, #tpu.memory_space<vmem>>, vector<1x256xf32>
    tpu.vector_store %arg9[%c1_34, %c0_35], %43 {strides = array<i32>} : memref<2x256xf32, #tpu.memory_space<vmem>>, vector<1x256xf32>,
    %c1_i32 = arith.constant 1 : i32
    %45 = arith.cmpi eq, %arg0, %c1_i32 : i32
    %46 = arith.extui %45 : i1 to i32
    %c0_i32_36 = arith.constant 0 : i32
    %47 = arith.cmpi ne, %46, %c0_i32_36 : i32
    scf.if %47 {
      %48 = tpu.iota {dimensions = array<i32: 0>} : vector<256x256xi32>
      %c8_i32 = arith.constant 8 : i32
      %c0_i32_37 = arith.constant 0 : i32
      %49 = arith.cmpi eq, %c8_i32, %c0_i32_37 : i32
      %c1_i32_38 = arith.constant 1 : i32
      %50 = arith.select %49, %c1_i32_38, %c8_i32 : i32
      %51 = vector.broadcast %50 : i32 to vector<256x256xi32>
      %52 = arith.remsi %48, %51 : vector<256x256xi32>
      %c0_i32_39 = arith.constant 0 : i32
      %53 = vector.broadcast %c0_i32_39 : i32 to vector<256x256xi32>
      %54 = arith.cmpi ne, %52, %53 : vector<256x256xi32>
      %c0_i32_40 = arith.constant 0 : i32
      %55 = vector.broadcast %c0_i32_40 : i32 to vector<256x256xi32>
      %56 = arith.cmpi slt, %52, %55 : vector<256x256xi32>
      %c0_i32_41 = arith.constant 0 : i32
      %57 = arith.cmpi slt, %50, %c0_i32_41 : i32
      %58 = vector.broadcast %57 : i1 to vector<256x256xi1>
      %59 = vector.broadcast %58 : vector<256x256xi1> to vector<256x256xi1>
      %60 = arith.xori %56, %59 : vector<256x256xi1>
      %61 = arith.andi %60, %54 : vector<256x256xi1>
      %62 = vector.broadcast %50 : i32 to vector<256x256xi32>
      %63 = arith.addi %52, %62 : vector<256x256xi32>
      %64 = arith.select %61, %63, %52 : vector<256x256xi1>, vector<256x256xi32>
      %65 = tpu.iota {dimensions = array<i32: 1>} : vector<256x256xi32>
      %c8_i32_42 = arith.constant 8 : i32
      %c0_i32_43 = arith.constant 0 : i32
      %66 = arith.cmpi eq, %c8_i32_42, %c0_i32_43 : i32
      %c1_i32_44 = arith.constant 1 : i32
      %67 = arith.select %66, %c1_i32_44, %c8_i32_42 : i32
      %68 = vector.broadcast %67 : i32 to vector<256x256xi32>
      %69 = arith.remsi %65, %68 : vector<256x256xi32>
      %c0_i32_45 = arith.constant 0 : i32
      %70 = vector.broadcast %c0_i32_45 : i32 to vector<256x256xi32>
      %71 = arith.cmpi ne, %69, %70 : vector<256x256xi32>
      %c0_i32_46 = arith.constant 0 : i32
      %72 = vector.broadcast %c0_i32_46 : i32 to vector<256x256xi32>
      %73 = arith.cmpi slt, %69, %72 : vector<256x256xi32>
      %c0_i32_47 = arith.constant 0 : i32
      %74 = arith.cmpi slt, %67, %c0_i32_47 : i32
      %75 = vector.broadcast %74 : i1 to vector<256x256xi1>
      %76 = vector.broadcast %75 : vector<256x256xi1> to vector<256x256xi1>
      %77 = arith.xori %73, %76 : vector<256x256xi1>
      %78 = arith.andi %77, %71 : vector<256x256xi1>
      %79 = vector.broadcast %67 : i32 to vector<256x256xi32>
      %80 = arith.addi %69, %79 : vector<256x256xi32>
      %81 = arith.select %78, %80, %69 : vector<256x256xi1>, vector<256x256xi32>
      %82 = arith.cmpi eq, %64, %81 : vector<256x256xi32>
      %83 = arith.extui %82 : vector<256x256xi1> to vector<256x256xi32>
      %84 = arith.sitofp %83 : vector<256x256xi32> to vector<256x256xf32>
      %c0_48 = arith.constant 0 : index
      %c0_49 = arith.constant 0 : index
      %85 = vector.load %arg9[%c0_48, %c0_49] : memref<2x256xf32, #tpu.memory_space<vmem>>, vector<2x256xf32>
      %cst_50 = arith.constant dense<0.000000e+00> : vector<2x256xf32>
      %86 = tpu.matmul %85, %84, %cst_50 {dimension_numbers = #tpu.dot_dimension_numbers<[1], [0], [0], [1], [0, 0, 1, 1], [], []>} : vector<2x256xf32>, vector<256x256xf32>, vector<2x256xf32> -> vector<2x256xf32>
      %87 = vector.extract_strided_slice %86 {offsets = [0, 0], sizes = [1, 256], strides = [1, 1]} : vector<2x256xf32> to vector<1x256xf32>
      %cst_51 = arith.constant 4.8828125E-4 : f32
      %88 = vector.broadcast %cst_51 : f32 to vector<1x256xf32>
      %89 = arith.mulf %87, %88 : vector<1x256xf32>
      %90 = vector.extract_strided_slice %86 {offsets = [1, 0], sizes = [1, 256], strides = [1, 1]} : vector<2x256xf32> to vector<1x256xf32>
      %cst_52 = arith.constant 4.8828125E-4 : f32
      %91 = vector.broadcast %cst_52 : f32 to vector<1x256xf32>
      %92 = arith.mulf %90, %91 : vector<1x256xf32>
      %93 = arith.mulf %89, %89 : vector<1x256xf32>
      %94 = arith.subf %92, %93 : vector<1x256xf32>
      %cst_53 = arith.constant 0.000000e+00 : f32
      %95 = vector.broadcast %cst_53 : f32 to vector<1x256xf32>
      %96 = arith.maximumf %94, %95 : vector<1x256xf32>
      %c0_54 = arith.constant 0 : index
      %c0_55 = arith.constant 0 : index
      %97 = vector.load %arg5[%c0_54, %c0_55] : memref<1x256xf32, #tpu.memory_space<vmem>>, vector<1x256xf32>
      %cst_56 = arith.constant 9.99999974E-6 : f32
      %98 = vector.broadcast %cst_56 : f32 to vector<1x256xf32>
      %99 = arith.addf %96, %98 : vector<1x256xf32>
      %100 = math.rsqrt %99 : vector<1x256xf32>
      %101 = arith.mulf %97, %100 : vector<1x256xf32>
      %c0_57 = arith.constant 0 : index
      %c0_58 = arith.constant 0 : index
      %102 = vector.load %arg6[%c0_57, %c0_58] : memref<1x256xf32, #tpu.memory_space<vmem>>, vector<1x256xf32>
      %103 = arith.mulf %89, %101 : vector<1x256xf32>
      %104 = arith.subf %102, %103 : vector<1x256xf32>
      %c0_59 = arith.constant 0 : index
      %c0_60 = arith.constant 0 : index
      %c0_61 = arith.constant 0 : index
      %105 = vector.load %arg7[%c0_59, %c0_60, %c0_61] : memref<2x32x256xf32, #tpu.memory_space<vmem>>, vector<2x32x256xf32>
      %106 = vector.shape_cast %101 : vector<1x256xf32> to vector<1x1x256xf32>
      %107 = vector.broadcast %106 : vector<1x1x256xf32> to vector<2x32x256xf32>
      %108 = arith.mulf %105, %107 : vector<2x32x256xf32>
      %109 = vector.shape_cast %104 : vector<1x256xf32> to vector<1x1x256xf32>
      %110 = vector.broadcast %109 : vector<1x1x256xf32> to vector<2x32x256xf32>
      %111 = arith.addf %108, %110 : vector<2x32x256xf32>
      %cst_62 = arith.constant 0.000000e+00 : f32
      %112 = vector.broadcast %cst_62 : f32 to vector<2x32x256xf32>
      %113 = arith.maximumf %111, %112 : vector<2x32x256xf32>
      %c0_63 = arith.constant 0 : index
      %c0_64 = arith.constant 0 : index
      %c0_65 = arith.constant 0 : index
      %114 = vector.load %arg7[%c0_63, %c0_64, %c0_65] : memref<2x32x256xf32, #tpu.memory_space<vmem>>, vector<2x32x256xf32>
      tpu.vector_store %arg7[%c0_63, %c0_64, %c0_65], %113 {strides = array<i32>} : memref<2x32x256xf32, #tpu.memory_space<vmem>>, vector<2x32x256xf32>,
    } else {
    }
    return
  }
  func.func @transform_0(%arg0: i32) -> (i32, i32, i32) {
    %c0_i32 = arith.constant 0 : i32
    %c0_i32_0 = arith.constant 0 : i32
    %c0_i32_1 = arith.constant 0 : i32
    return %arg0, %c0_i32, %c0_i32_0 : i32, i32, i32
  }
  func.func @transform_1(%arg0: i32) -> (i32, i32) {
    %c0_i32 = arith.constant 0 : i32
    %c0_i32_0 = arith.constant 0 : i32
    %c0_i32_1 = arith.constant 0 : i32
    return %c0_i32, %c0_i32_0 : i32, i32
  }
  func.func @transform_2(%arg0: i32) -> (i32, i32) {
    %c0_i32 = arith.constant 0 : i32
    %c0_i32_0 = arith.constant 0 : i32
    %c0_i32_1 = arith.constant 0 : i32
    return %c0_i32, %c0_i32_0 : i32, i32
  }
  func.func @transform_3(%arg0: i32) -> (i32, i32, i32) {
    %c0_i32 = arith.constant 0 : i32
    %c0_i32_0 = arith.constant 0 : i32
    %c0_i32_1 = arith.constant 0 : i32
    %c0_i32_2 = arith.constant 0 : i32
    return %c0_i32, %c0_i32_0, %c0_i32_1 : i32, i32, i32
  }
  func.func @transform_4(%arg0: i32) -> (i32, i32) {
    %c0_i32 = arith.constant 0 : i32
    %c0_i32_0 = arith.constant 0 : i32
    %c0_i32_1 = arith.constant 0 : i32
    return %c0_i32, %c0_i32_0 : i32, i32
  }
  func.func @transform_5(%arg0: i32) -> (i32, i32) {
    %c0_i32 = arith.constant 0 : i32
    %c0_i32_0 = arith.constant 0 : i32
    %c0_i32_1 = arith.constant 0 : i32
    return %c0_i32, %c0_i32_0 : i32, i32
  }
  func.func @transform_6(%arg0: i32) -> (i32, i32, i32) {
    %c0_i32 = arith.constant 0 : i32
    %c0_i32_0 = arith.constant 0 : i32
    %c0_i32_1 = arith.constant 0 : i32
    %c0_i32_2 = arith.constant 0 : i32
    return %c0_i32, %c0_i32_0, %c0_i32_1 : i32, i32, i32
  }
}

</mosaic_0001>

<llo_original>
// kernel: tile.21
$region0: #{tile.21}
  #allocation0 [shape = 's32[1]{0}', space=sflag, size = 0x4, scoped, tag = 'scoped memory for tile.21']
  %s0 = inlined_call_operand.vmem [shape: f32[8], index: 0, kind: input, shape index: {}]
  %s1 = inlined_call_operand.vmem [shape: f32[32,8], index: 1, kind: output, shape index: {}]
  // Predicated region
  $region2: #{tile.21} parent=0 // pred_check
    _
  $region3: #{tile.21} parent=0 // pred_check_branch
    %3 = sbr.rel (0) target = $region5
  $region4: #{tile.21} parent=0 // pred_region
    _
  $region5: #{tile.21} parent=0 // pred_fallthru
    _
  %v4 = vld [vmem:[%s0] ss:$0 sm:$0xff]
  %5 = vst [vmem:[%s1] sm:$0xff] %v4
  %s6 = scalar_lea.vmem %s1, 8
  %7 = vst [vmem:[%s6] sm:$0xff] %v4
  %s8 = scalar_lea.vmem %s1, 16
  %9 = vst [vmem:[%s8] sm:$0xff] %v4
  %s10 = scalar_lea.vmem %s1, 24
  %11 = vst [vmem:[%s10] sm:$0xff] %v4

// kernel: tile.22
$region0: #{tile.22}
  %s0 = inlined_call_operand.vmem [shape: f32[32,8], index: 0, kind: input, shape index: {}]
  %s1 = inlined_call_operand.vmem [shape: f32[1,256], index: 1, kind: output, shape index: {}]
  $region1: #{tile.22} parent=0
    #allocation0 [shape = 'u8[8192]{0}', space=vmem, size = 0x2000, scoped, tag = 'scoped mem for output reshape']
    %s2 = smov 3
    %v3 = vld [vmem:[%s0] ss:$16 sm:%s2]
    %vm4 = vcmask 64512
    %5 = vst.msk [vmem:[#allocation0] ss:$8 sm:$0x3] %vm4, %v3
    %s6 = scalar_lea.vmem %s0, 15
    %s7 = smov 3
    %v8 = vld [vmem:[%s6] ss:$16 sm:%s7]
    %9 = vrot.lane.b32.xlu0 %v8, 120
    %v10 = vpop.permute.xlu0 %9
    %vm11 = vcmask 1048512
    %12 = vst.msk [vmem:[#allocation0] ss:$8 sm:$0x3] %vm11, %v10
    %s13 = scalar_lea.vmem %s0, 14
    %s14 = smov 3
    %v15 = vld [vmem:[%s13] ss:$16 sm:%s14]
    %16 = vrot.lane.b32.xlu0 %v15, 112
    %v17 = vpop.permute.xlu0 %16
    %vm18 = vcmask 982912
    %19 = vst.msk [vmem:[#allocation0] ss:$8 sm:$0x3] %vm18, %v17
    %s20 = scalar_lea.vmem %s0, 13
    %s21 = smov 3
    %v22 = vld [vmem:[%s20] ss:$16 sm:%s21]
    %23 = vrot.lane.b32.xlu0 %v22, 104
    %v24 = vpop.permute.xlu0 %23
    %vm25 = vcmask 917312
    %26 = vst.msk [vmem:[#allocation0] ss:$8 sm:$0x3] %vm25, %v24
    %s27 = scalar_lea.vmem %s0, 12
    %s28 = smov 3
    %v29 = vld [vmem:[%s27] ss:$16 sm:%s28]
    %30 = vrot.lane.b32.xlu0 %v29, 96
    %v31 = vpop.permute.xlu0 %30
    %vm32 = vcmask 851712
    %33 = vst.msk [vmem:[#allocation0] ss:$8 sm:$0x3] %vm32, %v31
    %s34 = scalar_lea.vmem %s0, 11
    %s35 = smov 3
    %v36 = vld [vmem:[%s34] ss:$16 sm:%s35]
    %37 = vrot.lane.b32.xlu0 %v36, 88
    %v38 = vpop.permute.xlu0 %37
    %vm39 = vcmask 786112
    %40 = vst.msk [vmem:[#allocation0] ss:$8 sm:$0x3] %vm39, %v38
    %s41 = scalar_lea.vmem %s0, 10
    %s42 = smov 3
    %v43 = vld [vmem:[%s41] ss:$16 sm:%s42]
    %44 = vrot.lane.b32.xlu0 %v43, 80
    %v45 = vpop.permute.xlu0 %44
    %vm46 = vcmask 720512
    %47 = vst.msk [vmem:[#allocation0] ss:$8 sm:$0x3] %vm46, %v45
    %s48 = scalar_lea.vmem %s0, 9
    %s49 = smov 3
    %v50 = vld [vmem:[%s48] ss:$16 sm:%s49]
    %51 = vrot.lane.b32.xlu0 %v50, 72
    %v52 = vpop.permute.xlu0 %51
    %vm53 = vcmask 654912
    %54 = vst.msk [vmem:[#allocation0] ss:$8 sm:$0x3] %vm53, %v52
    %s55 = scalar_lea.vmem %s0, 8
    %s56 = smov 3
    %v57 = vld [vmem:[%s55] ss:$16 sm:%s56]
    %58 = vrot.lane.b32.xlu0 %v57, 64
    %v59 = vpop.permute.xlu0 %58
    %vm60 = vcmask 589312
    %61 = vst.msk [vmem:[#allocation0] ss:$8 sm:$0x3] %vm60, %v59
    %s62 = scalar_lea.vmem %s0, 7
    %s63 = smov 3
    %v64 = vld [vmem:[%s62] ss:$16 sm:%s63]
    %65 = vrot.lane.b32.xlu0 %v64, 56
    %v66 = vpop.permute.xlu0 %65
    %vm67 = vcmask 523712
    %68 = vst.msk [vmem:[#allocation0] ss:$8 sm:$0x3] %vm67, %v66
    %s69 = scalar_lea.vmem %s0, 6
    %s70 = smov 3
    %v71 = vld [vmem:[%s69] ss:$16 sm:%s70]
    %72 = vrot.lane.b32.xlu0 %v71, 48
    %v73 = vpop.permute.xlu0 %72
    %vm74 = vcmask 458112
    %75 = vst.msk [vmem:[#allocation0] ss:$8 sm:$0x3] %vm74, %v73
    %s76 = scalar_lea.vmem %s0, 5
    %s77 = smov 3
    %v78 = vld [vmem:[%s76] ss:$16 sm:%s77]
    %79 = vrot.lane.b32.xlu0 %v78, 40
    %v80 = vpop.permute.xlu0 %79
    %vm81 = vcmask 392512
    %82 = vst.msk [vmem:[#allocation0] ss:$8 sm:$0x3] %vm81, %v80
    %s83 = scalar_lea.vmem %s0, 4
    %s84 = smov 3
    %v85 = vld [vmem:[%s83] ss:$16 sm:%s84]
    %86 = vrot.lane.b32.xlu0 %v85, 32
    %v87 = vpop.permute.xlu0 %86
    %vm88 = vcmask 326912
    %89 = vst.msk [vmem:[#allocation0] ss:$8 sm:$0x3] %vm88, %v87
    %s90 = scalar_lea.vmem %s0, 3
    %s91 = smov 3
    %v92 = vld [vmem:[%s90] ss:$16 sm:%s91]
    %93 = vrot.lane.b32.xlu0 %v92, 24
    %v94 = vpop.permute.xlu0 %93
    %vm95 = vcmask 261312
    %96 = vst.msk [vmem:[#allocation0] ss:$8 sm:$0x3] %vm95, %v94
    %s97 = scalar_lea.vmem %s0, 2
    %s98 = smov 3
    %v99 = vld [vmem:[%s97] ss:$16 sm:%s98]
    %100 = vrot.lane.b32.xlu0 %v99, 16
    %v101 = vpop.permute.xlu0 %100
    %vm102 = vcmask 195712
    %103 = vst.msk [vmem:[#allocation0] ss:$8 sm:$0x3] %vm102, %v101
    %s104 = scalar_lea.vmem %s0, 1
    %s105 = smov 3
    %v106 = vld [vmem:[%s104] ss:$16 sm:%s105]
    %107 = vrot.lane.b32.xlu0 %v106, 8
    %v108 = vpop.permute.xlu0 %107
    %vm109 = vcmask 130112
    %110 = vst.msk [vmem:[#allocation0] ss:$8 sm:$0x3] %vm109, %v108
    %s112 = sshllo.u32 0, 1
    %v114 = vld [vmem:[#allocation0] sm:%s112]
    %s115 = sshllo.u32 0, 1
    %116 = vst [vmem:[%s1] sm:%s115] %v114
    %s117 = scalar_lea.vmem [#allocation0], 8
    %v118 = vld [vmem:[%s117] sm:%s112]
    %s119 = sshllo.u32 0, 1
    %s120 = scalar_lea.vmem %s1, 1
    %121 = vst [vmem:[%s120] sm:%s119] %v118

// kernel: up_forward.2
$region0: #{up_forward.2}
  #allocation0 [shape = 'u32[]', space=smem, size = 0x4, offset = 0x4, fixed_abs, tag = 'smem constant byte address 0x4 - core index']
  #allocation1 [shape = 'u32[144,128]{1,0:T(1,128)}', space=vmem, size = 0x12000, scoped, tag = 'internal scratch']
  %s0 = inlined_call_operand.vmem [shape: bf16[2,34,136], index: 0, kind: input, shape index: {}]
  %s1 = inlined_call_operand.vmem [shape: bf16[2,34,136], index: 1, kind: input, shape index: {}]
  %s2 = inlined_call_operand.vmem [shape: bf16[3,136,256], index: 2, kind: input, shape index: {}]
  %s3 = inlined_call_operand.vmem [shape: bf16[3,136,256], index: 3, kind: input, shape index: {}]
  %s4 = inlined_call_operand.vmem [shape: bf16[2,32,256], index: 4, kind: output, shape index: {0}]
  %s5 = inlined_call_operand.vmem [shape: f32[2,2,256], index: 5, kind: output, shape index: {1}]
  %6 = xla_tuple %s4, %s5
  %s7 = sld [smem:[#allocation0]]
  $region57: #{up_forward.2} parent=0
    _
  %s9 = ssub.s32 1, %s7
  %s10 = scalar_select 0, %s9, %s7
  loop: start=0, step=1, limit=4
  $region2: #{up_forward.2} parent=0 // loop_pre_header
    _
  $region3: #{up_forward.2} parent=0 // loop_header
    %s12 = sphi 0, %s16
    %p13 = scmp.ge.s32.totalorder %s12, 4
    %s22 = sphi 0, %s24
    %s25 = sphi 0, %s22
    %s26 = sphi 0, %s25
    %s42 = sphi 0, %s26
    %s48 = sphi 0, %s50
    %s51 = sphi 0, %s48
    %s52 = sphi 0, %s51
    %s68 = sphi 0, %s52
    %s72 = sphi 0, %s72
    %s74 = sphi 0, %s72
    %s75 = sphi 0, %s74
    %s89 = sphi 0, %s75
    %s93 = sphi 0, %s93
    %s95 = sphi 0, %s93
    %s96 = sphi 0, %s95
    %s110 = sphi 0, %s96
    %s116 = sphi 0, %s118
    %s119 = sphi 0, %s116
    %s120 = sphi 0, %s119
    %s136 = sphi 0, %s120
    %s142 = sphi 0, %s144
    %s145 = sphi 0, %s142
    %s146 = sphi 0, %s145
    %s162 = sphi 0, %s146
  $region4: #{up_forward.2} parent=0 // loop_header_branch
    %15 = sbr.rel (%p13) target = $region8
  $region5: #{up_forward.2} parent=0 // loop_body
    %s17 = ssub.s32 %s12, 1
    %s18 = ssub.s32 %s12, 2
    %s19 = sadd.s32 %s12, 1
    %s20 = ssub.s32 %s12, %s19
    %p21 = scmp.eq.s32.totalorder %s20, 0
    %s23 = sadd.s32 %s22, 1
    %s24 = scalar_select %p21, %s22, %s23
    %p27 = pneg %p21
    %p28 = scmp.eq.s32.totalorder %s12, 1
    %p29 = por %p27, %p28
    %p30 = scmp.ne.s32.totalorder %s22, %s25
    %p31 = scmp.eq.s32.totalorder %s12, 0
    %p32 = por %p30, %p31
    %p33 = scmp.ne.s32.totalorder %s22, %s25
    %p34 = scmp.eq.s32.totalorder %s17, 1
    %p35 = por %p33, %p34
    %p36 = scmp.ne.s32.totalorder %s25, %s26
    %p37 = scmp.eq.s32.totalorder %s17, 0
    %p38 = por %p36, %p37
    %p39 = scmp.ne.s32.totalorder %s25, %s26
    %p40 = scmp.eq.s32.totalorder %s18, 1
    %p41 = por %p39, %p40
    %p43 = scmp.ne.s32.totalorder %s26, %s42
    %p44 = scmp.eq.s32.totalorder %s18, 0
    %p45 = por %p43, %p44
    %s46 = ssub.s32 %s12, %s19
    %p47 = scmp.eq.s32.totalorder %s46, 0
    %s49 = sadd.s32 %s48, 1
    %s50 = scalar_select %p47, %s48, %s49
    %p53 = pneg %p47
    %p54 = scmp.eq.s32.totalorder %s12, 1
    %p55 = por %p53, %p54
    %p56 = scmp.ne.s32.totalorder %s48, %s51
    %p57 = scmp.eq.s32.totalorder %s12, 0
    %p58 = por %p56, %p57
    %p59 = scmp.ne.s32.totalorder %s48, %s51
    %p60 = scmp.eq.s32.totalorder %s17, 1
    %p61 = por %p59, %p60
    %p62 = scmp.ne.s32.totalorder %s51, %s52
    %p63 = scmp.eq.s32.totalorder %s17, 0
    %p64 = por %p62, %p63
    %p65 = scmp.ne.s32.totalorder %s51, %s52
    %p66 = scmp.eq.s32.totalorder %s18, 1
    %p67 = por %p65, %p66
    %p69 = scmp.ne.s32.totalorder %s52, %s68
    %p70 = scmp.eq.s32.totalorder %s18, 0
    %p71 = por %p69, %p70
    %s73 = sadd.s32 %s72, 1
    %p76 = scmp.eq.s32.totalorder %s12, 1
    %p77 = scmp.ne.s32.totalorder %s72, %s74
    %p78 = scmp.eq.s32.totalorder %s12, 0
    %p79 = por %p77, %p78
    %p80 = scmp.ne.s32.totalorder %s72, %s74
    %p81 = scmp.eq.s32.totalorder %s17, 1
    %p82 = por %p80, %p81
    %p83 = scmp.ne.s32.totalorder %s74, %s75
    %p84 = scmp.eq.s32.totalorder %s17, 0
    %p85 = por %p83, %p84
    %p86 = scmp.ne.s32.totalorder %s74, %s75
    %p87 = scmp.eq.s32.totalorder %s18, 1
    %p88 = por %p86, %p87
    %p90 = scmp.ne.s32.totalorder %s75, %s89
    %p91 = scmp.eq.s32.totalorder %s18, 0
    %p92 = por %p90, %p91
    %s94 = sadd.s32 %s93, 1
    %p97 = scmp.eq.s32.totalorder %s12, 1
    %p98 = scmp.ne.s32.totalorder %s93, %s95
    %p99 = scmp.eq.s32.totalorder %s12, 0
    %p100 = por %p98, %p99
    %p101 = scmp.ne.s32.totalorder %s93, %s95
    %p102 = scmp.eq.s32.totalorder %s17, 1
    %p103 = por %p101, %p102
    %p104 = scmp.ne.s32.totalorder %s95, %s96
    %p105 = scmp.eq.s32.totalorder %s17, 0
    %p106 = por %p104, %p105
    %p107 = scmp.ne.s32.totalorder %s95, %s96
    %p108 = scmp.eq.s32.totalorder %s18, 1
    %p109 = por %p107, %p108
    %p111 = scmp.ne.s32.totalorder %s96, %s110
    %p112 = scmp.eq.s32.totalorder %s18, 0
    %p113 = por %p111, %p112
    %s114 = ssub.s32 %s12, %s19
    %p115 = scmp.eq.s32.totalorder %s114, 0
    %s117 = sadd.s32 %s116, 1
    %s118 = scalar_select %p115, %s116, %s117
    %p121 = pneg %p115
    %p122 = scmp.eq.s32.totalorder %s12, 1
    %p123 = por %p121, %p122
    %p124 = scmp.ne.s32.totalorder %s116, %s119
    %p125 = scmp.eq.s32.totalorder %s12, 0
    %p126 = por %p124, %p125
    %p127 = scmp.ne.s32.totalorder %s116, %s119
    %p128 = scmp.eq.s32.totalorder %s17, 1
    %p129 = por %p127, %p128
    %p130 = scmp.ne.s32.totalorder %s119, %s120
    %p131 = scmp.eq.s32.totalorder %s17, 0
    %p132 = por %p130, %p131
    %p133 = scmp.ne.s32.totalorder %s119, %s120
    %p134 = scmp.eq.s32.totalorder %s18, 1
    %p135 = por %p133, %p134
    %p137 = scmp.ne.s32.totalorder %s120, %s136
    %p138 = scmp.eq.s32.totalorder %s18, 0
    %p139 = por %p137, %p138
    %s140 = ssub.s32 %s12, %s19
    %p141 = scmp.eq.s32.totalorder %s140, 0
    %s143 = sadd.s32 %s142, 1
    %s144 = scalar_select %p141, %s142, %s143
    %p147 = pneg %p141
    %p148 = scmp.eq.s32.totalorder %s12, 1
    %p149 = por %p147, %p148
    %p150 = scmp.ne.s32.totalorder %s142, %s145
    %p151 = scmp.eq.s32.totalorder %s12, 0
    %p152 = por %p150, %p151
    %p153 = scmp.ne.s32.totalorder %s142, %s145
    %p154 = scmp.eq.s32.totalorder %s17, 1
    %p155 = por %p153, %p154
    %p156 = scmp.ne.s32.totalorder %s145, %s146
    %p157 = scmp.eq.s32.totalorder %s17, 0
    %p158 = por %p156, %p157
    %p159 = scmp.ne.s32.totalorder %s145, %s146
    %p160 = scmp.eq.s32.totalorder %s18, 1
    %p161 = por %p159, %p160
    %p163 = scmp.ne.s32.totalorder %s146, %s162
    %p164 = scmp.eq.s32.totalorder %s18, 0
    %p165 = por %p163, %p164
    %p166 = scmp.le.s32.totalorder 1, %s12
    %p167 = scmp.lt.s32.totalorder %s12, 3
    %p168 = pnand %p166, %p167
    %p169 = pneg %p168
    // Predicated region
    $region9: #{up_forward.2} parent=5 // pred_check
      _
    $region10: #{up_forward.2} parent=5 // pred_check_branch
      %171 = sbr.rel (%p168) target = $region12
    $region11: #{up_forward.2} parent=5 // pred_region
      %s172 = ssub.s32 %s12, 1
      // Predicated region
      $region13: #{up_forward.2} parent=11 // pred_check
        %p173 = pneg %p85
      $region14: #{up_forward.2} parent=11 // pred_check_branch
        %175 = sbr.rel (%p173) target = $region16
      $region15: #{up_forward.2} parent=11 // pred_region
        _
      $region16: #{up_forward.2} parent=11 // pred_fallthru
        _
      // Predicated region
      $region17: #{up_forward.2} parent=11 // pred_check
        %p176 = pneg %p106
      $region18: #{up_forward.2} parent=11 // pred_check_branch
        %178 = sbr.rel (%p176) target = $region20
      $region19: #{up_forward.2} parent=11 // pred_region
        _
      $region20: #{up_forward.2} parent=11 // pred_fallthru
        _
    $region12: #{up_forward.2} parent=5 // pred_fallthru
      _
    %p179 = scmp.lt.s32.totalorder %s12, 2
    // Predicated region
    $region21: #{up_forward.2} parent=5 // pred_check
      %p180 = pneg %p179
    $region22: #{up_forward.2} parent=5 // pred_check_branch
      %182 = sbr.rel (%p180) target = $region24
    $region23: #{up_forward.2} parent=5 // pred_region
      // Predicated region
      $region25: #{up_forward.2} parent=23 // pred_check
        %p183 = pneg %p32
      $region26: #{up_forward.2} parent=23 // pred_check_branch
        %185 = sbr.rel (%p183) target = $region28
      $region27: #{up_forward.2} parent=23 // pred_region
        %p186 = scmp.lt.s32.totalorder %s12, 1
        %s187 = scalar_select %p186, %s12, 1
        %s188 = smul.addr %s187, 10
        %s189 = smul.addr %s188, 4
        %s190 = scalar_lea.vmem %s0, %s189
      $region28: #{up_forward.2} parent=23 // pred_fallthru
        _
      // Predicated region
      $region29: #{up_forward.2} parent=23 // pred_check
        %p191 = pneg %p58
      $region30: #{up_forward.2} parent=23 // pred_check_branch
        %193 = sbr.rel (%p191) target = $region32
      $region31: #{up_forward.2} parent=23 // pred_region
        %p194 = scmp.lt.s32.totalorder %s12, 1
        %s195 = scalar_select %p194, %s12, 1
        %s196 = smul.addr %s195, 10
        %s197 = smul.addr %s196, 4
        %s198 = scalar_lea.vmem %s1, %s197
      $region32: #{up_forward.2} parent=23 // pred_fallthru
        _
    $region24: #{up_forward.2} parent=5 // pred_fallthru
      _
    %p199 = scmp.le.s32.totalorder 1, %s12
    %p200 = scmp.lt.s32.totalorder %s12, 3
    %p201 = pnand %p199, %p200
    %p202 = pneg %p201
    // Predicated region
    $region33: #{up_forward.2} parent=5 // pred_check
      _
    $region34: #{up_forward.2} parent=5 // pred_check_branch
      %204 = sbr.rel (%p201) target = $region36
    $region35: #{up_forward.2} parent=5 // pred_region
      %s205 = ssub.s32 %s12, 1
      %p206 = scmp.lt.s32.totalorder %s17, 1
      %s207 = scalar_select %p206, %s17, 1
      %s208 = smul.addr %s207, 10
      %s209 = smul.addr %s208, 4
      %s210 = scalar_lea.vmem %s0, %s209
      %p211 = pneg %p38
      %p212 = pneg %p35
      %p213 = scmp.lt.s32.totalorder %s17, 1
      %s214 = scalar_select %p213, %s17, 1
      %s215 = smul.addr %s214, 10
      %s216 = smul.addr %s215, 4
      %s217 = scalar_lea.vmem %s1, %s216
      %p218 = pneg %p64
      %p219 = pneg %p61
      %p220 = pneg %p85
      %p221 = pneg %p82
      %p222 = pneg %p106
      %p223 = pneg %p103
      %p224 = pneg %p132
      %p225 = pneg %p129
      %p226 = scmp.lt.s32.totalorder %s17, 1
      %s227 = scalar_select %p226, %s17, 1
      %s228 = smul.addr %s227, 8
      %s229 = smul.addr %s228, 4
      %s230 = scalar_lea.vmem %s4, %s229
      %p231 = pneg %p158
      %p232 = pneg %p155
      %p233 = scmp.lt.s32.totalorder %s17, 1
      %s234 = scalar_select %p233, %s17, 1
      %s235 = smul.addr %s234, 2
      %s236 = smul.addr %s235, 2
      %s237 = scalar_lea.vmem %s5, %s236
      %p238 = scmp.lt.s32.totalorder %s17, 1
      %s239 = scalar_select %p238, %s17, 1
      %s240 = smul.addr %s239, 10
      %s241 = smul.addr %s240, 4
      %s242 = scalar_lea.vmem %s0, %s241
      %p243 = scmp.lt.s32.totalorder %s17, 1
      %s244 = scalar_select %p243, %s17, 1
      %s245 = smul.addr %s244, 10
      %s246 = smul.addr %s245, 4
      %s247 = scalar_lea.vmem %s1, %s246
      %p248 = scmp.lt.s32.totalorder %s17, 1
      %s249 = scalar_select %p248, %s17, 1
      %s250 = smul.addr %s249, 8
      %s251 = smul.addr %s250, 4
      %s252 = scalar_lea.vmem %s4, %s251
      %p253 = scmp.lt.s32.totalorder %s17, 1
      %s254 = scalar_select %p253, %s17, 1
      %s255 = smul.addr %s254, 2
      %s256 = smul.addr %s255, 2
      %s257 = scalar_lea.vmem %s5, %s256
      %v259 = vld [vmem:[%s242] sm:$0xff]
      %v260 = vld [vmem:[%s242 + $0x8] sm:$0xff]
      %v261 = vld [vmem:[%s242 + $0x10] sm:$0xff]
      %v262 = vld [vmem:[%s242 + $0x18] sm:$0xff]
      %v263 = vld [vmem:[%s2] sm:$0xff]
      %v264 = vld [vmem:[%s2 + $0x8] sm:$0xff]
      %v265 = vld [vmem:[%s2 + $0x10] sm:$0xff]
      %v266 = vld [vmem:[%s2 + $0x18] sm:$0xff]
      %v267 = vld [vmem:[%s2 + $0x20] sm:$0xff]
      %v268 = vld [vmem:[%s2 + $0x28] sm:$0xff]
      %v269 = vld [vmem:[%s2 + $0x30] sm:$0xff]
      %v270 = vld [vmem:[%s2 + $0x38] sm:$0xff]
      %v271 = vld [vmem:[%s2 + $0x40] sm:$0xff]
      %v272 = vld [vmem:[%s2 + $0x48] sm:$0xff]
      %v273 = vld [vmem:[%s2 + $0x50] sm:$0xff]
      %v274 = vld [vmem:[%s2 + $0x58] sm:$0xff]
      %v275 = vld [vmem:[%s2 + $0x60] sm:$0xff]
      %v276 = vld [vmem:[%s2 + $0x68] sm:$0xff]
      %v277 = vld [vmem:[%s2 + $0x70] sm:$0xff]
      %v278 = vld [vmem:[%s2 + $0x78] sm:$0xff]
      %v279 = vld [vmem:[%s2 + $0x80] sm:$0xff]
      %v280 = vld [vmem:[%s247] sm:$0xff]
      %v281 = vld [vmem:[%s247 + $0x8] sm:$0xff]
      %v282 = vld [vmem:[%s247 + $0x10] sm:$0xff]
      %v283 = vld [vmem:[%s247 + $0x18] sm:$0xff]
      %v284 = vld [vmem:[%s3] sm:$0xff]
      %v285 = vld [vmem:[%s3 + $0x8] sm:$0xff]
      %v286 = vld [vmem:[%s3 + $0x10] sm:$0xff]
      %v287 = vld [vmem:[%s3 + $0x18] sm:$0xff]
      %v288 = vld [vmem:[%s3 + $0x20] sm:$0xff]
      %v289 = vld [vmem:[%s3 + $0x28] sm:$0xff]
      %v290 = vld [vmem:[%s3 + $0x30] sm:$0xff]
      %v291 = vld [vmem:[%s3 + $0x38] sm:$0xff]
      %v292 = vld [vmem:[%s3 + $0x40] sm:$0xff]
      %v293 = vld [vmem:[%s3 + $0x48] sm:$0xff]
      %v294 = vld [vmem:[%s3 + $0x50] sm:$0xff]
      %v295 = vld [vmem:[%s3 + $0x58] sm:$0xff]
      %v296 = vld [vmem:[%s3 + $0x60] sm:$0xff]
      %v297 = vld [vmem:[%s3 + $0x68] sm:$0xff]
      %v298 = vld [vmem:[%s3 + $0x70] sm:$0xff]
      %v299 = vld [vmem:[%s3 + $0x78] sm:$0xff]
      %v300 = vld [vmem:[%s3 + $0x80] sm:$0xff]
      %v305 = vunpack.c.l.b16 %v280
      %v306 = vunpack.c.h.b16 %v280
      %v307 = vunpack.c.l.b16 %v281
      %v308 = vunpack.c.h.b16 %v281
      %v309 = vunpack.c.l.b16 %v282
      %v310 = vunpack.c.h.b16 %v282
      %v311 = vunpack.c.l.b16 %v283
      %v312 = vunpack.c.h.b16 %v283
      %v313 = vpack.c.b16 %v307, %v305
      %v314 = vpack.c.b16 %v308, %v306
      %v315 = vpack.c.b16 %v311, %v309
      %v316 = vpack.c.b16 %v312, %v310
      %v336 = vunpack.c.l.b16 %v284
      %v337 = vunpack.c.h.b16 %v284
      %v338 = vunpack.c.l.b16 %v285
      %v339 = vunpack.c.h.b16 %v285
      %v340 = vunpack.c.l.b16 %v286
      %v341 = vunpack.c.h.b16 %v286
      %v342 = vunpack.c.l.b16 %v287
      %v343 = vunpack.c.h.b16 %v287
      %v344 = vunpack.c.l.b16 %v288
      %v345 = vunpack.c.h.b16 %v288
      %v346 = vunpack.c.l.b16 %v289
      %v347 = vunpack.c.h.b16 %v289
      %v348 = vunpack.c.l.b16 %v290
      %v349 = vunpack.c.h.b16 %v290
      %v350 = vunpack.c.l.b16 %v291
      %v351 = vunpack.c.h.b16 %v291
      %v352 = vunpack.c.l.b16 %v292
      %v353 = vunpack.c.h.b16 %v292
      %v354 = vunpack.c.l.b16 %v293
      %v355 = vunpack.c.h.b16 %v293
      %v356 = vunpack.c.l.b16 %v294
      %v357 = vunpack.c.h.b16 %v294
      %v358 = vunpack.c.l.b16 %v295
      %v359 = vunpack.c.h.b16 %v295
      %v360 = vunpack.c.l.b16 %v296
      %v361 = vunpack.c.h.b16 %v296
      %v362 = vunpack.c.l.b16 %v297
      %v363 = vunpack.c.h.b16 %v297
      %v364 = vunpack.c.l.b16 %v298
      %v365 = vunpack.c.h.b16 %v298
      %v366 = vunpack.c.l.b16 %v299
      %v367 = vunpack.c.h.b16 %v299
      %v368 = vunpack.c.l.b16 %v300
      %v369 = vunpack.c.h.b16 %v300
      %v370 = vpack.c.b16 %v338, %v336
      %v371 = vpack.c.b16 %v339, %v337
      %v372 = vpack.c.b16 %v342, %v340
      %v373 = vpack.c.b16 %v343, %v341
      %v374 = vpack.c.b16 %v346, %v344
      %v375 = vpack.c.b16 %v347, %v345
      %v376 = vpack.c.b16 %v350, %v348
      %v377 = vpack.c.b16 %v351, %v349
      %v378 = vpack.c.b16 %v354, %v352
      %v379 = vpack.c.b16 %v355, %v353
      %v380 = vpack.c.b16 %v358, %v356
      %v381 = vpack.c.b16 %v359, %v357
      %v382 = vpack.c.b16 %v362, %v360
      %v383 = vpack.c.b16 %v363, %v361
      %v384 = vpack.c.b16 %v366, %v364
      %v385 = vpack.c.b16 %v367, %v365
      %v386 = vpack.c.b16 %v368, %v368
      %v387 = vpack.c.b16 %v369, %v369
      %vm404 = vcmask 64512
      %v406 = vsel %vm404, %v314, 0
      %v409 = vsel %vm404, %v316, 0
      %vm411 = vcmask 1043456
      %v413 = vsel %vm411, %v386, 0
      %v416 = vsel %vm411, %v387, 0
      %418 = vmatprep.subr.bf16.mxu0 %v371
      %419 = vmatpush1.bf16.msra.mxu0 %v370
      %420 = vmatprep.subr.bf16.mxu0 %v373
      %421 = vmatpush1.bf16.msra.mxu0 %v372
      %422 = vmatprep.subr.bf16.mxu0 %v375
      %423 = vmatpush1.bf16.msra.mxu0 %v374
      %424 = vmatprep.subr.bf16.mxu0 %v377
      %425 = vmatpush1.bf16.msra.mxu0 %v376
      %426 = vmatprep.subr.bf16.mxu0 %v379
      %427 = vmatpush1.bf16.msra.mxu0 %v378
      %428 = vmatprep.subr.bf16.mxu0 %v381
      %429 = vmatpush1.bf16.msra.mxu0 %v380
      %430 = vmatprep.subr.bf16.mxu0 %v383
      %431 = vmatpush1.bf16.msra.mxu0 %v382
      %432 = vmatprep.subr.bf16.mxu0 %v385
      %433 = vmatpush1.bf16.msra.mxu0 %v384
      %434 = vmatprep.subr.bf16.mxu0 %v416
      %435 = vmatpush1.bf16.msra.mxu0 %v413
      %436 = vmatprep.subr.bf16.mxu0 0
      %437 = vmatpush1.bf16.msra.mxu0 0
      %438 = vmatprep.subr.bf16.mxu0 0
      %439 = vmatpush1.bf16.msra.mxu0 0
      %440 = vmatprep.subr.bf16.mxu0 0
      %441 = vmatpush1.bf16.msra.mxu0 0
      %442 = vmatprep.subr.bf16.mxu0 0
      %443 = vmatpush1.bf16.msra.mxu0 0
      %444 = vmatprep.subr.bf16.mxu0 0
      %445 = vmatpush1.bf16.msra.mxu0 0
      %446 = vmatprep.subr.bf16.mxu0 0
      %447 = vmatpush1.bf16.msra.mxu0 0
      %448 = vmatprep.subr.bf16.mxu0 0
      %449 = vmatpush1.bf16.msra.mxu0 0
      %450 = vmatprep.mubr.bf16.mxu0 %v406
      %451 = vmatmul.mubr.bf16.gmra.mrb[0].mxu0 %v313
      %v452 = vpop.f32.mrb[0].mxu0
      %v453 = vadd.f32 0.0, %v452
      %v454 = vpop.f32.mrb[0].mxu0
      %v455 = vadd.f32 0.0, %v454
      %v456 = vpop.f32.mrb[0].mxu0
      %v457 = vadd.f32 0.0, %v456
      %v458 = vpop.f32.mrb[0].mxu0
      %v459 = vadd.f32 0.0, %v458
      %460 = vmatprep.mubr.bf16.mxu0 %v409
      %461 = vmatmul.mubr.bf16.gmra.mrb[0].mxu0 %v315
      %v462 = vpop.f32.mrb[0].mxu0
      %v463 = vadd.f32 0.0, %v462
      %v464 = vpop.f32.mrb[0].mxu0
      %v465 = vadd.f32 0.0, %v464
      %v466 = vpop.f32.mrb[0].mxu0
      %v467 = vadd.f32 0.0, %v466
      %v468 = vpop.f32.mrb[0].mxu0
      %v469 = vadd.f32 0.0, %v468
      %470 = vdwg.mxu0
      %v475 = vunpack.c.l.b16 %v259
      %v476 = vunpack.c.h.b16 %v259
      %v477 = vunpack.c.l.b16 %v260
      %v478 = vunpack.c.h.b16 %v260
      %v479 = vunpack.c.l.b16 %v261
      %v480 = vunpack.c.h.b16 %v261
      %v481 = vunpack.c.l.b16 %v262
      %v482 = vunpack.c.h.b16 %v262
      %v483 = vpack.c.b16 %v477, %v475
      %v484 = vpack.c.b16 %v478, %v476
      %v485 = vpack.c.b16 %v481, %v479
      %v486 = vpack.c.b16 %v482, %v480
      %v506 = vunpack.c.l.b16 %v263
      %v507 = vunpack.c.h.b16 %v263
      %v508 = vunpack.c.l.b16 %v264
      %v509 = vunpack.c.h.b16 %v264
      %v510 = vunpack.c.l.b16 %v265
      %v511 = vunpack.c.h.b16 %v265
      %v512 = vunpack.c.l.b16 %v266
      %v513 = vunpack.c.h.b16 %v266
      %v514 = vunpack.c.l.b16 %v267
      %v515 = vunpack.c.h.b16 %v267
      %v516 = vunpack.c.l.b16 %v268
      %v517 = vunpack.c.h.b16 %v268
      %v518 = vunpack.c.l.b16 %v269
      %v519 = vunpack.c.h.b16 %v269
      %v520 = vunpack.c.l.b16 %v270
      %v521 = vunpack.c.h.b16 %v270
      %v522 = vunpack.c.l.b16 %v271
      %v523 = vunpack.c.h.b16 %v271
      %v524 = vunpack.c.l.b16 %v272
      %v525 = vunpack.c.h.b16 %v272
      %v526 = vunpack.c.l.b16 %v273
      %v527 = vunpack.c.h.b16 %v273
      %v528 = vunpack.c.l.b16 %v274
      %v529 = vunpack.c.h.b16 %v274
      %v530 = vunpack.c.l.b16 %v275
      %v531 = vunpack.c.h.b16 %v275
      %v532 = vunpack.c.l.b16 %v276
      %v533 = vunpack.c.h.b16 %v276
      %v534 = vunpack.c.l.b16 %v277
      %v535 = vunpack.c.h.b16 %v277
      %v536 = vunpack.c.l.b16 %v278
      %v537 = vunpack.c.h.b16 %v278
      %v538 = vunpack.c.l.b16 %v279
      %v539 = vunpack.c.h.b16 %v279
      %v540 = vpack.c.b16 %v508, %v506
      %v541 = vpack.c.b16 %v509, %v507
      %v542 = vpack.c.b16 %v512, %v510
      %v543 = vpack.c.b16 %v513, %v511
      %v544 = vpack.c.b16 %v516, %v514
      %v545 = vpack.c.b16 %v517, %v515
      %v546 = vpack.c.b16 %v520, %v518
      %v547 = vpack.c.b16 %v521, %v519
      %v548 = vpack.c.b16 %v524, %v522
      %v549 = vpack.c.b16 %v525, %v523
      %v550 = vpack.c.b16 %v528, %v526
      %v551 = vpack.c.b16 %v529, %v527
      %v552 = vpack.c.b16 %v532, %v530
      %v553 = vpack.c.b16 %v533, %v531
      %v554 = vpack.c.b16 %v536, %v534
      %v555 = vpack.c.b16 %v537, %v535
      %v556 = vpack.c.b16 %v538, %v538
      %v557 = vpack.c.b16 %v539, %v539
      %v575 = vsel %vm404, %v484, 0
      %v578 = vsel %vm404, %v486, 0
      %v581 = vsel %vm411, %v556, 0
      %v584 = vsel %vm411, %v557, 0
      %586 = vmatprep.subr.bf16.mxu0 %v541
      %587 = vmatpush1.bf16.msra.mxu0 %v540
      %588 = vmatprep.subr.bf16.mxu0 %v543
      %589 = vmatpush1.bf16.msra.mxu0 %v542
      %590 = vmatprep.subr.bf16.mxu0 %v545
      %591 = vmatpush1.bf16.msra.mxu0 %v544
      %592 = vmatprep.subr.bf16.mxu0 %v547
      %593 = vmatpush1.bf16.msra.mxu0 %v546
      %594 = vmatprep.subr.bf16.mxu0 %v549
      %595 = vmatpush1.bf16.msra.mxu0 %v548
      %596 = vmatprep.subr.bf16.mxu0 %v551
      %597 = vmatpush1.bf16.msra.mxu0 %v550
      %598 = vmatprep.subr.bf16.mxu0 %v553
      %599 = vmatpush1.bf16.msra.mxu0 %v552
      %600 = vmatprep.subr.bf16.mxu0 %v555
      %601 = vmatpush1.bf16.msra.mxu0 %v554
      %602 = vmatprep.subr.bf16.mxu0 %v584
      %603 = vmatpush1.bf16.msra.mxu0 %v581
      %604 = vmatprep.subr.bf16.mxu0 0
      %605 = vmatpush1.bf16.msra.mxu0 0
      %606 = vmatprep.subr.bf16.mxu0 0
      %607 = vmatpush1.bf16.msra.mxu0 0
      %608 = vmatprep.subr.bf16.mxu0 0
      %609 = vmatpush1.bf16.msra.mxu0 0
      %610 = vmatprep.subr.bf16.mxu0 0
      %611 = vmatpush1.bf16.msra.mxu0 0
      %612 = vmatprep.subr.bf16.mxu0 0
      %613 = vmatpush1.bf16.msra.mxu0 0
      %614 = vmatprep.subr.bf16.mxu0 0
      %615 = vmatpush1.bf16.msra.mxu0 0
      %616 = vmatprep.subr.bf16.mxu0 0
      %617 = vmatpush1.bf16.msra.mxu0 0
      %618 = vmatprep.mubr.bf16.mxu0 %v575
      %619 = vmatmul.mubr.bf16.gmra.mrb[0].mxu0 %v483
      %v620 = vpop.f32.mrb[0].mxu0
      %v621 = vadd.f32 %v453, %v620
      %v622 = vpop.f32.mrb[0].mxu0
      %v623 = vadd.f32 %v455, %v622
      %v624 = vpop.f32.mrb[0].mxu0
      %v625 = vadd.f32 %v457, %v624
      %v626 = vpop.f32.mrb[0].mxu0
      %v627 = vadd.f32 %v459, %v626
      %628 = vmatprep.mubr.bf16.mxu0 %v578
      %629 = vmatmul.mubr.bf16.gmra.mrb[0].mxu0 %v485
      %v630 = vpop.f32.mrb[0].mxu0
      %v631 = vadd.f32 %v463, %v630
      %v632 = vpop.f32.mrb[0].mxu0
      %v633 = vadd.f32 %v465, %v632
      %v634 = vpop.f32.mrb[0].mxu0
      %v635 = vadd.f32 %v467, %v634
      %v636 = vpop.f32.mrb[0].mxu0
      %v637 = vadd.f32 %v469, %v636
      %638 = vdwg.mxu0
      %v639 = vld [vmem:[%s242] sm:$0xff]
      %v640 = vld [vmem:[%s242 + $0x8] sm:$0xff]
      %v641 = vld [vmem:[%s242 + $0x10] sm:$0xff]
      %v642 = vld [vmem:[%s242 + $0x18] sm:$0xff]
      %v643 = vld [vmem:[%s242 + $0x20] sm:$0x11]
      %s644 = scalar_lea.vmem %s2, 136
      %v645 = vld [vmem:[%s644] sm:$0xff]
      %v646 = vld [vmem:[%s644 + $0x8] sm:$0xff]
      %v647 = vld [vmem:[%s644 + $0x10] sm:$0xff]
      %v648 = vld [vmem:[%s644 + $0x18] sm:$0xff]
      %v649 = vld [vmem:[%s644 + $0x20] sm:$0xff]
      %v650 = vld [vmem:[%s644 + $0x28] sm:$0xff]
      %v651 = vld [vmem:[%s644 + $0x30] sm:$0xff]
      %v652 = vld [vmem:[%s644 + $0x38] sm:$0xff]
      %v653 = vld [vmem:[%s644 + $0x40] sm:$0xff]
      %v654 = vld [vmem:[%s644 + $0x48] sm:$0xff]
      %v655 = vld [vmem:[%s644 + $0x50] sm:$0xff]
      %v656 = vld [vmem:[%s644 + $0x58] sm:$0xff]
      %v657 = vld [vmem:[%s644 + $0x60] sm:$0xff]
      %v658 = vld [vmem:[%s644 + $0x68] sm:$0xff]
      %v659 = vld [vmem:[%s644 + $0x70] sm:$0xff]
      %v660 = vld [vmem:[%s644 + $0x78] sm:$0xff]
      %v661 = vld [vmem:[%s644 + $0x80] sm:$0xff]
      %v667 = vunpack.c.l.b16 %v639
      %v668 = vunpack.c.h.b16 %v639
      %v669 = vunpack.c.l.b16 %v640
      %v670 = vunpack.c.h.b16 %v640
      %v671 = vunpack.c.l.b16 %v641
      %v672 = vunpack.c.h.b16 %v641
      %v673 = vunpack.c.l.b16 %v642
      %v674 = vunpack.c.h.b16 %v642
      %v675 = vunpack.c.l.b16 %v643
      %v676 = vunpack.c.h.b16 %v643
      %v677 = vpack.c.b16 %v669, %v667
      %v678 = vpack.c.b16 %v670, %v668
      %v679 = vpack.c.b16 %v673, %v671
      %v680 = vpack.c.b16 %v674, %v672
      %v681 = vpack.c.b16 %v675, %v675
      %v682 = vpack.c.b16 %v676, %v676
      %vm683 = vsmask.f32 7424
      %v685 = vshrl.u32 %v677, 16
      %v687 = vshll.u32 %v677, 16
      %v689 = vrot.slane %v687, 1
      %v690 = vor.u32 %v685, %v689
      %v692 = vshll.u32 %v679, 16
      %v694 = vrot.slane %v692, 1
      %v695 = vsel %vm683, %v690, %v694
      %v697 = vshrl.u32 %v678, 16
      %v699 = vshll.u32 %v678, 16
      %v701 = vrot.slane %v699, 1
      %v702 = vor.u32 %v697, %v701
      %v704 = vshll.u32 %v680, 16
      %v706 = vrot.slane %v704, 1
      %v707 = vsel %vm683, %v702, %v706
      %v708 = vshrl.u32 %v679, 16
      %v710 = vor.u32 %v708, %v694
      %v712 = vshll.u32 %v681, 16
      %v714 = vrot.slane %v712, 1
      %v715 = vsel %vm683, %v710, %v714
      %v716 = vshrl.u32 %v680, 16
      %v718 = vor.u32 %v716, %v706
      %v720 = vshll.u32 %v682, 16
      %v722 = vrot.slane %v720, 1
      %v723 = vsel %vm683, %v718, %v722
      %v743 = vunpack.c.l.b16 %v645
      %v744 = vunpack.c.h.b16 %v645
      %v745 = vunpack.c.l.b16 %v646
      %v746 = vunpack.c.h.b16 %v646
      %v747 = vunpack.c.l.b16 %v647
      %v748 = vunpack.c.h.b16 %v647
      %v749 = vunpack.c.l.b16 %v648
      %v750 = vunpack.c.h.b16 %v648
      %v751 = vunpack.c.l.b16 %v649
      %v752 = vunpack.c.h.b16 %v649
      %v753 = vunpack.c.l.b16 %v650
      %v754 = vunpack.c.h.b16 %v650
      %v755 = vunpack.c.l.b16 %v651
      %v756 = vunpack.c.h.b16 %v651
      %v757 = vunpack.c.l.b16 %v652
      %v758 = vunpack.c.h.b16 %v652
      %v759 = vunpack.c.l.b16 %v653
      %v760 = vunpack.c.h.b16 %v653
      %v761 = vunpack.c.l.b16 %v654
      %v762 = vunpack.c.h.b16 %v654
      %v763 = vunpack.c.l.b16 %v655
      %v764 = vunpack.c.h.b16 %v655
      %v765 = vunpack.c.l.b16 %v656
      %v766 = vunpack.c.h.b16 %v656
      %v767 = vunpack.c.l.b16 %v657
      %v768 = vunpack.c.h.b16 %v657
      %v769 = vunpack.c.l.b16 %v658
      %v770 = vunpack.c.h.b16 %v658
      %v771 = vunpack.c.l.b16 %v659
      %v772 = vunpack.c.h.b16 %v659
      %v773 = vunpack.c.l.b16 %v660
      %v774 = vunpack.c.h.b16 %v660
      %v775 = vunpack.c.l.b16 %v661
      %v776 = vunpack.c.h.b16 %v661
      %v777 = vpack.c.b16 %v745, %v743
      %v778 = vpack.c.b16 %v746, %v744
      %v779 = vpack.c.b16 %v749, %v747
      %v780 = vpack.c.b16 %v750, %v748
      %v781 = vpack.c.b16 %v753, %v751
      %v782 = vpack.c.b16 %v754, %v752
      %v783 = vpack.c.b16 %v757, %v755
      %v784 = vpack.c.b16 %v758, %v756
      %v785 = vpack.c.b16 %v761, %v759
      %v786 = vpack.c.b16 %v762, %v760
      %v787 = vpack.c.b16 %v765, %v763
      %v788 = vpack.c.b16 %v766, %v764
      %v789 = vpack.c.b16 %v769, %v767
      %v790 = vpack.c.b16 %v770, %v768
      %v791 = vpack.c.b16 %v773, %v771
      %v792 = vpack.c.b16 %v774, %v772
      %v793 = vpack.c.b16 %v775, %v775
      %v794 = vpack.c.b16 %v776, %v776
      %v812 = vsel %vm404, %v707, 0
      %v815 = vsel %vm404, %v723, 0
      %v818 = vsel %vm411, %v793, 0
      %v821 = vsel %vm411, %v794, 0
      %823 = vmatprep.subr.bf16.mxu0 %v778
      %824 = vmatpush1.bf16.msra.mxu0 %v777
      %825 = vmatprep.subr.bf16.mxu0 %v780
      %826 = vmatpush1.bf16.msra.mxu0 %v779
      %827 = vmatprep.subr.bf16.mxu0 %v782
      %828 = vmatpush1.bf16.msra.mxu0 %v781
      %829 = vmatprep.subr.bf16.mxu0 %v784
      %830 = vmatpush1.bf16.msra.mxu0 %v783
      %831 = vmatprep.subr.bf16.mxu0 %v786
      %832 = vmatpush1.bf16.msra.mxu0 %v785
      %833 = vmatprep.subr.bf16.mxu0 %v788
      %834 = vmatpush1.bf16.msra.mxu0 %v787
      %835 = vmatprep.subr.bf16.mxu0 %v790
      %836 = vmatpush1.bf16.msra.mxu0 %v789
      %837 = vmatprep.subr.bf16.mxu0 %v792
      %838 = vmatpush1.bf16.msra.mxu0 %v791
      %839 = vmatprep.subr.bf16.mxu0 %v821
      %840 = vmatpush1.bf16.msra.mxu0 %v818
      %841 = vmatprep.subr.bf16.mxu0 0
      %842 = vmatpush1.bf16.msra.mxu0 0
      %843 = vmatprep.subr.bf16.mxu0 0
      %844 = vmatpush1.bf16.msra.mxu0 0
      %845 = vmatprep.subr.bf16.mxu0 0
      %846 = vmatpush1.bf16.msra.mxu0 0
      %847 = vmatprep.subr.bf16.mxu0 0
      %848 = vmatpush1.bf16.msra.mxu0 0
      %849 = vmatprep.subr.bf16.mxu0 0
      %850 = vmatpush1.bf16.msra.mxu0 0
      %851 = vmatprep.subr.bf16.mxu0 0
      %852 = vmatpush1.bf16.msra.mxu0 0
      %853 = vmatprep.subr.bf16.mxu0 0
      %854 = vmatpush1.bf16.msra.mxu0 0
      %855 = vmatprep.mubr.bf16.mxu0 %v812
      %856 = vmatmul.mubr.bf16.gmra.mrb[0].mxu0 %v695
      %v857 = vpop.f32.mrb[0].mxu0
      %v858 = vadd.f32 0.0, %v857
      %v859 = vpop.f32.mrb[0].mxu0
      %v860 = vadd.f32 0.0, %v859
      %v861 = vpop.f32.mrb[0].mxu0
      %v862 = vadd.f32 0.0, %v861
      %v863 = vpop.f32.mrb[0].mxu0
      %v864 = vadd.f32 0.0, %v863
      %865 = vmatprep.mubr.bf16.mxu0 %v815
      %866 = vmatmul.mubr.bf16.gmra.mrb[0].mxu0 %v715
      %v867 = vpop.f32.mrb[0].mxu0
      %v868 = vadd.f32 0.0, %v867
      %v869 = vpop.f32.mrb[0].mxu0
      %v870 = vadd.f32 0.0, %v869
      %v871 = vpop.f32.mrb[0].mxu0
      %v872 = vadd.f32 0.0, %v871
      %v873 = vpop.f32.mrb[0].mxu0
      %v874 = vadd.f32 0.0, %v873
      %875 = vdwg.mxu0
      %v876 = vadd.f32 %v621, %v858
      %v877 = vadd.f32 %v623, %v860
      %v878 = vadd.f32 %v625, %v862
      %v879 = vadd.f32 %v627, %v864
      %v880 = vadd.f32 %v631, %v868
      %v881 = vadd.f32 %v633, %v870
      %v882 = vadd.f32 %v635, %v872
      %v883 = vadd.f32 %v637, %v874
      %v884 = vld [vmem:[%s247] sm:$0xff]
      %v885 = vld [vmem:[%s247 + $0x8] sm:$0xff]
      %v886 = vld [vmem:[%s247 + $0x10] sm:$0xff]
      %v887 = vld [vmem:[%s247 + $0x18] sm:$0xff]
      %v888 = vld [vmem:[%s247 + $0x20] sm:$0x11]
      %s889 = scalar_lea.vmem %s3, 136
      %v890 = vld [vmem:[%s889] sm:$0xff]
      %v891 = vld [vmem:[%s889 + $0x8] sm:$0xff]
      %v892 = vld [vmem:[%s889 + $0x10] sm:$0xff]
      %v893 = vld [vmem:[%s889 + $0x18] sm:$0xff]
      %v894 = vld [vmem:[%s889 + $0x20] sm:$0xff]
      %v895 = vld [vmem:[%s889 + $0x28] sm:$0xff]
      %v896 = vld [vmem:[%s889 + $0x30] sm:$0xff]
      %v897 = vld [vmem:[%s889 + $0x38] sm:$0xff]
      %v898 = vld [vmem:[%s889 + $0x40] sm:$0xff]
      %v899 = vld [vmem:[%s889 + $0x48] sm:$0xff]
      %v900 = vld [vmem:[%s889 + $0x50] sm:$0xff]
      %v901 = vld [vmem:[%s889 + $0x58] sm:$0xff]
      %v902 = vld [vmem:[%s889 + $0x60] sm:$0xff]
      %v903 = vld [vmem:[%s889 + $0x68] sm:$0xff]
      %v904 = vld [vmem:[%s889 + $0x70] sm:$0xff]
      %v905 = vld [vmem:[%s889 + $0x78] sm:$0xff]
      %v906 = vld [vmem:[%s889 + $0x80] sm:$0xff]
      %v912 = vunpack.c.l.b16 %v884
      %v913 = vunpack.c.h.b16 %v884
      %v914 = vunpack.c.l.b16 %v885
      %v915 = vunpack.c.h.b16 %v885
      %v916 = vunpack.c.l.b16 %v886
      %v917 = vunpack.c.h.b16 %v886
      %v918 = vunpack.c.l.b16 %v887
      %v919 = vunpack.c.h.b16 %v887
      %v920 = vunpack.c.l.b16 %v888
      %v921 = vunpack.c.h.b16 %v888
      %v922 = vpack.c.b16 %v914, %v912
      %v923 = vpack.c.b16 %v915, %v913
      %v924 = vpack.c.b16 %v918, %v916
      %v925 = vpack.c.b16 %v919, %v917
      %v926 = vpack.c.b16 %v920, %v920
      %v927 = vpack.c.b16 %v921, %v921
      %v929 = vshrl.u32 %v922, 16
      %v931 = vshll.u32 %v922, 16
      %v933 = vrot.slane %v931, 1
      %v934 = vor.u32 %v929, %v933
      %v936 = vshll.u32 %v924, 16
      %v938 = vrot.slane %v936, 1
      %v939 = vsel %vm683, %v934, %v938
      %v941 = vshrl.u32 %v923, 16
      %v943 = vshll.u32 %v923, 16
      %v945 = vrot.slane %v943, 1
      %v946 = vor.u32 %v941, %v945
      %v948 = vshll.u32 %v925, 16
      %v950 = vrot.slane %v948, 1
      %v951 = vsel %vm683, %v946, %v950
      %v952 = vshrl.u32 %v924, 16
      %v954 = vor.u32 %v952, %v938
      %v956 = vshll.u32 %v926, 16
      %v958 = vrot.slane %v956, 1
      %v959 = vsel %vm683, %v954, %v958
      %v960 = vshrl.u32 %v925, 16
      %v962 = vor.u32 %v960, %v950
      %v964 = vshll.u32 %v927, 16
      %v966 = vrot.slane %v964, 1
      %v967 = vsel %vm683, %v962, %v966
      %v987 = vunpack.c.l.b16 %v890
      %v988 = vunpack.c.h.b16 %v890
      %v989 = vunpack.c.l.b16 %v891
      %v990 = vunpack.c.h.b16 %v891
      %v991 = vunpack.c.l.b16 %v892
      %v992 = vunpack.c.h.b16 %v892
      %v993 = vunpack.c.l.b16 %v893
      %v994 = vunpack.c.h.b16 %v893
      %v995 = vunpack.c.l.b16 %v894
      %v996 = vunpack.c.h.b16 %v894
      %v997 = vunpack.c.l.b16 %v895
      %v998 = vunpack.c.h.b16 %v895
      %v999 = vunpack.c.l.b16 %v896
      %v1000 = vunpack.c.h.b16 %v896
      %v1001 = vunpack.c.l.b16 %v897
      %v1002 = vunpack.c.h.b16 %v897
      %v1003 = vunpack.c.l.b16 %v898
      %v1004 = vunpack.c.h.b16 %v898
      %v1005 = vunpack.c.l.b16 %v899
      %v1006 = vunpack.c.h.b16 %v899
      %v1007 = vunpack.c.l.b16 %v900
      %v1008 = vunpack.c.h.b16 %v900
      %v1009 = vunpack.c.l.b16 %v901
      %v1010 = vunpack.c.h.b16 %v901
      %v1011 = vunpack.c.l.b16 %v902
      %v1012 = vunpack.c.h.b16 %v902
      %v1013 = vunpack.c.l.b16 %v903
      %v1014 = vunpack.c.h.b16 %v903
      %v1015 = vunpack.c.l.b16 %v904
      %v1016 = vunpack.c.h.b16 %v904
      %v1017 = vunpack.c.l.b16 %v905
      %v1018 = vunpack.c.h.b16 %v905
      %v1019 = vunpack.c.l.b16 %v906
      %v1020 = vunpack.c.h.b16 %v906
      %v1021 = vpack.c.b16 %v989, %v987
      %v1022 = vpack.c.b16 %v990, %v988
      %v1023 = vpack.c.b16 %v993, %v991
      %v1024 = vpack.c.b16 %v994, %v992
      %v1025 = vpack.c.b16 %v997, %v995
      %v1026 = vpack.c.b16 %v998, %v996
      %v1027 = vpack.c.b16 %v1001, %v999
      %v1028 = vpack.c.b16 %v1002, %v1000
      %v1029 = vpack.c.b16 %v1005, %v1003
      %v1030 = vpack.c.b16 %v1006, %v1004
      %v1031 = vpack.c.b16 %v1009, %v1007
      %v1032 = vpack.c.b16 %v1010, %v1008
      %v1033 = vpack.c.b16 %v1013, %v1011
      %v1034 = vpack.c.b16 %v1014, %v1012
      %v1035 = vpack.c.b16 %v1017, %v1015
      %v1036 = vpack.c.b16 %v1018, %v1016
      %v1037 = vpack.c.b16 %v1019, %v1019
      %v1038 = vpack.c.b16 %v1020, %v1020
      %v1056 = vsel %vm404, %v951, 0
      %v1059 = vsel %vm404, %v967, 0
      %v1062 = vsel %vm411, %v1037, 0
      %v1065 = vsel %vm411, %v1038, 0
      %1067 = vmatprep.subr.bf16.mxu0 %v1022
      %1068 = vmatpush1.bf16.msra.mxu0 %v1021
      %1069 = vmatprep.subr.bf16.mxu0 %v1024
      %1070 = vmatpush1.bf16.msra.mxu0 %v1023
      %1071 = vmatprep.subr.bf16.mxu0 %v1026
      %1072 = vmatpush1.bf16.msra.mxu0 %v1025
      %1073 = vmatprep.subr.bf16.mxu0 %v1028
      %1074 = vmatpush1.bf16.msra.mxu0 %v1027
      %1075 = vmatprep.subr.bf16.mxu0 %v1030
      %1076 = vmatpush1.bf16.msra.mxu0 %v1029
      %1077 = vmatprep.subr.bf16.mxu0 %v1032
      %1078 = vmatpush1.bf16.msra.mxu0 %v1031
      %1079 = vmatprep.subr.bf16.mxu0 %v1034
      %1080 = vmatpush1.bf16.msra.mxu0 %v1033
      %1081 = vmatprep.subr.bf16.mxu0 %v1036
      %1082 = vmatpush1.bf16.msra.mxu0 %v1035
      %1083 = vmatprep.subr.bf16.mxu0 %v1065
      %1084 = vmatpush1.bf16.msra.mxu0 %v1062
      %1085 = vmatprep.subr.bf16.mxu0 0
      %1086 = vmatpush1.bf16.msra.mxu0 0
      %1087 = vmatprep.subr.bf16.mxu0 0
      %1088 = vmatpush1.bf16.msra.mxu0 0
      %1089 = vmatprep.subr.bf16.mxu0 0
      %1090 = vmatpush1.bf16.msra.mxu0 0
      %1091 = vmatprep.subr.bf16.mxu0 0
      %1092 = vmatpush1.bf16.msra.mxu0 0
      %1093 = vmatprep.subr.bf16.mxu0 0
      %1094 = vmatpush1.bf16.msra.mxu0 0
      %1095 = vmatprep.subr.bf16.mxu0 0
      %1096 = vmatpush1.bf16.msra.mxu0 0
      %1097 = vmatprep.subr.bf16.mxu0 0
      %1098 = vmatpush1.bf16.msra.mxu0 0
      %1099 = vmatprep.mubr.bf16.mxu0 %v1056
      %1100 = vmatmul.mubr.bf16.gmra.mrb[0].mxu0 %v939
      %v1101 = vpop.f32.mrb[0].mxu0
      %v1102 = vadd.f32 0.0, %v1101
      %v1103 = vpop.f32.mrb[0].mxu0
      %v1104 = vadd.f32 0.0, %v1103
      %v1105 = vpop.f32.mrb[0].mxu0
      %v1106 = vadd.f32 0.0, %v1105
      %v1107 = vpop.f32.mrb[0].mxu0
      %v1108 = vadd.f32 0.0, %v1107
      %1109 = vmatprep.mubr.bf16.mxu0 %v1059
      %1110 = vmatmul.mubr.bf16.gmra.mrb[0].mxu0 %v959
      %v1111 = vpop.f32.mrb[0].mxu0
      %v1112 = vadd.f32 0.0, %v1111
      %v1113 = vpop.f32.mrb[0].mxu0
      %v1114 = vadd.f32 0.0, %v1113
      %v1115 = vpop.f32.mrb[0].mxu0
      %v1116 = vadd.f32 0.0, %v1115
      %v1117 = vpop.f32.mrb[0].mxu0
      %v1118 = vadd.f32 0.0, %v1117
      %1119 = vdwg.mxu0
      %v1120 = vadd.f32 %v876, %v1102
      %v1121 = vadd.f32 %v877, %v1104
      %v1122 = vadd.f32 %v878, %v1106
      %v1123 = vadd.f32 %v879, %v1108
      %v1124 = vadd.f32 %v880, %v1112
      %v1125 = vadd.f32 %v881, %v1114
      %v1126 = vadd.f32 %v882, %v1116
      %v1127 = vadd.f32 %v883, %v1118
      %v1128 = vld [vmem:[%s242] sm:$0xee]
      %s1129 = scalar_lea.vmem %s2, 272
      %v1130 = vld [vmem:[%s1129] sm:$0xff]
      %v1131 = vld [vmem:[%s1129 + $0x8] sm:$0xff]
      %v1132 = vld [vmem:[%s1129 + $0x10] sm:$0xff]
      %v1133 = vld [vmem:[%s1129 + $0x18] sm:$0xff]
      %v1134 = vld [vmem:[%s1129 + $0x20] sm:$0xff]
      %v1135 = vld [vmem:[%s1129 + $0x28] sm:$0xff]
      %v1136 = vld [vmem:[%s1129 + $0x30] sm:$0xff]
      %v1137 = vld [vmem:[%s1129 + $0x38] sm:$0xff]
      %v1138 = vld [vmem:[%s1129 + $0x40] sm:$0xff]
      %v1139 = vld [vmem:[%s1129 + $0x48] sm:$0xff]
      %v1140 = vld [vmem:[%s1129 + $0x50] sm:$0xff]
      %v1141 = vld [vmem:[%s1129 + $0x58] sm:$0xff]
      %v1142 = vld [vmem:[%s1129 + $0x60] sm:$0xff]
      %v1143 = vld [vmem:[%s1129 + $0x68] sm:$0xff]
      %v1144 = vld [vmem:[%s1129 + $0x70] sm:$0xff]
      %v1145 = vld [vmem:[%s1129 + $0x78] sm:$0xff]
      %v1146 = vld [vmem:[%s1129 + $0x80] sm:$0xff]
      %v1148 = vunpack.c.l.b16 %v1128
      %v1149 = vunpack.c.h.b16 %v1128
      %v1150 = vpack.c.b16 %v669, %v1148
      %v1151 = vpack.c.b16 %v670, %v1149
      %vm1152 = vcmask 1046528
      %v1153 = vrot.slane %v1150, 1
      %v1154 = vrot.slane %v679, 1
      %v1155 = vsel %vm1152, %v1153, %v1154
      %v1156 = vrot.slane %v1151, 1
      %v1157 = vrot.slane %v680, 1
      %v1158 = vsel %vm1152, %v1156, %v1157
      %v1159 = vrot.slane %v681, 1
      %v1160 = vsel %vm1152, %v1154, %v1159
      %v1161 = vrot.slane %v682, 1
      %v1162 = vsel %vm1152, %v1157, %v1161
      %v1182 = vunpack.c.l.b16 %v1130
      %v1183 = vunpack.c.h.b16 %v1130
      %v1184 = vunpack.c.l.b16 %v1131
      %v1185 = vunpack.c.h.b16 %v1131
      %v1186 = vunpack.c.l.b16 %v1132
      %v1187 = vunpack.c.h.b16 %v1132
      %v1188 = vunpack.c.l.b16 %v1133
      %v1189 = vunpack.c.h.b16 %v1133
      %v1190 = vunpack.c.l.b16 %v1134
      %v1191 = vunpack.c.h.b16 %v1134
      %v1192 = vunpack.c.l.b16 %v1135
      %v1193 = vunpack.c.h.b16 %v1135
      %v1194 = vunpack.c.l.b16 %v1136
      %v1195 = vunpack.c.h.b16 %v1136
      %v1196 = vunpack.c.l.b16 %v1137
      %v1197 = vunpack.c.h.b16 %v1137
      %v1198 = vunpack.c.l.b16 %v1138
      %v1199 = vunpack.c.h.b16 %v1138
      %v1200 = vunpack.c.l.b16 %v1139
      %v1201 = vunpack.c.h.b16 %v1139
      %v1202 = vunpack.c.l.b16 %v1140
      %v1203 = vunpack.c.h.b16 %v1140
      %v1204 = vunpack.c.l.b16 %v1141
      %v1205 = vunpack.c.h.b16 %v1141
      %v1206 = vunpack.c.l.b16 %v1142
      %v1207 = vunpack.c.h.b16 %v1142
      %v1208 = vunpack.c.l.b16 %v1143
      %v1209 = vunpack.c.h.b16 %v1143
      %v1210 = vunpack.c.l.b16 %v1144
      %v1211 = vunpack.c.h.b16 %v1144
      %v1212 = vunpack.c.l.b16 %v1145
      %v1213 = vunpack.c.h.b16 %v1145
      %v1214 = vunpack.c.l.b16 %v1146
      %v1215 = vunpack.c.h.b16 %v1146
      %v1216 = vpack.c.b16 %v1184, %v1182
      %v1217 = vpack.c.b16 %v1185, %v1183
      %v1218 = vpack.c.b16 %v1188, %v1186
      %v1219 = vpack.c.b16 %v1189, %v1187
      %v1220 = vpack.c.b16 %v1192, %v1190
      %v1221 = vpack.c.b16 %v1193, %v1191
      %v1222 = vpack.c.b16 %v1196, %v1194
      %v1223 = vpack.c.b16 %v1197, %v1195
      %v1224 = vpack.c.b16 %v1200, %v1198
      %v1225 = vpack.c.b16 %v1201, %v1199
      %v1226 = vpack.c.b16 %v1204, %v1202
      %v1227 = vpack.c.b16 %v1205, %v1203
      %v1228 = vpack.c.b16 %v1208, %v1206
      %v1229 = vpack.c.b16 %v1209, %v1207
      %v1230 = vpack.c.b16 %v1212, %v1210
      %v1231 = vpack.c.b16 %v1213, %v1211
      %v1232 = vpack.c.b16 %v1214, %v1214
      %v1233 = vpack.c.b16 %v1215, %v1215
      %v1251 = vsel %vm404, %v1158, 0
      %v1254 = vsel %vm404, %v1162, 0
      %v1257 = vsel %vm411, %v1232, 0
      %v1260 = vsel %vm411, %v1233, 0
      %1262 = vmatprep.subr.bf16.mxu0 %v1217
      %1263 = vmatpush1.bf16.msra.mxu0 %v1216
      %1264 = vmatprep.subr.bf16.mxu0 %v1219
      %1265 = vmatpush1.bf16.msra.mxu0 %v1218
      %1266 = vmatprep.subr.bf16.mxu0 %v1221
      %1267 = vmatpush1.bf16.msra.mxu0 %v1220
      %1268 = vmatprep.subr.bf16.mxu0 %v1223
      %1269 = vmatpush1.bf16.msra.mxu0 %v1222
      %1270 = vmatprep.subr.bf16.mxu0 %v1225
      %1271 = vmatpush1.bf16.msra.mxu0 %v1224
      %1272 = vmatprep.subr.bf16.mxu0 %v1227
      %1273 = vmatpush1.bf16.msra.mxu0 %v1226
      %1274 = vmatprep.subr.bf16.mxu0 %v1229
      %1275 = vmatpush1.bf16.msra.mxu0 %v1228
      %1276 = vmatprep.subr.bf16.mxu0 %v1231
      %1277 = vmatpush1.bf16.msra.mxu0 %v1230
      %1278 = vmatprep.subr.bf16.mxu0 %v1260
      %1279 = vmatpush1.bf16.msra.mxu0 %v1257
      %1280 = vmatprep.subr.bf16.mxu0 0
      %1281 = vmatpush1.bf16.msra.mxu0 0
      %1282 = vmatprep.subr.bf16.mxu0 0
      %1283 = vmatpush1.bf16.msra.mxu0 0
      %1284 = vmatprep.subr.bf16.mxu0 0
      %1285 = vmatpush1.bf16.msra.mxu0 0
      %1286 = vmatprep.subr.bf16.mxu0 0
      %1287 = vmatpush1.bf16.msra.mxu0 0
      %1288 = vmatprep.subr.bf16.mxu0 0
      %1289 = vmatpush1.bf16.msra.mxu0 0
      %1290 = vmatprep.subr.bf16.mxu0 0
      %1291 = vmatpush1.bf16.msra.mxu0 0
      %1292 = vmatprep.subr.bf16.mxu0 0
      %1293 = vmatpush1.bf16.msra.mxu0 0
      %1294 = vmatprep.mubr.bf16.mxu0 %v1251
      %1295 = vmatmul.mubr.bf16.gmra.mrb[0].mxu0 %v1155
      %v1296 = vpop.f32.mrb[0].mxu0
      %v1297 = vadd.f32 0.0, %v1296
      %v1298 = vpop.f32.mrb[0].mxu0
      %v1299 = vadd.f32 0.0, %v1298
      %v1300 = vpop.f32.mrb[0].mxu0
      %v1301 = vadd.f32 0.0, %v1300
      %v1302 = vpop.f32.mrb[0].mxu0
      %v1303 = vadd.f32 0.0, %v1302
      %1304 = vmatprep.mubr.bf16.mxu0 %v1254
      %1305 = vmatmul.mubr.bf16.gmra.mrb[0].mxu0 %v1160
      %v1306 = vpop.f32.mrb[0].mxu0
      %v1307 = vadd.f32 0.0, %v1306
      %v1308 = vpop.f32.mrb[0].mxu0
      %v1309 = vadd.f32 0.0, %v1308
      %v1310 = vpop.f32.mrb[0].mxu0
      %v1311 = vadd.f32 0.0, %v1310
      %v1312 = vpop.f32.mrb[0].mxu0
      %v1313 = vadd.f32 0.0, %v1312
      %1314 = vdwg.mxu0
      %v1315 = vadd.f32 %v1120, %v1297
      %v1316 = vadd.f32 %v1121, %v1299
      %v1317 = vadd.f32 %v1122, %v1301
      %v1318 = vadd.f32 %v1123, %v1303
      %v1319 = vadd.f32 %v1124, %v1307
      %v1320 = vadd.f32 %v1125, %v1309
      %v1321 = vadd.f32 %v1126, %v1311
      %v1322 = vadd.f32 %v1127, %v1313
      %v1323 = vld [vmem:[%s247] sm:$0xee]
      %s1324 = scalar_lea.vmem %s3, 272
      %v1325 = vld [vmem:[%s1324] sm:$0xff]
      %v1326 = vld [vmem:[%s1324 + $0x8] sm:$0xff]
      %v1327 = vld [vmem:[%s1324 + $0x10] sm:$0xff]
      %v1328 = vld [vmem:[%s1324 + $0x18] sm:$0xff]
      %v1329 = vld [vmem:[%s1324 + $0x20] sm:$0xff]
      %v1330 = vld [vmem:[%s1324 + $0x28] sm:$0xff]
      %v1331 = vld [vmem:[%s1324 + $0x30] sm:$0xff]
      %v1332 = vld [vmem:[%s1324 + $0x38] sm:$0xff]
      %v1333 = vld [vmem:[%s1324 + $0x40] sm:$0xff]
      %v1334 = vld [vmem:[%s1324 + $0x48] sm:$0xff]
      %v1335 = vld [vmem:[%s1324 + $0x50] sm:$0xff]
      %v1336 = vld [vmem:[%s1324 + $0x58] sm:$0xff]
      %v1337 = vld [vmem:[%s1324 + $0x60] sm:$0xff]
      %v1338 = vld [vmem:[%s1324 + $0x68] sm:$0xff]
      %v1339 = vld [vmem:[%s1324 + $0x70] sm:$0xff]
      %v1340 = vld [vmem:[%s1324 + $0x78] sm:$0xff]
      %v1341 = vld [vmem:[%s1324 + $0x80] sm:$0xff]
      %v1343 = vunpack.c.l.b16 %v1323
      %v1344 = vunpack.c.h.b16 %v1323
      %v1345 = vpack.c.b16 %v914, %v1343
      %v1346 = vpack.c.b16 %v915, %v1344
      %v1347 = vrot.slane %v1345, 1
      %v1348 = vrot.slane %v924, 1
      %v1349 = vsel %vm1152, %v1347, %v1348
      %v1350 = vrot.slane %v1346, 1
      %v1351 = vrot.slane %v925, 1
      %v1352 = vsel %vm1152, %v1350, %v1351
      %v1353 = vrot.slane %v926, 1
      %v1354 = vsel %vm1152, %v1348, %v1353
      %v1355 = vrot.slane %v927, 1
      %v1356 = vsel %vm1152, %v1351, %v1355
      %v1376 = vunpack.c.l.b16 %v1325
      %v1377 = vunpack.c.h.b16 %v1325
      %v1378 = vunpack.c.l.b16 %v1326
      %v1379 = vunpack.c.h.b16 %v1326
      %v1380 = vunpack.c.l.b16 %v1327
      %v1381 = vunpack.c.h.b16 %v1327
      %v1382 = vunpack.c.l.b16 %v1328
      %v1383 = vunpack.c.h.b16 %v1328
      %v1384 = vunpack.c.l.b16 %v1329
      %v1385 = vunpack.c.h.b16 %v1329
      %v1386 = vunpack.c.l.b16 %v1330
      %v1387 = vunpack.c.h.b16 %v1330
      %v1388 = vunpack.c.l.b16 %v1331
      %v1389 = vunpack.c.h.b16 %v1331
      %v1390 = vunpack.c.l.b16 %v1332
      %v1391 = vunpack.c.h.b16 %v1332
      %v1392 = vunpack.c.l.b16 %v1333
      %v1393 = vunpack.c.h.b16 %v1333
      %v1394 = vunpack.c.l.b16 %v1334
      %v1395 = vunpack.c.h.b16 %v1334
      %v1396 = vunpack.c.l.b16 %v1335
      %v1397 = vunpack.c.h.b16 %v1335
      %v1398 = vunpack.c.l.b16 %v1336
      %v1399 = vunpack.c.h.b16 %v1336
      %v1400 = vunpack.c.l.b16 %v1337
      %v1401 = vunpack.c.h.b16 %v1337
      %v1402 = vunpack.c.l.b16 %v1338
      %v1403 = vunpack.c.h.b16 %v1338
      %v1404 = vunpack.c.l.b16 %v1339
      %v1405 = vunpack.c.h.b16 %v1339
      %v1406 = vunpack.c.l.b16 %v1340
      %v1407 = vunpack.c.h.b16 %v1340
      %v1408 = vunpack.c.l.b16 %v1341
      %v1409 = vunpack.c.h.b16 %v1341
      %v1410 = vpack.c.b16 %v1378, %v1376
      %v1411 = vpack.c.b16 %v1379, %v1377
      %v1412 = vpack.c.b16 %v1382, %v1380
      %v1413 = vpack.c.b16 %v1383, %v1381
      %v1414 = vpack.c.b16 %v1386, %v1384
      %v1415 = vpack.c.b16 %v1387, %v1385
      %v1416 = vpack.c.b16 %v1390, %v1388
      %v1417 = vpack.c.b16 %v1391, %v1389
      %v1418 = vpack.c.b16 %v1394, %v1392
      %v1419 = vpack.c.b16 %v1395, %v1393
      %v1420 = vpack.c.b16 %v1398, %v1396
      %v1421 = vpack.c.b16 %v1399, %v1397
      %v1422 = vpack.c.b16 %v1402, %v1400
      %v1423 = vpack.c.b16 %v1403, %v1401
      %v1424 = vpack.c.b16 %v1406, %v1404
      %v1425 = vpack.c.b16 %v1407, %v1405
      %v1426 = vpack.c.b16 %v1408, %v1408
      %v1427 = vpack.c.b16 %v1409, %v1409
      %v1445 = vsel %vm404, %v1352, 0
      %v1448 = vsel %vm404, %v1356, 0
      %v1451 = vsel %vm411, %v1426, 0
      %v1454 = vsel %vm411, %v1427, 0
      %1456 = vmatprep.subr.bf16.mxu0 %v1411
      %1457 = vmatpush1.bf16.msra.mxu0 %v1410
      %1458 = vmatprep.subr.bf16.mxu0 %v1413
      %1459 = vmatpush1.bf16.msra.mxu0 %v1412
      %1460 = vmatprep.subr.bf16.mxu0 %v1415
      %1461 = vmatpush1.bf16.msra.mxu0 %v1414
      %1462 = vmatprep.subr.bf16.mxu0 %v1417
      %1463 = vmatpush1.bf16.msra.mxu0 %v1416
      %1464 = vmatprep.subr.bf16.mxu0 %v1419
      %1465 = vmatpush1.bf16.msra.mxu0 %v1418
      %1466 = vmatprep.subr.bf16.mxu0 %v1421
      %1467 = vmatpush1.bf16.msra.mxu0 %v1420
      %1468 = vmatprep.subr.bf16.mxu0 %v1423
      %1469 = vmatpush1.bf16.msra.mxu0 %v1422
      %1470 = vmatprep.subr.bf16.mxu0 %v1425
      %1471 = vmatpush1.bf16.msra.mxu0 %v1424
      %1472 = vmatprep.subr.bf16.mxu0 %v1454
      %1473 = vmatpush1.bf16.msra.mxu0 %v1451
      %1474 = vmatprep.subr.bf16.mxu0 0
      %1475 = vmatpush1.bf16.msra.mxu0 0
      %1476 = vmatprep.subr.bf16.mxu0 0
      %1477 = vmatpush1.bf16.msra.mxu0 0
      %1478 = vmatprep.subr.bf16.mxu0 0
      %1479 = vmatpush1.bf16.msra.mxu0 0
      %1480 = vmatprep.subr.bf16.mxu0 0
      %1481 = vmatpush1.bf16.msra.mxu0 0
      %1482 = vmatprep.subr.bf16.mxu0 0
      %1483 = vmatpush1.bf16.msra.mxu0 0
      %1484 = vmatprep.subr.bf16.mxu0 0
      %1485 = vmatpush1.bf16.msra.mxu0 0
      %1486 = vmatprep.subr.bf16.mxu0 0
      %1487 = vmatpush1.bf16.msra.mxu0 0
      %1488 = vmatprep.mubr.bf16.mxu0 %v1445
      %1489 = vmatmul.mubr.bf16.gmra.mrb[0].mxu0 %v1349
      %v1490 = vpop.f32.mrb[0].mxu0
      %v1491 = vadd.f32 0.0, %v1490
      %v1492 = vpop.f32.mrb[0].mxu0
      %v1493 = vadd.f32 0.0, %v1492
      %v1494 = vpop.f32.mrb[0].mxu0
      %v1495 = vadd.f32 0.0, %v1494
      %v1496 = vpop.f32.mrb[0].mxu0
      %v1497 = vadd.f32 0.0, %v1496
      %1498 = vmatprep.mubr.bf16.mxu0 %v1448
      %1499 = vmatmul.mubr.bf16.gmra.mrb[0].mxu0 %v1354
      %v1500 = vpop.f32.mrb[0].mxu0
      %v1501 = vadd.f32 0.0, %v1500
      %v1502 = vpop.f32.mrb[0].mxu0
      %v1503 = vadd.f32 0.0, %v1502
      %v1504 = vpop.f32.mrb[0].mxu0
      %v1505 = vadd.f32 0.0, %v1504
      %v1506 = vpop.f32.mrb[0].mxu0
      %v1507 = vadd.f32 0.0, %v1506
      %1508 = vdwg.mxu0
      %v1509 = vadd.f32 %v1315, %v1491
      %v1510 = vadd.f32 %v1316, %v1493
      %v1511 = vadd.f32 %v1317, %v1495
      %v1512 = vadd.f32 %v1318, %v1497
      %v1513 = vadd.f32 %v1319, %v1501
      %v1514 = vadd.f32 %v1320, %v1503
      %v1515 = vadd.f32 %v1321, %v1505
      %v1516 = vadd.f32 %v1322, %v1507
      %v1517 = vpack.c.bf16 %v1511, %v1509
      %v1518 = vpack.c.bf16 %v1512, %v1510
      %v1519 = vpack.c.bf16 %v1515, %v1513
      %v1520 = vpack.c.bf16 %v1516, %v1514
      %v1525 = vunpack.c.l.b16 %v1517
      %v1526 = vunpack.c.l.b16 %v1518
      %v1527 = vunpack.c.h.b16 %v1517
      %v1528 = vunpack.c.h.b16 %v1518
      %v1529 = vunpack.c.l.b16 %v1519
      %v1530 = vunpack.c.l.b16 %v1520
      %v1531 = vunpack.c.h.b16 %v1519
      %v1532 = vunpack.c.h.b16 %v1520
      %v1533 = vpack.c.b16 %v1526, %v1525
      %v1534 = vpack.c.b16 %v1528, %v1527
      %v1535 = vpack.c.b16 %v1530, %v1529
      %v1536 = vpack.c.b16 %v1532, %v1531
      %1541 = vst [vmem:[%s252] sm:$0xff] %v1533
      %1542 = vst [vmem:[%s252 + $0x8] sm:$0xff] %v1534
      %1543 = vst [vmem:[%s252 + $0x10] sm:$0xff] %v1535
      %1544 = vst [vmem:[%s252 + $0x18] sm:$0xff] %v1536
      %v1545 = vadd.f32 %v1509, %v1511
      %v1546 = vadd.f32 %v1545, %v1513
      %v1547 = vadd.f32 %v1546, %v1515
      %v1548 = vrot.slane %v1547, 4
      %v1549 = vadd.f32 %v1547, %v1548
      %v1550 = vrot.slane %v1549, 2
      %v1551 = vadd.f32 %v1549, %v1550
      %v1552 = vrot.slane %v1551, 1
      %v1553 = vadd.f32 %v1551, %v1552
      %v1554 = vadd.f32 %v1510, %v1512
      %v1555 = vadd.f32 %v1554, %v1514
      %v1556 = vadd.f32 %v1555, %v1516
      %v1557 = vrot.slane %v1556, 4
      %v1558 = vadd.f32 %v1556, %v1557
      %v1559 = vrot.slane %v1558, 2
      %v1560 = vadd.f32 %v1558, %v1559
      %v1561 = vrot.slane %v1560, 1
      %v1562 = vadd.f32 %v1560, %v1561
      %v1563 = vmul.f32 %v1509, %v1509
      %v1564 = vmul.f32 %v1510, %v1510
      %v1565 = vmul.f32 %v1511, %v1511
      %v1566 = vmul.f32 %v1512, %v1512
      %v1567 = vmul.f32 %v1513, %v1513
      %v1568 = vmul.f32 %v1514, %v1514
      %v1569 = vmul.f32 %v1515, %v1515
      %v1570 = vmul.f32 %v1516, %v1516
      %v1571 = vadd.f32 %v1563, %v1565
      %v1572 = vadd.f32 %v1571, %v1567
      %v1573 = vadd.f32 %v1572, %v1569
      %v1574 = vrot.slane %v1573, 4
      %v1575 = vadd.f32 %v1573, %v1574
      %v1576 = vrot.slane %v1575, 2
      %v1577 = vadd.f32 %v1575, %v1576
      %v1578 = vrot.slane %v1577, 1
      %v1579 = vadd.f32 %v1577, %v1578
      %v1580 = vadd.f32 %v1564, %v1566
      %v1581 = vadd.f32 %v1580, %v1568
      %v1582 = vadd.f32 %v1581, %v1570
      %v1583 = vrot.slane %v1582, 4
      %v1584 = vadd.f32 %v1582, %v1583
      %v1585 = vrot.slane %v1584, 2
      %v1586 = vadd.f32 %v1584, %v1585
      %v1587 = vrot.slane %v1586, 1
      %v1588 = vadd.f32 %v1586, %v1587
      %vm1589 = vcmask 1040384
      %v1590 = vsel %vm1589, %v1553, %v1579
      %v1591 = vsel %vm1589, %v1562, %v1588
      %v1594 = vcombine.low %v1590, %v1591
      %v1596 = vunpack.c.l.s4 1983009808
      %v1597 = vunpack.c.0.s8 %v1596
      %v1598 = vlaneseq
      %v1599 = vshrl.u32 %v1598, 7
      %v1600 = vsub.s32 %v1597, %v1599
      %v1601 = vrot.slane %v1594, %v1600
      %1603 = vst [vmem:[%s257] sm:$0xf] %v1601
      %p1604 = scmp.lt.s32.totalorder %s17, 1
      %s1605 = scalar_select %p1604, %s17, 1
      %s1606 = smul.addr %s1605, 8
      %s1607 = smul.addr %s1606, 4
      %s1608 = scalar_lea.vmem %s4, %s1607
      %p1609 = scmp.lt.s32.totalorder %s17, 1
      %s1610 = scalar_select %p1609, %s17, 1
      %s1611 = smul.addr %s1610, 2
      %s1612 = smul.addr %s1611, 2
      %s1613 = scalar_lea.vmem %s5, %s1612
      // Predicated region
      $region37: #{up_forward.2} parent=35 // pred_check
        %p1614 = pneg %p129
      $region38: #{up_forward.2} parent=35 // pred_check_branch
        %1616 = sbr.rel (%p1614) target = $region40
      $region39: #{up_forward.2} parent=35 // pred_region
        _
      $region40: #{up_forward.2} parent=35 // pred_fallthru
        _
      // Predicated region
      $region41: #{up_forward.2} parent=35 // pred_check
        %p1617 = pneg %p155
      $region42: #{up_forward.2} parent=35 // pred_check_branch
        %1619 = sbr.rel (%p1617) target = $region44
      $region43: #{up_forward.2} parent=35 // pred_region
        _
      $region44: #{up_forward.2} parent=35 // pred_fallthru
        _
    $region36: #{up_forward.2} parent=5 // pred_fallthru
      _
    %p1620 = scmp.le.s32.totalorder 2, %s12
    // Predicated region
    $region45: #{up_forward.2} parent=5 // pred_check
      %p1621 = pneg %p1620
    $region46: #{up_forward.2} parent=5 // pred_check_branch
      %1623 = sbr.rel (%p1621) target = $region48
    $region47: #{up_forward.2} parent=5 // pred_region
      %s1624 = ssub.s32 %s12, 2
      // Predicated region
      $region49: #{up_forward.2} parent=47 // pred_check
        %p1625 = pneg %p135
      $region50: #{up_forward.2} parent=47 // pred_check_branch
        %1627 = sbr.rel (%p1625) target = $region52
      $region51: #{up_forward.2} parent=47 // pred_region
        %p1628 = scmp.lt.s32.totalorder %s18, 1
        %s1629 = scalar_select %p1628, %s18, 1
        %s1630 = smul.addr %s1629, 8
        %s1631 = smul.addr %s1630, 4
        %s1632 = scalar_lea.vmem %s4, %s1631
      $region52: #{up_forward.2} parent=47 // pred_fallthru
        _
      // Predicated region
      $region53: #{up_forward.2} parent=47 // pred_check
        %p1633 = pneg %p161
      $region54: #{up_forward.2} parent=47 // pred_check_branch
        %1635 = sbr.rel (%p1633) target = $region56
      $region55: #{up_forward.2} parent=47 // pred_region
        %p1636 = scmp.lt.s32.totalorder %s18, 1
        %s1637 = scalar_select %p1636, %s18, 1
        %s1638 = smul.addr %s1637, 2
        %s1639 = smul.addr %s1638, 2
        %s1640 = scalar_lea.vmem %s5, %s1639
      $region56: #{up_forward.2} parent=47 // pred_fallthru
        _
    $region48: #{up_forward.2} parent=5 // pred_fallthru
      _
  $region6: #{up_forward.2} parent=0 // loop_footer
    %s16 = sadd.s32 1, %s12
  $region7: #{up_forward.2} parent=0 // loop_footer_branch
    %11 = sbr.rel target = $region3
  $region8: #{up_forward.2} parent=0 // loop_exit
    _

// kernel: up_forward.3
$region0: #{up_forward.3}
  #allocation0 [shape = 'u32[]', space=smem, size = 0x4, offset = 0x4, fixed_abs, tag = 'smem constant byte address 0x4 - core index']
  #allocation1 [shape = 'u32[144,128]{1,0:T(1,128)}', space=vmem, size = 0x12000, scoped, tag = 'internal scratch']
  #allocation2 [shape = 'bf16[34,272]{1,0:T(8,128)(2,1)}', space=vmem, size = 0x7800, scoped, tag = 'scratch operand']
  #allocation3 [shape = 'f32[2,256]{1,0:T(2,128)}', space=vmem, size = 0x800, scoped, tag = 'scratch operand']
  %s0 = inlined_call_operand.vmem [shape: bf16[2,32,256], index: 0, kind: input, shape index: {}]
  %s1 = inlined_call_operand.vmem [shape: f32[1,256], index: 1, kind: input, shape index: {}]
  %s2 = inlined_call_operand.vmem [shape: f32[1,256], index: 2, kind: input, shape index: {}]
  %s3 = inlined_call_operand.vmem [shape: bf16[3,272,256], index: 3, kind: input, shape index: {}]
  %s4 = inlined_call_operand.vmem [shape: f32[1,256], index: 4, kind: input, shape index: {}]
  %s5 = inlined_call_operand.vmem [shape: f32[1,256], index: 5, kind: input, shape index: {}]
  %s6 = inlined_call_operand.vmem [shape: f32[2,32,256], index: 6, kind: output, shape index: {}]
  %s7 = sld [smem:[#allocation0]]
  $region65: #{up_forward.3} parent=0
    _
  %s9 = ssub.s32 1, %s7
  %s10 = scalar_select 0, %s9, %s7
  loop: start=0, step=1, limit=4
  $region2: #{up_forward.3} parent=0 // loop_pre_header
    _
  $region3: #{up_forward.3} parent=0 // loop_header
    %s12 = sphi 0, %s16
    %p13 = scmp.ge.s32.totalorder %s12, 4
    %s22 = sphi 0, %s24
    %s25 = sphi 0, %s22
    %s26 = sphi 0, %s25
    %s42 = sphi 0, %s26
    %s46 = sphi 0, %s46
    %s48 = sphi 0, %s46
    %s49 = sphi 0, %s48
    %s63 = sphi 0, %s49
    %s67 = sphi 0, %s67
    %s69 = sphi 0, %s67
    %s70 = sphi 0, %s69
    %s84 = sphi 0, %s70
    %s88 = sphi 0, %s88
    %s90 = sphi 0, %s88
    %s91 = sphi 0, %s90
    %s105 = sphi 0, %s91
    %s109 = sphi 0, %s109
    %s111 = sphi 0, %s109
    %s112 = sphi 0, %s111
    %s126 = sphi 0, %s112
    %s130 = sphi 0, %s130
    %s132 = sphi 0, %s130
    %s133 = sphi 0, %s132
    %s147 = sphi 0, %s133
    %s151 = sphi 0, %s151
    %s153 = sphi 0, %s151
    %s154 = sphi 0, %s153
    %s168 = sphi 0, %s154
  $region4: #{up_forward.3} parent=0 // loop_header_branch
    %15 = sbr.rel (%p13) target = $region8
  $region5: #{up_forward.3} parent=0 // loop_body
    %s17 = ssub.s32 %s12, 1
    %s18 = ssub.s32 %s12, 2
    %s19 = sadd.s32 %s12, 1
    %s20 = ssub.s32 %s12, %s19
    %p21 = scmp.eq.s32.totalorder %s20, 0
    %s23 = sadd.s32 %s22, 1
    %s24 = scalar_select %p21, %s22, %s23
    %p27 = pneg %p21
    %p28 = scmp.eq.s32.totalorder %s12, 1
    %p29 = por %p27, %p28
    %p30 = scmp.ne.s32.totalorder %s22, %s25
    %p31 = scmp.eq.s32.totalorder %s12, 0
    %p32 = por %p30, %p31
    %p33 = scmp.ne.s32.totalorder %s22, %s25
    %p34 = scmp.eq.s32.totalorder %s17, 1
    %p35 = por %p33, %p34
    %p36 = scmp.ne.s32.totalorder %s25, %s26
    %p37 = scmp.eq.s32.totalorder %s17, 0
    %p38 = por %p36, %p37
    %p39 = scmp.ne.s32.totalorder %s25, %s26
    %p40 = scmp.eq.s32.totalorder %s18, 1
    %p41 = por %p39, %p40
    %p43 = scmp.ne.s32.totalorder %s26, %s42
    %p44 = scmp.eq.s32.totalorder %s18, 0
    %p45 = por %p43, %p44
    %s47 = sadd.s32 %s46, 1
    %p50 = scmp.eq.s32.totalorder %s12, 1
    %p51 = scmp.ne.s32.totalorder %s46, %s48
    %p52 = scmp.eq.s32.totalorder %s12, 0
    %p53 = por %p51, %p52
    %p54 = scmp.ne.s32.totalorder %s46, %s48
    %p55 = scmp.eq.s32.totalorder %s17, 1
    %p56 = por %p54, %p55
    %p57 = scmp.ne.s32.totalorder %s48, %s49
    %p58 = scmp.eq.s32.totalorder %s17, 0
    %p59 = por %p57, %p58
    %p60 = scmp.ne.s32.totalorder %s48, %s49
    %p61 = scmp.eq.s32.totalorder %s18, 1
    %p62 = por %p60, %p61
    %p64 = scmp.ne.s32.totalorder %s49, %s63
    %p65 = scmp.eq.s32.totalorder %s18, 0
    %p66 = por %p64, %p65
    %s68 = sadd.s32 %s67, 1
    %p71 = scmp.eq.s32.totalorder %s12, 1
    %p72 = scmp.ne.s32.totalorder %s67, %s69
    %p73 = scmp.eq.s32.totalorder %s12, 0
    %p74 = por %p72, %p73
    %p75 = scmp.ne.s32.totalorder %s67, %s69
    %p76 = scmp.eq.s32.totalorder %s17, 1
    %p77 = por %p75, %p76
    %p78 = scmp.ne.s32.totalorder %s69, %s70
    %p79 = scmp.eq.s32.totalorder %s17, 0
    %p80 = por %p78, %p79
    %p81 = scmp.ne.s32.totalorder %s69, %s70
    %p82 = scmp.eq.s32.totalorder %s18, 1
    %p83 = por %p81, %p82
    %p85 = scmp.ne.s32.totalorder %s70, %s84
    %p86 = scmp.eq.s32.totalorder %s18, 0
    %p87 = por %p85, %p86
    %s89 = sadd.s32 %s88, 1
    %p92 = scmp.eq.s32.totalorder %s12, 1
    %p93 = scmp.ne.s32.totalorder %s88, %s90
    %p94 = scmp.eq.s32.totalorder %s12, 0
    %p95 = por %p93, %p94
    %p96 = scmp.ne.s32.totalorder %s88, %s90
    %p97 = scmp.eq.s32.totalorder %s17, 1
    %p98 = por %p96, %p97
    %p99 = scmp.ne.s32.totalorder %s90, %s91
    %p100 = scmp.eq.s32.totalorder %s17, 0
    %p101 = por %p99, %p100
    %p102 = scmp.ne.s32.totalorder %s90, %s91
    %p103 = scmp.eq.s32.totalorder %s18, 1
    %p104 = por %p102, %p103
    %p106 = scmp.ne.s32.totalorder %s91, %s105
    %p107 = scmp.eq.s32.totalorder %s18, 0
    %p108 = por %p106, %p107
    %s110 = sadd.s32 %s109, 1
    %p113 = scmp.eq.s32.totalorder %s12, 1
    %p114 = scmp.ne.s32.totalorder %s109, %s111
    %p115 = scmp.eq.s32.totalorder %s12, 0
    %p116 = por %p114, %p115
    %p117 = scmp.ne.s32.totalorder %s109, %s111
    %p118 = scmp.eq.s32.totalorder %s17, 1
    %p119 = por %p117, %p118
    %p120 = scmp.ne.s32.totalorder %s111, %s112
    %p121 = scmp.eq.s32.totalorder %s17, 0
    %p122 = por %p120, %p121
    %p123 = scmp.ne.s32.totalorder %s111, %s112
    %p124 = scmp.eq.s32.totalorder %s18, 1
    %p125 = por %p123, %p124
    %p127 = scmp.ne.s32.totalorder %s112, %s126
    %p128 = scmp.eq.s32.totalorder %s18, 0
    %p129 = por %p127, %p128
    %s131 = sadd.s32 %s130, 1
    %p134 = scmp.eq.s32.totalorder %s12, 1
    %p135 = scmp.ne.s32.totalorder %s130, %s132
    %p136 = scmp.eq.s32.totalorder %s12, 0
    %p137 = por %p135, %p136
    %p138 = scmp.ne.s32.totalorder %s130, %s132
    %p139 = scmp.eq.s32.totalorder %s17, 1
    %p140 = por %p138, %p139
    %p141 = scmp.ne.s32.totalorder %s132, %s133
    %p142 = scmp.eq.s32.totalorder %s17, 0
    %p143 = por %p141, %p142
    %p144 = scmp.ne.s32.totalorder %s132, %s133
    %p145 = scmp.eq.s32.totalorder %s18, 1
    %p146 = por %p144, %p145
    %p148 = scmp.ne.s32.totalorder %s133, %s147
    %p149 = scmp.eq.s32.totalorder %s18, 0
    %p150 = por %p148, %p149
    %s152 = sadd.s32 %s151, 1
    %p155 = scmp.eq.s32.totalorder %s12, 1
    %p156 = scmp.ne.s32.totalorder %s151, %s153
    %p157 = scmp.eq.s32.totalorder %s12, 0
    %p158 = por %p156, %p157
    %p159 = scmp.ne.s32.totalorder %s151, %s153
    %p160 = scmp.eq.s32.totalorder %s17, 1
    %p161 = por %p159, %p160
    %p162 = scmp.ne.s32.totalorder %s153, %s154
    %p163 = scmp.eq.s32.totalorder %s17, 0
    %p164 = por %p162, %p163
    %p165 = scmp.ne.s32.totalorder %s153, %s154
    %p166 = scmp.eq.s32.totalorder %s18, 1
    %p167 = por %p165, %p166
    %p169 = scmp.ne.s32.totalorder %s154, %s168
    %p170 = scmp.eq.s32.totalorder %s18, 0
    %p171 = por %p169, %p170
    %p172 = scmp.le.s32.totalorder 1, %s12
    %p173 = scmp.lt.s32.totalorder %s12, 3
    %p174 = pnand %p172, %p173
    %p175 = pneg %p174
    // Predicated region
    $region9: #{up_forward.3} parent=5 // pred_check
      _
    $region10: #{up_forward.3} parent=5 // pred_check_branch
      %177 = sbr.rel (%p174) target = $region12
    $region11: #{up_forward.3} parent=5 // pred_region
      %s178 = ssub.s32 %s12, 1
      // Predicated region
      $region13: #{up_forward.3} parent=11 // pred_check
        %p179 = pneg %p59
      $region14: #{up_forward.3} parent=11 // pred_check_branch
        %181 = sbr.rel (%p179) target = $region16
      $region15: #{up_forward.3} parent=11 // pred_region
        _
      $region16: #{up_forward.3} parent=11 // pred_fallthru
        _
      // Predicated region
      $region17: #{up_forward.3} parent=11 // pred_check
        %p182 = pneg %p80
      $region18: #{up_forward.3} parent=11 // pred_check_branch
        %184 = sbr.rel (%p182) target = $region20
      $region19: #{up_forward.3} parent=11 // pred_region
        _
      $region20: #{up_forward.3} parent=11 // pred_fallthru
        _
      // Predicated region
      $region21: #{up_forward.3} parent=11 // pred_check
        %p185 = pneg %p101
      $region22: #{up_forward.3} parent=11 // pred_check_branch
        %187 = sbr.rel (%p185) target = $region24
      $region23: #{up_forward.3} parent=11 // pred_region
        _
      $region24: #{up_forward.3} parent=11 // pred_fallthru
        _
      // Predicated region
      $region25: #{up_forward.3} parent=11 // pred_check
        %p188 = pneg %p122
      $region26: #{up_forward.3} parent=11 // pred_check_branch
        %190 = sbr.rel (%p188) target = $region28
      $region27: #{up_forward.3} parent=11 // pred_region
        _
      $region28: #{up_forward.3} parent=11 // pred_fallthru
        _
      // Predicated region
      $region29: #{up_forward.3} parent=11 // pred_check
        %p191 = pneg %p143
      $region30: #{up_forward.3} parent=11 // pred_check_branch
        %193 = sbr.rel (%p191) target = $region32
      $region31: #{up_forward.3} parent=11 // pred_region
        _
      $region32: #{up_forward.3} parent=11 // pred_fallthru
        _
    $region12: #{up_forward.3} parent=5 // pred_fallthru
      _
    %p194 = scmp.lt.s32.totalorder %s12, 2
    // Predicated region
    $region33: #{up_forward.3} parent=5 // pred_check
      %p195 = pneg %p194
    $region34: #{up_forward.3} parent=5 // pred_check_branch
      %197 = sbr.rel (%p195) target = $region36
    $region35: #{up_forward.3} parent=5 // pred_region
      // Predicated region
      $region37: #{up_forward.3} parent=35 // pred_check
        %p198 = pneg %p32
      $region38: #{up_forward.3} parent=35 // pred_check_branch
        %200 = sbr.rel (%p198) target = $region40
      $region39: #{up_forward.3} parent=35 // pred_region
        %p201 = scmp.lt.s32.totalorder %s12, 1
        %s202 = scalar_select %p201, %s12, 1
        %s203 = smul.addr %s202, 8
        %s204 = smul.addr %s203, 4
        %s205 = scalar_lea.vmem %s0, %s204
      $region40: #{up_forward.3} parent=35 // pred_fallthru
        _
    $region36: #{up_forward.3} parent=5 // pred_fallthru
      _
    %p206 = scmp.le.s32.totalorder 1, %s12
    %p207 = scmp.lt.s32.totalorder %s12, 3
    %p208 = pnand %p206, %p207
    %p209 = pneg %p208
    // Predicated region
    $region41: #{up_forward.3} parent=5 // pred_check
      _
    $region42: #{up_forward.3} parent=5 // pred_check_branch
      %211 = sbr.rel (%p208) target = $region44
    $region43: #{up_forward.3} parent=5 // pred_region
      %s212 = ssub.s32 %s12, 1
      %p213 = scmp.lt.s32.totalorder %s17, 1
      %s214 = scalar_select %p213, %s17, 1
      %s215 = smul.addr %s214, 8
      %s216 = smul.addr %s215, 4
      %s217 = scalar_lea.vmem %s0, %s216
      %p218 = pneg %p38
      %p219 = pneg %p35
      %p220 = pneg %p59
      %p221 = pneg %p56
      %p222 = pneg %p80
      %p223 = pneg %p77
      %p224 = pneg %p101
      %p225 = pneg %p98
      %p226 = pneg %p122
      %p227 = pneg %p119
      %p228 = pneg %p143
      %p229 = pneg %p140
      %p230 = pneg %p164
      %p231 = pneg %p161
      %p232 = scmp.lt.s32.totalorder %s17, 1
      %s233 = scalar_select %p232, %s17, 1
      %s234 = smul.addr %s233, 8
      %s235 = smul.addr %s234, 4
      %s236 = scalar_lea.vmem %s0, %s235
      %p238 = scmp.eq.s32.totalorder %s17, 0
      // Predicated region
      $region45: #{up_forward.3} parent=43 // pred_check
        %p239 = pneg %p238
      $region46: #{up_forward.3} parent=43 // pred_check_branch
        %241 = sbr.rel (%p239) target = $region48
      $region47: #{up_forward.3} parent=43 // pred_region
        %242 = vst [vmem:[#allocation2] sm:$0xff] 0
        %vm243 = vcmask 125952
        %244 = vst.msk [vmem:[#allocation2 + $0x8] sm:$0xf] %vm243, 0
        %245 = vst [vmem:[#allocation2 + $0xc] sm:$0xff] 0
        %246 = vst.msk [vmem:[#allocation2 + $0x14] sm:$0xf] %vm243, 0
        %247 = vst [vmem:[#allocation2 + $0x18] sm:$0xff] 0
        %248 = vst.msk [vmem:[#allocation2 + $0x20] sm:$0xf] %vm243, 0
        %249 = vst [vmem:[#allocation2 + $0x24] sm:$0xff] 0
        %250 = vst.msk [vmem:[#allocation2 + $0x2c] sm:$0xf] %vm243, 0
        %251 = vst [vmem:[#allocation2 + $0x30] sm:$0x11] 0
        %vm252 = vcmask 122880
        %253 = vst.msk [vmem:[#allocation2 + $0x38] sm:$0x1] %vm252, 0
        %254 = vst [vmem:[#allocation3] sm:$0xf] 0.0
      $region48: #{up_forward.3} parent=43 // pred_fallthru
        _
      %v255 = vld [vmem:[%s236] sm:$0xff]
      %v256 = vld [vmem:[%s236 + $0x8] sm:$0xff]
      %v257 = vld [vmem:[%s236 + $0x10] sm:$0xff]
      %v258 = vld [vmem:[%s236 + $0x18] sm:$0xff]
      %v259 = vunpack.c.l.bf16 %v255
      %v260 = vunpack.c.h.bf16 %v255
      %v261 = vunpack.c.l.bf16 %v256
      %v262 = vunpack.c.h.bf16 %v256
      %v263 = vunpack.c.l.bf16 %v257
      %v264 = vunpack.c.h.bf16 %v257
      %v265 = vunpack.c.l.bf16 %v258
      %v266 = vunpack.c.h.bf16 %v258
      %v267 = vld [vmem:[%s1] sm:$0x3]
      %v269 = vlaneseq
      %v270 = vshrl.u32 %v269, 7
      %v271 = vsub.s32 0, %v270
      %v272 = vrot.slane %v267, %v271
      %v273 = vlaneseq
      %v274 = vshrl.u32 %v273, 7
      %v275 = vsub.s32 1, %v274
      %v276 = vrot.slane %v267, %v275
      %v279 = vmul.f32 %v259, %v272
      %v280 = vmul.f32 %v260, %v276
      %v281 = vmul.f32 %v261, %v272
      %v282 = vmul.f32 %v262, %v276
      %v283 = vmul.f32 %v263, %v272
      %v284 = vmul.f32 %v264, %v276
      %v285 = vmul.f32 %v265, %v272
      %v286 = vmul.f32 %v266, %v276
      %v287 = vld [vmem:[%s2] sm:$0x3]
      %v289 = vlaneseq
      %v290 = vshrl.u32 %v289, 7
      %v291 = vsub.s32 0, %v290
      %v292 = vrot.slane %v287, %v291
      %v293 = vlaneseq
      %v294 = vshrl.u32 %v293, 7
      %v295 = vsub.s32 1, %v294
      %v296 = vrot.slane %v287, %v295
      %v299 = vadd.f32 %v279, %v292
      %v300 = vadd.f32 %v280, %v296
      %v301 = vadd.f32 %v281, %v292
      %v302 = vadd.f32 %v282, %v296
      %v303 = vadd.f32 %v283, %v292
      %v304 = vadd.f32 %v284, %v296
      %v305 = vadd.f32 %v285, %v292
      %v306 = vadd.f32 %v286, %v296
      %v307 = vmax.f32 %v299, 0.0
      %v308 = vmax.f32 %v300, 0.0
      %v309 = vmax.f32 %v301, 0.0
      %v310 = vmax.f32 %v302, 0.0
      %v311 = vmax.f32 %v303, 0.0
      %v312 = vmax.f32 %v304, 0.0
      %v313 = vmax.f32 %v305, 0.0
      %v314 = vmax.f32 %v306, 0.0
      %v315 = vpack.c.bf16 %v309, %v307
      %v316 = vpack.c.bf16 %v310, %v308
      %v317 = vpack.c.bf16 %v313, %v311
      %v318 = vpack.c.bf16 %v314, %v312
      %v323 = vunpack.c.l.b16 %v315
      %v324 = vunpack.c.l.b16 %v316
      %v325 = vunpack.c.h.b16 %v315
      %v326 = vunpack.c.h.b16 %v316
      %v327 = vunpack.c.l.b16 %v317
      %v328 = vunpack.c.l.b16 %v318
      %v329 = vunpack.c.h.b16 %v317
      %v330 = vunpack.c.h.b16 %v318
      %v331 = vpack.c.b16 %v324, %v323
      %v332 = vpack.c.b16 %v326, %v325
      %v333 = vpack.c.b16 %v328, %v327
      %v334 = vpack.c.b16 %v330, %v329
      %vm335 = vsmask.f32 256
      %vm336 = vsmask.f32 4368
      %vm337 = vmor %vm335, %vm336
      %v339 = vshrl.u32 %v331, 16
      %v341 = vrot.slane %v339, 7
      %v342 = vshll.u32 %v331, 16
      %v344 = vor.u32 %v341, %v342
      %v345 = vrot.slane %v341, 4
      %v347 = vshrl.u32 %v332, 16
      %v349 = vrot.slane %v347, 7
      %v350 = vshll.u32 %v332, 16
      %v352 = vor.u32 %v349, %v350
      %v353 = vsel %vm337, %v345, %v352
      %v354 = vrot.slane %v349, 4
      %v356 = vshrl.u32 %v333, 16
      %v358 = vrot.slane %v356, 7
      %v359 = vshll.u32 %v333, 16
      %v361 = vor.u32 %v358, %v359
      %v362 = vsel %vm337, %v354, %v361
      %v363 = vrot.slane %v358, 4
      %v365 = vshrl.u32 %v334, 16
      %v367 = vrot.slane %v365, 7
      %v368 = vshll.u32 %v334, 16
      %v370 = vor.u32 %v367, %v368
      %v371 = vsel %vm337, %v363, %v370
      %v372 = vrot.slane %v367, 4
      %373 = vrot.lane.b32.xlu0 %v344, 8
      %v374 = vpop.permute.xlu0 %373
      %375 = vrot.lane.b32.xlu0 %v353, 8
      %v376 = vpop.permute.xlu0 %375
      %377 = vrot.lane.b32.xlu0 %v362, 8
      %v378 = vpop.permute.xlu0 %377
      %379 = vrot.lane.b32.xlu0 %v371, 8
      %v380 = vpop.permute.xlu0 %379
      %381 = vrot.lane.b32.xlu0 %v372, 8
      %v382 = vpop.permute.xlu0 %381
      %v383 = vrot.slane %v374, 4
      %v384 = vrot.slane %v376, 4
      %v385 = vrot.slane %v378, 4
      %v386 = vrot.slane %v380, 4
      %v387 = vrot.slane %v382, 4
      %vm388 = vcmask 64512
      %v389 = vsel %vm388, %v383, %v374
      %v390 = vsel %vm388, %v384, %v376
      %v391 = vsel %vm388, %v385, %v378
      %v392 = vsel %vm388, %v386, %v380
      %v393 = vsel %vm388, %v387, %v382
      %vm404 = vcmask 1043520
      %vm405 = vsmask.f32 7938
      %vm406 = vmand %vm404, %vm405
      %vm407 = vcmask 1047556
      %vm408 = vsmask.f32 7954
      %vm409 = vmand %vm407, %vm408
      %vm410 = vmor %vm409, %vm406
      %v411 = vld [vmem:[#allocation2] sm:$0xff]
      %v412 = vsel %vm410, %v389, %v411
      %413 = vst [vmem:[#allocation2] sm:$0xff] %v412
      %vm414 = vcmask 60416
      %vm415 = vmand %vm414, %vm405
      %v416 = vld [vmem:[#allocation2 + $0x8] sm:$0xf]
      %v417 = vsel %vm415, %v383, %v416
      %418 = vst [vmem:[#allocation2 + $0x8] sm:$0xf] %v417
      %vm419 = vcmask 1043520
      %vm420 = vcmask 1047556
      %vm421 = vmor %vm420, %vm419
      %422 = vst.msk [vmem:[#allocation2 + $0xc] sm:$0xff] %vm421, %v390
      %vm423 = vcmask 60416
      %424 = vst.msk [vmem:[#allocation2 + $0x14] sm:$0xf] %vm423, %v384
      %425 = vst.msk [vmem:[#allocation2 + $0x18] sm:$0xff] %vm421, %v391
      %426 = vst.msk [vmem:[#allocation2 + $0x20] sm:$0xf] %vm423, %v385
      %427 = vst.msk [vmem:[#allocation2 + $0x24] sm:$0xff] %vm421, %v392
      %428 = vst.msk [vmem:[#allocation2 + $0x2c] sm:$0xf] %vm423, %v386
      %vm429 = vcmask 1040448
      %vm430 = vmand %vm429, %vm335
      %vm431 = vcmask 1044484
      %vm432 = vsmask.f32 4352
      %vm433 = vmand %vm431, %vm432
      %vm434 = vmor %vm433, %vm430
      %v435 = vld [vmem:[#allocation2 + $0x30] sm:$0x11]
      %v436 = vsel %vm434, %v393, %v435
      %437 = vst [vmem:[#allocation2 + $0x30] sm:$0x11] %v436
      %vm438 = vcmask 57344
      %vm439 = vmand %vm438, %vm335
      %v440 = vld [vmem:[#allocation2 + $0x38] sm:$0x1]
      %v441 = vsel %vm439, %v387, %v440
      %442 = vst [vmem:[#allocation2 + $0x38] sm:$0x1] %v441
      %v443 = vld [vmem:[#allocation2] sm:$0xff]
      %v444 = vld [vmem:[#allocation2 + $0x8] sm:$0xf]
      %v445 = vld [vmem:[#allocation2 + $0xc] sm:$0xff]
      %v446 = vld [vmem:[#allocation2 + $0x14] sm:$0xf]
      %v447 = vld [vmem:[#allocation2 + $0x18] sm:$0xff]
      %v448 = vld [vmem:[#allocation2 + $0x20] sm:$0xf]
      %v449 = vld [vmem:[#allocation2 + $0x24] sm:$0xff]
      %v450 = vld [vmem:[#allocation2 + $0x2c] sm:$0xf]
      %v451 = vld [vmem:[%s3] sm:$0xff]
      %v452 = vld [vmem:[%s3 + $0x8] sm:$0xff]
      %v453 = vld [vmem:[%s3 + $0x10] sm:$0xff]
      %v454 = vld [vmem:[%s3 + $0x18] sm:$0xff]
      %v455 = vld [vmem:[%s3 + $0x20] sm:$0xff]
      %v456 = vld [vmem:[%s3 + $0x28] sm:$0xff]
      %v457 = vld [vmem:[%s3 + $0x30] sm:$0xff]
      %v458 = vld [vmem:[%s3 + $0x38] sm:$0xff]
      %v459 = vld [vmem:[%s3 + $0x40] sm:$0xff]
      %v460 = vld [vmem:[%s3 + $0x48] sm:$0xff]
      %v461 = vld [vmem:[%s3 + $0x50] sm:$0xff]
      %v462 = vld [vmem:[%s3 + $0x58] sm:$0xff]
      %v463 = vld [vmem:[%s3 + $0x60] sm:$0xff]
      %v464 = vld [vmem:[%s3 + $0x68] sm:$0xff]
      %v465 = vld [vmem:[%s3 + $0x70] sm:$0xff]
      %v466 = vld [vmem:[%s3 + $0x78] sm:$0xff]
      %v467 = vld [vmem:[%s3 + $0x80] sm:$0xff]
      %v468 = vld [vmem:[%s3 + $0x88] sm:$0xff]
      %v469 = vld [vmem:[%s3 + $0x90] sm:$0xff]
      %v470 = vld [vmem:[%s3 + $0x98] sm:$0xff]
      %v471 = vld [vmem:[%s3 + $0xa0] sm:$0xff]
      %v472 = vld [vmem:[%s3 + $0xa8] sm:$0xff]
      %v473 = vld [vmem:[%s3 + $0xb0] sm:$0xff]
      %v474 = vld [vmem:[%s3 + $0xb8] sm:$0xff]
      %v475 = vld [vmem:[%s3 + $0xc0] sm:$0xff]
      %v476 = vld [vmem:[%s3 + $0xc8] sm:$0xff]
      %v477 = vld [vmem:[%s3 + $0xd0] sm:$0xff]
      %v478 = vld [vmem:[%s3 + $0xd8] sm:$0xff]
      %v479 = vld [vmem:[%s3 + $0xe0] sm:$0xff]
      %v480 = vld [vmem:[%s3 + $0xe8] sm:$0xff]
      %v481 = vld [vmem:[%s3 + $0xf0] sm:$0xff]
      %v482 = vld [vmem:[%s3 + $0xf8] sm:$0xff]
      %v483 = vld [vmem:[%s3 + $0x100] sm:$0xff]
      %v484 = vld [vmem:[%s3 + $0x108] sm:$0xff]
      %v485 = vld [vmem:[#allocation2 + $0x30] sm:$0x11]
      %v486 = vld [vmem:[#allocation2 + $0x38] sm:$0x1]
      %s487 = scalar_lea.vmem %s3, 272
      %v488 = vld [vmem:[%s487] sm:$0xff]
      %v489 = vld [vmem:[%s487 + $0x8] sm:$0xff]
      %v490 = vld [vmem:[%s487 + $0x10] sm:$0xff]
      %v491 = vld [vmem:[%s487 + $0x18] sm:$0xff]
      %v492 = vld [vmem:[%s487 + $0x20] sm:$0xff]
      %v493 = vld [vmem:[%s487 + $0x28] sm:$0xff]
      %v494 = vld [vmem:[%s487 + $0x30] sm:$0xff]
      %v495 = vld [vmem:[%s487 + $0x38] sm:$0xff]
      %v496 = vld [vmem:[%s487 + $0x40] sm:$0xff]
      %v497 = vld [vmem:[%s487 + $0x48] sm:$0xff]
      %v498 = vld [vmem:[%s487 + $0x50] sm:$0xff]
      %v499 = vld [vmem:[%s487 + $0x58] sm:$0xff]
      %v500 = vld [vmem:[%s487 + $0x60] sm:$0xff]
      %v501 = vld [vmem:[%s487 + $0x68] sm:$0xff]
      %v502 = vld [vmem:[%s487 + $0x70] sm:$0xff]
      %v503 = vld [vmem:[%s487 + $0x78] sm:$0xff]
      %v504 = vld [vmem:[%s487 + $0x80] sm:$0xff]
      %v505 = vld [vmem:[%s487 + $0x88] sm:$0xff]
      %v506 = vld [vmem:[%s487 + $0x90] sm:$0xff]
      %v507 = vld [vmem:[%s487 + $0x98] sm:$0xff]
      %v508 = vld [vmem:[%s487 + $0xa0] sm:$0xff]
      %v509 = vld [vmem:[%s487 + $0xa8] sm:$0xff]
      %v510 = vld [vmem:[%s487 + $0xb0] sm:$0xff]
      %v511 = vld [vmem:[%s487 + $0xb8] sm:$0xff]
      %v512 = vld [vmem:[%s487 + $0xc0] sm:$0xff]
      %v513 = vld [vmem:[%s487 + $0xc8] sm:$0xff]
      %v514 = vld [vmem:[%s487 + $0xd0] sm:$0xff]
      %v515 = vld [vmem:[%s487 + $0xd8] sm:$0xff]
      %v516 = vld [vmem:[%s487 + $0xe0] sm:$0xff]
      %v517 = vld [vmem:[%s487 + $0xe8] sm:$0xff]
      %v518 = vld [vmem:[%s487 + $0xf0] sm:$0xff]
      %v519 = vld [vmem:[%s487 + $0xf8] sm:$0xff]
      %v520 = vld [vmem:[%s487 + $0x100] sm:$0xff]
      %v521 = vld [vmem:[%s487 + $0x108] sm:$0xff]
      %v532 = vunpack.c.l.b16 %v443
      %v533 = vunpack.c.h.b16 %v443
      %v534 = vunpack.c.l.b16 %v444
      %v535 = vunpack.c.l.b16 %v445
      %v536 = vunpack.c.h.b16 %v445
      %v537 = vunpack.c.l.b16 %v446
      %v538 = vunpack.c.l.b16 %v447
      %v539 = vunpack.c.h.b16 %v447
      %v540 = vunpack.c.l.b16 %v448
      %v541 = vunpack.c.l.b16 %v449
      %v542 = vunpack.c.h.b16 %v449
      %v543 = vunpack.c.l.b16 %v450
      %v544 = vunpack.c.l.b16 %v485
      %v545 = vunpack.c.h.b16 %v485
      %v546 = vunpack.c.l.b16 %v486
      %v547 = vpack.c.b16 %v535, %v532
      %v548 = vpack.c.b16 %v536, %v533
      %v549 = vpack.c.b16 %v537, %v534
      %v550 = vpack.c.b16 %v541, %v538
      %v551 = vpack.c.b16 %v542, %v539
      %v552 = vpack.c.b16 %v543, %v540
      %v553 = vpack.c.b16 %v544, %v544
      %v554 = vpack.c.b16 %v545, %v545
      %v555 = vpack.c.b16 %v546, %v546
      %vm556 = vsmask.f32 7424
      %v558 = vshrl.u32 %v547, 16
      %v560 = vshll.u32 %v547, 16
      %v562 = vrot.slane %v560, 1
      %v563 = vor.u32 %v558, %v562
      %v565 = vshll.u32 %v550, 16
      %v567 = vrot.slane %v565, 1
      %v568 = vsel %vm556, %v563, %v567
      %v570 = vshrl.u32 %v548, 16
      %v572 = vshll.u32 %v548, 16
      %v574 = vrot.slane %v572, 1
      %v575 = vor.u32 %v570, %v574
      %v577 = vshll.u32 %v551, 16
      %v579 = vrot.slane %v577, 1
      %v580 = vsel %vm556, %v575, %v579
      %v582 = vshrl.u32 %v549, 16
      %v584 = vshll.u32 %v549, 16
      %v586 = vrot.slane %v584, 1
      %v587 = vor.u32 %v582, %v586
      %v589 = vshll.u32 %v552, 16
      %v591 = vrot.slane %v589, 1
      %v592 = vsel %vm556, %v587, %v591
      %v593 = vshrl.u32 %v550, 16
      %v595 = vor.u32 %v593, %v567
      %v597 = vshll.u32 %v553, 16
      %v599 = vrot.slane %v597, 1
      %v600 = vsel %vm556, %v595, %v599
      %v601 = vshrl.u32 %v551, 16
      %v603 = vor.u32 %v601, %v579
      %v605 = vshll.u32 %v554, 16
      %v607 = vrot.slane %v605, 1
      %v608 = vsel %vm556, %v603, %v607
      %v609 = vshrl.u32 %v552, 16
      %v611 = vor.u32 %v609, %v591
      %v613 = vshll.u32 %v555, 16
      %v615 = vrot.slane %v613, 1
      %v616 = vsel %vm556, %v611, %v615
      %v655 = vunpack.c.l.b16 %v488
      %v656 = vunpack.c.h.b16 %v488
      %v657 = vunpack.c.l.b16 %v489
      %v658 = vunpack.c.h.b16 %v489
      %v659 = vunpack.c.l.b16 %v490
      %v660 = vunpack.c.h.b16 %v490
      %v661 = vunpack.c.l.b16 %v491
      %v662 = vunpack.c.h.b16 %v491
      %v663 = vunpack.c.l.b16 %v492
      %v664 = vunpack.c.h.b16 %v492
      %v665 = vunpack.c.l.b16 %v493
      %v666 = vunpack.c.h.b16 %v493
      %v667 = vunpack.c.l.b16 %v494
      %v668 = vunpack.c.h.b16 %v494
      %v669 = vunpack.c.l.b16 %v495
      %v670 = vunpack.c.h.b16 %v495
      %v671 = vunpack.c.l.b16 %v496
      %v672 = vunpack.c.h.b16 %v496
      %v673 = vunpack.c.l.b16 %v497
      %v674 = vunpack.c.h.b16 %v497
      %v675 = vunpack.c.l.b16 %v498
      %v676 = vunpack.c.h.b16 %v498
      %v677 = vunpack.c.l.b16 %v499
      %v678 = vunpack.c.h.b16 %v499
      %v679 = vunpack.c.l.b16 %v500
      %v680 = vunpack.c.h.b16 %v500
      %v681 = vunpack.c.l.b16 %v501
      %v682 = vunpack.c.h.b16 %v501
      %v683 = vunpack.c.l.b16 %v502
      %v684 = vunpack.c.h.b16 %v502
      %v685 = vunpack.c.l.b16 %v503
      %v686 = vunpack.c.h.b16 %v503
      %v687 = vunpack.c.l.b16 %v504
      %v688 = vunpack.c.h.b16 %v504
      %v689 = vunpack.c.l.b16 %v505
      %v690 = vunpack.c.h.b16 %v505
      %v691 = vunpack.c.l.b16 %v506
      %v692 = vunpack.c.h.b16 %v506
      %v693 = vunpack.c.l.b16 %v507
      %v694 = vunpack.c.h.b16 %v507
      %v695 = vunpack.c.l.b16 %v508
      %v696 = vunpack.c.h.b16 %v508
      %v697 = vunpack.c.l.b16 %v509
      %v698 = vunpack.c.h.b16 %v509
      %v699 = vunpack.c.l.b16 %v510
      %v700 = vunpack.c.h.b16 %v510
      %v701 = vunpack.c.l.b16 %v511
      %v702 = vunpack.c.h.b16 %v511
      %v703 = vunpack.c.l.b16 %v512
      %v704 = vunpack.c.h.b16 %v512
      %v705 = vunpack.c.l.b16 %v513
      %v706 = vunpack.c.h.b16 %v513
      %v707 = vunpack.c.l.b16 %v514
      %v708 = vunpack.c.h.b16 %v514
      %v709 = vunpack.c.l.b16 %v515
      %v710 = vunpack.c.h.b16 %v515
      %v711 = vunpack.c.l.b16 %v516
      %v712 = vunpack.c.h.b16 %v516
      %v713 = vunpack.c.l.b16 %v517
      %v714 = vunpack.c.h.b16 %v517
      %v715 = vunpack.c.l.b16 %v518
      %v716 = vunpack.c.h.b16 %v518
      %v717 = vunpack.c.l.b16 %v519
      %v718 = vunpack.c.h.b16 %v519
      %v719 = vunpack.c.l.b16 %v520
      %v720 = vunpack.c.h.b16 %v520
      %v721 = vunpack.c.l.b16 %v521
      %v722 = vunpack.c.h.b16 %v521
      %v723 = vpack.c.b16 %v657, %v655
      %v724 = vpack.c.b16 %v658, %v656
      %v725 = vpack.c.b16 %v661, %v659
      %v726 = vpack.c.b16 %v662, %v660
      %v727 = vpack.c.b16 %v665, %v663
      %v728 = vpack.c.b16 %v666, %v664
      %v729 = vpack.c.b16 %v669, %v667
      %v730 = vpack.c.b16 %v670, %v668
      %v731 = vpack.c.b16 %v673, %v671
      %v732 = vpack.c.b16 %v674, %v672
      %v733 = vpack.c.b16 %v677, %v675
      %v734 = vpack.c.b16 %v678, %v676
      %v735 = vpack.c.b16 %v681, %v679
      %v736 = vpack.c.b16 %v682, %v680
      %v737 = vpack.c.b16 %v685, %v683
      %v738 = vpack.c.b16 %v686, %v684
      %v739 = vpack.c.b16 %v689, %v687
      %v740 = vpack.c.b16 %v690, %v688
      %v741 = vpack.c.b16 %v693, %v691
      %v742 = vpack.c.b16 %v694, %v692
      %v743 = vpack.c.b16 %v697, %v695
      %v744 = vpack.c.b16 %v698, %v696
      %v745 = vpack.c.b16 %v701, %v699
      %v746 = vpack.c.b16 %v702, %v700
      %v747 = vpack.c.b16 %v705, %v703
      %v748 = vpack.c.b16 %v706, %v704
      %v749 = vpack.c.b16 %v709, %v707
      %v750 = vpack.c.b16 %v710, %v708
      %v751 = vpack.c.b16 %v713, %v711
      %v752 = vpack.c.b16 %v714, %v712
      %v753 = vpack.c.b16 %v717, %v715
      %v754 = vpack.c.b16 %v718, %v716
      %v755 = vpack.c.b16 %v721, %v719
      %v756 = vpack.c.b16 %v722, %v720
      %vm791 = vcmask 130048
      %v793 = vsel %vm791, %v592, 0
      %v796 = vsel %vm791, %v616, 0
      %798 = vmatprep.subr.bf16.mxu0 %v724
      %799 = vmatpush1.bf16.msra.mxu0 %v723
      %800 = vmatprep.subr.bf16.mxu0 %v726
      %801 = vmatpush1.bf16.msra.mxu0 %v725
      %802 = vmatprep.subr.bf16.mxu0 %v728
      %803 = vmatpush1.bf16.msra.mxu0 %v727
      %804 = vmatprep.subr.bf16.mxu0 %v730
      %805 = vmatpush1.bf16.msra.mxu0 %v729
      %806 = vmatprep.subr.bf16.mxu0 %v732
      %807 = vmatpush1.bf16.msra.mxu0 %v731
      %808 = vmatprep.subr.bf16.mxu0 %v734
      %809 = vmatpush1.bf16.msra.mxu0 %v733
      %810 = vmatprep.subr.bf16.mxu0 %v736
      %811 = vmatpush1.bf16.msra.mxu0 %v735
      %812 = vmatprep.subr.bf16.mxu0 %v738
      %813 = vmatpush1.bf16.msra.mxu0 %v737
      %814 = vmatprep.subr.bf16.mxu0 %v740
      %815 = vmatpush1.bf16.msra.mxu0 %v739
      %816 = vmatprep.subr.bf16.mxu0 %v742
      %817 = vmatpush1.bf16.msra.mxu0 %v741
      %818 = vmatprep.subr.bf16.mxu0 %v744
      %819 = vmatpush1.bf16.msra.mxu0 %v743
      %820 = vmatprep.subr.bf16.mxu0 %v746
      %821 = vmatpush1.bf16.msra.mxu0 %v745
      %822 = vmatprep.subr.bf16.mxu0 %v748
      %823 = vmatpush1.bf16.msra.mxu0 %v747
      %824 = vmatprep.subr.bf16.mxu0 %v750
      %825 = vmatpush1.bf16.msra.mxu0 %v749
      %826 = vmatprep.subr.bf16.mxu0 %v752
      %827 = vmatpush1.bf16.msra.mxu0 %v751
      %828 = vmatprep.subr.bf16.mxu0 %v754
      %829 = vmatpush1.bf16.msra.mxu0 %v753
      %830 = vmatprep.mubr.bf16.mxu0 %v580
      %831 = vmatmul.mubr.bf16.gmra.mrb[0].mxu0 %v568
      %v832 = vpop.f32.mrb[0].mxu0
      %v833 = vadd.f32 0.0, %v832
      %v834 = vpop.f32.mrb[0].mxu0
      %v835 = vadd.f32 0.0, %v834
      %v836 = vpop.f32.mrb[0].mxu0
      %v837 = vadd.f32 0.0, %v836
      %v838 = vpop.f32.mrb[0].mxu0
      %v839 = vadd.f32 0.0, %v838
      %840 = vmatprep.mubr.bf16.mxu0 %v608
      %841 = vmatmul.mubr.bf16.gmra.mrb[0].mxu0 %v600
      %v842 = vpop.f32.mrb[0].mxu0
      %v843 = vadd.f32 0.0, %v842
      %v844 = vpop.f32.mrb[0].mxu0
      %v845 = vadd.f32 0.0, %v844
      %v846 = vpop.f32.mrb[0].mxu0
      %v847 = vadd.f32 0.0, %v846
      %v848 = vpop.f32.mrb[0].mxu0
      %v849 = vadd.f32 0.0, %v848
      %850 = vdwg.mxu0
      %851 = vmatprep.subr.bf16.mxu0 %v756
      %852 = vmatpush1.bf16.msra.mxu0 %v755
      %853 = vmatprep.subr.bf16.mxu0 0
      %854 = vmatpush1.bf16.msra.mxu0 0
      %855 = vmatprep.subr.bf16.mxu0 0
      %856 = vmatpush1.bf16.msra.mxu0 0
      %857 = vmatprep.subr.bf16.mxu0 0
      %858 = vmatpush1.bf16.msra.mxu0 0
      %859 = vmatprep.subr.bf16.mxu0 0
      %860 = vmatpush1.bf16.msra.mxu0 0
      %861 = vmatprep.subr.bf16.mxu0 0
      %862 = vmatpush1.bf16.msra.mxu0 0
      %863 = vmatprep.subr.bf16.mxu0 0
      %864 = vmatpush1.bf16.msra.mxu0 0
      %865 = vmatprep.subr.bf16.mxu0 0
      %866 = vmatpush1.bf16.msra.mxu0 0
      %867 = vmatprep.subr.bf16.mxu0 0
      %868 = vmatpush1.bf16.msra.mxu0 0
      %869 = vmatprep.subr.bf16.mxu0 0
      %870 = vmatpush1.bf16.msra.mxu0 0
      %871 = vmatprep.subr.bf16.mxu0 0
      %872 = vmatpush1.bf16.msra.mxu0 0
      %873 = vmatprep.subr.bf16.mxu0 0
      %874 = vmatpush1.bf16.msra.mxu0 0
      %875 = vmatprep.subr.bf16.mxu0 0
      %876 = vmatpush1.bf16.msra.mxu0 0
      %877 = vmatprep.subr.bf16.mxu0 0
      %878 = vmatpush1.bf16.msra.mxu0 0
      %879 = vmatprep.subr.bf16.mxu0 0
      %880 = vmatpush1.bf16.msra.mxu0 0
      %881 = vmatprep.subr.bf16.mxu0 0
      %882 = vmatpush1.bf16.msra.mxu0 0
      %883 = vmatprep.mubr.bf16.mxu0 0
      %884 = vmatmul.mubr.bf16.gmra.mrb[0].mxu0 %v793
      %v885 = vpop.f32.mrb[0].mxu0
      %v886 = vadd.f32 %v833, %v885
      %v887 = vpop.f32.mrb[0].mxu0
      %v888 = vadd.f32 %v835, %v887
      %v889 = vpop.f32.mrb[0].mxu0
      %v890 = vadd.f32 %v837, %v889
      %v891 = vpop.f32.mrb[0].mxu0
      %v892 = vadd.f32 %v839, %v891
      %893 = vmatprep.mubr.bf16.mxu0 0
      %894 = vmatmul.mubr.bf16.gmra.mrb[0].mxu0 %v796
      %v895 = vpop.f32.mrb[0].mxu0
      %v896 = vadd.f32 %v843, %v895
      %v897 = vpop.f32.mrb[0].mxu0
      %v898 = vadd.f32 %v845, %v897
      %v899 = vpop.f32.mrb[0].mxu0
      %v900 = vadd.f32 %v847, %v899
      %v901 = vpop.f32.mrb[0].mxu0
      %v902 = vadd.f32 %v849, %v901
      %903 = vdwg.mxu0
      %v942 = vunpack.c.l.b16 %v451
      %v943 = vunpack.c.h.b16 %v451
      %v944 = vunpack.c.l.b16 %v452
      %v945 = vunpack.c.h.b16 %v452
      %v946 = vunpack.c.l.b16 %v453
      %v947 = vunpack.c.h.b16 %v453
      %v948 = vunpack.c.l.b16 %v454
      %v949 = vunpack.c.h.b16 %v454
      %v950 = vunpack.c.l.b16 %v455
      %v951 = vunpack.c.h.b16 %v455
      %v952 = vunpack.c.l.b16 %v456
      %v953 = vunpack.c.h.b16 %v456
      %v954 = vunpack.c.l.b16 %v457
      %v955 = vunpack.c.h.b16 %v457
      %v956 = vunpack.c.l.b16 %v458
      %v957 = vunpack.c.h.b16 %v458
      %v958 = vunpack.c.l.b16 %v459
      %v959 = vunpack.c.h.b16 %v459
      %v960 = vunpack.c.l.b16 %v460
      %v961 = vunpack.c.h.b16 %v460
      %v962 = vunpack.c.l.b16 %v461
      %v963 = vunpack.c.h.b16 %v461
      %v964 = vunpack.c.l.b16 %v462
      %v965 = vunpack.c.h.b16 %v462
      %v966 = vunpack.c.l.b16 %v463
      %v967 = vunpack.c.h.b16 %v463
      %v968 = vunpack.c.l.b16 %v464
      %v969 = vunpack.c.h.b16 %v464
      %v970 = vunpack.c.l.b16 %v465
      %v971 = vunpack.c.h.b16 %v465
      %v972 = vunpack.c.l.b16 %v466
      %v973 = vunpack.c.h.b16 %v466
      %v974 = vunpack.c.l.b16 %v467
      %v975 = vunpack.c.h.b16 %v467
      %v976 = vunpack.c.l.b16 %v468
      %v977 = vunpack.c.h.b16 %v468
      %v978 = vunpack.c.l.b16 %v469
      %v979 = vunpack.c.h.b16 %v469
      %v980 = vunpack.c.l.b16 %v470
      %v981 = vunpack.c.h.b16 %v470
      %v982 = vunpack.c.l.b16 %v471
      %v983 = vunpack.c.h.b16 %v471
      %v984 = vunpack.c.l.b16 %v472
      %v985 = vunpack.c.h.b16 %v472
      %v986 = vunpack.c.l.b16 %v473
      %v987 = vunpack.c.h.b16 %v473
      %v988 = vunpack.c.l.b16 %v474
      %v989 = vunpack.c.h.b16 %v474
      %v990 = vunpack.c.l.b16 %v475
      %v991 = vunpack.c.h.b16 %v475
      %v992 = vunpack.c.l.b16 %v476
      %v993 = vunpack.c.h.b16 %v476
      %v994 = vunpack.c.l.b16 %v477
      %v995 = vunpack.c.h.b16 %v477
      %v996 = vunpack.c.l.b16 %v478
      %v997 = vunpack.c.h.b16 %v478
      %v998 = vunpack.c.l.b16 %v479
      %v999 = vunpack.c.h.b16 %v479
      %v1000 = vunpack.c.l.b16 %v480
      %v1001 = vunpack.c.h.b16 %v480
      %v1002 = vunpack.c.l.b16 %v481
      %v1003 = vunpack.c.h.b16 %v481
      %v1004 = vunpack.c.l.b16 %v482
      %v1005 = vunpack.c.h.b16 %v482
      %v1006 = vunpack.c.l.b16 %v483
      %v1007 = vunpack.c.h.b16 %v483
      %v1008 = vunpack.c.l.b16 %v484
      %v1009 = vunpack.c.h.b16 %v484
      %v1010 = vpack.c.b16 %v944, %v942
      %v1011 = vpack.c.b16 %v945, %v943
      %v1012 = vpack.c.b16 %v948, %v946
      %v1013 = vpack.c.b16 %v949, %v947
      %v1014 = vpack.c.b16 %v952, %v950
      %v1015 = vpack.c.b16 %v953, %v951
      %v1016 = vpack.c.b16 %v956, %v954
      %v1017 = vpack.c.b16 %v957, %v955
      %v1018 = vpack.c.b16 %v960, %v958
      %v1019 = vpack.c.b16 %v961, %v959
      %v1020 = vpack.c.b16 %v964, %v962
      %v1021 = vpack.c.b16 %v965, %v963
      %v1022 = vpack.c.b16 %v968, %v966
      %v1023 = vpack.c.b16 %v969, %v967
      %v1024 = vpack.c.b16 %v972, %v970
      %v1025 = vpack.c.b16 %v973, %v971
      %v1026 = vpack.c.b16 %v976, %v974
      %v1027 = vpack.c.b16 %v977, %v975
      %v1028 = vpack.c.b16 %v980, %v978
      %v1029 = vpack.c.b16 %v981, %v979
      %v1030 = vpack.c.b16 %v984, %v982
      %v1031 = vpack.c.b16 %v985, %v983
      %v1032 = vpack.c.b16 %v988, %v986
      %v1033 = vpack.c.b16 %v989, %v987
      %v1034 = vpack.c.b16 %v992, %v990
      %v1035 = vpack.c.b16 %v993, %v991
      %v1036 = vpack.c.b16 %v996, %v994
      %v1037 = vpack.c.b16 %v997, %v995
      %v1038 = vpack.c.b16 %v1000, %v998
      %v1039 = vpack.c.b16 %v1001, %v999
      %v1040 = vpack.c.b16 %v1004, %v1002
      %v1041 = vpack.c.b16 %v1005, %v1003
      %v1042 = vpack.c.b16 %v1008, %v1006
      %v1043 = vpack.c.b16 %v1009, %v1007
      %v1078 = vsel %vm791, %v549, 0
      %v1080 = vsel %vm791, %v552, 0
      %1082 = vmatprep.subr.bf16.mxu0 %v1011
      %1083 = vmatpush1.bf16.msra.mxu0 %v1010
      %1084 = vmatprep.subr.bf16.mxu0 %v1013
      %1085 = vmatpush1.bf16.msra.mxu0 %v1012
      %1086 = vmatprep.subr.bf16.mxu0 %v1015
      %1087 = vmatpush1.bf16.msra.mxu0 %v1014
      %1088 = vmatprep.subr.bf16.mxu0 %v1017
      %1089 = vmatpush1.bf16.msra.mxu0 %v1016
      %1090 = vmatprep.subr.bf16.mxu0 %v1019
      %1091 = vmatpush1.bf16.msra.mxu0 %v1018
      %1092 = vmatprep.subr.bf16.mxu0 %v1021
      %1093 = vmatpush1.bf16.msra.mxu0 %v1020
      %1094 = vmatprep.subr.bf16.mxu0 %v1023
      %1095 = vmatpush1.bf16.msra.mxu0 %v1022
      %1096 = vmatprep.subr.bf16.mxu0 %v1025
      %1097 = vmatpush1.bf16.msra.mxu0 %v1024
      %1098 = vmatprep.subr.bf16.mxu0 %v1027
      %1099 = vmatpush1.bf16.msra.mxu0 %v1026
      %1100 = vmatprep.subr.bf16.mxu0 %v1029
      %1101 = vmatpush1.bf16.msra.mxu0 %v1028
      %1102 = vmatprep.subr.bf16.mxu0 %v1031
      %1103 = vmatpush1.bf16.msra.mxu0 %v1030
      %1104 = vmatprep.subr.bf16.mxu0 %v1033
      %1105 = vmatpush1.bf16.msra.mxu0 %v1032
      %1106 = vmatprep.subr.bf16.mxu0 %v1035
      %1107 = vmatpush1.bf16.msra.mxu0 %v1034
      %1108 = vmatprep.subr.bf16.mxu0 %v1037
      %1109 = vmatpush1.bf16.msra.mxu0 %v1036
      %1110 = vmatprep.subr.bf16.mxu0 %v1039
      %1111 = vmatpush1.bf16.msra.mxu0 %v1038
      %1112 = vmatprep.subr.bf16.mxu0 %v1041
      %1113 = vmatpush1.bf16.msra.mxu0 %v1040
      %1114 = vmatprep.mubr.bf16.mxu0 %v548
      %1115 = vmatmul.mubr.bf16.gmra.mrb[0].mxu0 %v547
      %v1116 = vpop.f32.mrb[0].mxu0
      %v1117 = vadd.f32 %v886, %v1116
      %v1118 = vpop.f32.mrb[0].mxu0
      %v1119 = vadd.f32 %v888, %v1118
      %v1120 = vpop.f32.mrb[0].mxu0
      %v1121 = vadd.f32 %v890, %v1120
      %v1122 = vpop.f32.mrb[0].mxu0
      %v1123 = vadd.f32 %v892, %v1122
      %1124 = vmatprep.mubr.bf16.mxu0 %v551
      %1125 = vmatmul.mubr.bf16.gmra.mrb[0].mxu0 %v550
      %v1126 = vpop.f32.mrb[0].mxu0
      %v1127 = vadd.f32 %v896, %v1126
      %v1128 = vpop.f32.mrb[0].mxu0
      %v1129 = vadd.f32 %v898, %v1128
      %v1130 = vpop.f32.mrb[0].mxu0
      %v1131 = vadd.f32 %v900, %v1130
      %v1132 = vpop.f32.mrb[0].mxu0
      %v1133 = vadd.f32 %v902, %v1132
      %1134 = vdwg.mxu0
      %1135 = vmatprep.subr.bf16.mxu0 %v1043
      %1136 = vmatpush1.bf16.msra.mxu0 %v1042
      %1137 = vmatprep.subr.bf16.mxu0 0
      %1138 = vmatpush1.bf16.msra.mxu0 0
      %1139 = vmatprep.subr.bf16.mxu0 0
      %1140 = vmatpush1.bf16.msra.mxu0 0
      %1141 = vmatprep.subr.bf16.mxu0 0
      %1142 = vmatpush1.bf16.msra.mxu0 0
      %1143 = vmatprep.subr.bf16.mxu0 0
      %1144 = vmatpush1.bf16.msra.mxu0 0
      %1145 = vmatprep.subr.bf16.mxu0 0
      %1146 = vmatpush1.bf16.msra.mxu0 0
      %1147 = vmatprep.subr.bf16.mxu0 0
      %1148 = vmatpush1.bf16.msra.mxu0 0
      %1149 = vmatprep.subr.bf16.mxu0 0
      %1150 = vmatpush1.bf16.msra.mxu0 0
      %1151 = vmatprep.subr.bf16.mxu0 0
      %1152 = vmatpush1.bf16.msra.mxu0 0
      %1153 = vmatprep.subr.bf16.mxu0 0
      %1154 = vmatpush1.bf16.msra.mxu0 0
      %1155 = vmatprep.subr.bf16.mxu0 0
      %1156 = vmatpush1.bf16.msra.mxu0 0
      %1157 = vmatprep.subr.bf16.mxu0 0
      %1158 = vmatpush1.bf16.msra.mxu0 0
      %1159 = vmatprep.subr.bf16.mxu0 0
      %1160 = vmatpush1.bf16.msra.mxu0 0
      %1161 = vmatprep.subr.bf16.mxu0 0
      %1162 = vmatpush1.bf16.msra.mxu0 0
      %1163 = vmatprep.subr.bf16.mxu0 0
      %1164 = vmatpush1.bf16.msra.mxu0 0
      %1165 = vmatprep.subr.bf16.mxu0 0
      %1166 = vmatpush1.bf16.msra.mxu0 0
      %1167 = vmatprep.mubr.bf16.mxu0 0
      %1168 = vmatmul.mubr.bf16.gmra.mrb[0].mxu0 %v1078
      %v1169 = vpop.f32.mrb[0].mxu0
      %v1170 = vadd.f32 %v1117, %v1169
      %v1171 = vpop.f32.mrb[0].mxu0
      %v1172 = vadd.f32 %v1119, %v1171
      %v1173 = vpop.f32.mrb[0].mxu0
      %v1174 = vadd.f32 %v1121, %v1173
      %v1175 = vpop.f32.mrb[0].mxu0
      %v1176 = vadd.f32 %v1123, %v1175
      %1177 = vmatprep.mubr.bf16.mxu0 0
      %1178 = vmatmul.mubr.bf16.gmra.mrb[0].mxu0 %v1080
      %v1179 = vpop.f32.mrb[0].mxu0
      %v1180 = vadd.f32 %v1127, %v1179
      %v1181 = vpop.f32.mrb[0].mxu0
      %v1182 = vadd.f32 %v1129, %v1181
      %v1183 = vpop.f32.mrb[0].mxu0
      %v1184 = vadd.f32 %v1131, %v1183
      %v1185 = vpop.f32.mrb[0].mxu0
      %v1186 = vadd.f32 %v1133, %v1185
      %1187 = vdwg.mxu0
      %v1188 = vld [vmem:[#allocation2] sm:$0xee]
      %v1189 = vld [vmem:[#allocation2 + $0x8] sm:$0xe]
      %s1190 = scalar_lea.vmem %s3, 544
      %v1191 = vld [vmem:[%s1190] sm:$0xff]
      %v1192 = vld [vmem:[%s1190 + $0x8] sm:$0xff]
      %v1193 = vld [vmem:[%s1190 + $0x10] sm:$0xff]
      %v1194 = vld [vmem:[%s1190 + $0x18] sm:$0xff]
      %v1195 = vld [vmem:[%s1190 + $0x20] sm:$0xff]
      %v1196 = vld [vmem:[%s1190 + $0x28] sm:$0xff]
      %v1197 = vld [vmem:[%s1190 + $0x30] sm:$0xff]
      %v1198 = vld [vmem:[%s1190 + $0x38] sm:$0xff]
      %v1199 = vld [vmem:[%s1190 + $0x40] sm:$0xff]
      %v1200 = vld [vmem:[%s1190 + $0x48] sm:$0xff]
      %v1201 = vld [vmem:[%s1190 + $0x50] sm:$0xff]
      %v1202 = vld [vmem:[%s1190 + $0x58] sm:$0xff]
      %v1203 = vld [vmem:[%s1190 + $0x60] sm:$0xff]
      %v1204 = vld [vmem:[%s1190 + $0x68] sm:$0xff]
      %v1205 = vld [vmem:[%s1190 + $0x70] sm:$0xff]
      %v1206 = vld [vmem:[%s1190 + $0x78] sm:$0xff]
      %v1207 = vld [vmem:[%s1190 + $0x80] sm:$0xff]
      %v1208 = vld [vmem:[%s1190 + $0x88] sm:$0xff]
      %v1209 = vld [vmem:[%s1190 + $0x90] sm:$0xff]
      %v1210 = vld [vmem:[%s1190 + $0x98] sm:$0xff]
      %v1211 = vld [vmem:[%s1190 + $0xa0] sm:$0xff]
      %v1212 = vld [vmem:[%s1190 + $0xa8] sm:$0xff]
      %v1213 = vld [vmem:[%s1190 + $0xb0] sm:$0xff]
      %v1214 = vld [vmem:[%s1190 + $0xb8] sm:$0xff]
      %v1215 = vld [vmem:[%s1190 + $0xc0] sm:$0xff]
      %v1216 = vld [vmem:[%s1190 + $0xc8] sm:$0xff]
      %v1217 = vld [vmem:[%s1190 + $0xd0] sm:$0xff]
      %v1218 = vld [vmem:[%s1190 + $0xd8] sm:$0xff]
      %v1219 = vld [vmem:[%s1190 + $0xe0] sm:$0xff]
      %v1220 = vld [vmem:[%s1190 + $0xe8] sm:$0xff]
      %v1221 = vld [vmem:[%s1190 + $0xf0] sm:$0xff]
      %v1222 = vld [vmem:[%s1190 + $0xf8] sm:$0xff]
      %v1223 = vld [vmem:[%s1190 + $0x100] sm:$0xff]
      %v1224 = vld [vmem:[%s1190 + $0x108] sm:$0xff]
      %v1227 = vunpack.c.l.b16 %v1188
      %v1228 = vunpack.c.h.b16 %v1188
      %v1229 = vunpack.c.l.b16 %v1189
      %v1230 = vpack.c.b16 %v535, %v1227
      %v1231 = vpack.c.b16 %v536, %v1228
      %v1232 = vpack.c.b16 %v537, %v1229
      %vm1233 = vcmask 1046528
      %v1234 = vrot.slane %v1230, 1
      %v1235 = vrot.slane %v550, 1
      %v1236 = vsel %vm1233, %v1234, %v1235
      %v1237 = vrot.slane %v1231, 1
      %v1238 = vrot.slane %v551, 1
      %v1239 = vsel %vm1233, %v1237, %v1238
      %v1240 = vrot.slane %v1232, 1
      %v1241 = vrot.slane %v552, 1
      %v1242 = vsel %vm1233, %v1240, %v1241
      %v1243 = vrot.slane %v553, 1
      %v1244 = vsel %vm1233, %v1235, %v1243
      %v1245 = vrot.slane %v554, 1
      %v1246 = vsel %vm1233, %v1238, %v1245
      %v1247 = vrot.slane %v555, 1
      %v1248 = vsel %vm1233, %v1241, %v1247
      %v1287 = vunpack.c.l.b16 %v1191
      %v1288 = vunpack.c.h.b16 %v1191
      %v1289 = vunpack.c.l.b16 %v1192
      %v1290 = vunpack.c.h.b16 %v1192
      %v1291 = vunpack.c.l.b16 %v1193
      %v1292 = vunpack.c.h.b16 %v1193
      %v1293 = vunpack.c.l.b16 %v1194
      %v1294 = vunpack.c.h.b16 %v1194
      %v1295 = vunpack.c.l.b16 %v1195
      %v1296 = vunpack.c.h.b16 %v1195
      %v1297 = vunpack.c.l.b16 %v1196
      %v1298 = vunpack.c.h.b16 %v1196
      %v1299 = vunpack.c.l.b16 %v1197
      %v1300 = vunpack.c.h.b16 %v1197
      %v1301 = vunpack.c.l.b16 %v1198
      %v1302 = vunpack.c.h.b16 %v1198
      %v1303 = vunpack.c.l.b16 %v1199
      %v1304 = vunpack.c.h.b16 %v1199
      %v1305 = vunpack.c.l.b16 %v1200
      %v1306 = vunpack.c.h.b16 %v1200
      %v1307 = vunpack.c.l.b16 %v1201
      %v1308 = vunpack.c.h.b16 %v1201
      %v1309 = vunpack.c.l.b16 %v1202
      %v1310 = vunpack.c.h.b16 %v1202
      %v1311 = vunpack.c.l.b16 %v1203
      %v1312 = vunpack.c.h.b16 %v1203
      %v1313 = vunpack.c.l.b16 %v1204
      %v1314 = vunpack.c.h.b16 %v1204
      %v1315 = vunpack.c.l.b16 %v1205
      %v1316 = vunpack.c.h.b16 %v1205
      %v1317 = vunpack.c.l.b16 %v1206
      %v1318 = vunpack.c.h.b16 %v1206
      %v1319 = vunpack.c.l.b16 %v1207
      %v1320 = vunpack.c.h.b16 %v1207
      %v1321 = vunpack.c.l.b16 %v1208
      %v1322 = vunpack.c.h.b16 %v1208
      %v1323 = vunpack.c.l.b16 %v1209
      %v1324 = vunpack.c.h.b16 %v1209
      %v1325 = vunpack.c.l.b16 %v1210
      %v1326 = vunpack.c.h.b16 %v1210
      %v1327 = vunpack.c.l.b16 %v1211
      %v1328 = vunpack.c.h.b16 %v1211
      %v1329 = vunpack.c.l.b16 %v1212
      %v1330 = vunpack.c.h.b16 %v1212
      %v1331 = vunpack.c.l.b16 %v1213
      %v1332 = vunpack.c.h.b16 %v1213
      %v1333 = vunpack.c.l.b16 %v1214
      %v1334 = vunpack.c.h.b16 %v1214
      %v1335 = vunpack.c.l.b16 %v1215
      %v1336 = vunpack.c.h.b16 %v1215
      %v1337 = vunpack.c.l.b16 %v1216
      %v1338 = vunpack.c.h.b16 %v1216
      %v1339 = vunpack.c.l.b16 %v1217
      %v1340 = vunpack.c.h.b16 %v1217
      %v1341 = vunpack.c.l.b16 %v1218
      %v1342 = vunpack.c.h.b16 %v1218
      %v1343 = vunpack.c.l.b16 %v1219
      %v1344 = vunpack.c.h.b16 %v1219
      %v1345 = vunpack.c.l.b16 %v1220
      %v1346 = vunpack.c.h.b16 %v1220
      %v1347 = vunpack.c.l.b16 %v1221
      %v1348 = vunpack.c.h.b16 %v1221
      %v1349 = vunpack.c.l.b16 %v1222
      %v1350 = vunpack.c.h.b16 %v1222
      %v1351 = vunpack.c.l.b16 %v1223
      %v1352 = vunpack.c.h.b16 %v1223
      %v1353 = vunpack.c.l.b16 %v1224
      %v1354 = vunpack.c.h.b16 %v1224
      %v1355 = vpack.c.b16 %v1289, %v1287
      %v1356 = vpack.c.b16 %v1290, %v1288
      %v1357 = vpack.c.b16 %v1293, %v1291
      %v1358 = vpack.c.b16 %v1294, %v1292
      %v1359 = vpack.c.b16 %v1297, %v1295
      %v1360 = vpack.c.b16 %v1298, %v1296
      %v1361 = vpack.c.b16 %v1301, %v1299
      %v1362 = vpack.c.b16 %v1302, %v1300
      %v1363 = vpack.c.b16 %v1305, %v1303
      %v1364 = vpack.c.b16 %v1306, %v1304
      %v1365 = vpack.c.b16 %v1309, %v1307
      %v1366 = vpack.c.b16 %v1310, %v1308
      %v1367 = vpack.c.b16 %v1313, %v1311
      %v1368 = vpack.c.b16 %v1314, %v1312
      %v1369 = vpack.c.b16 %v1317, %v1315
      %v1370 = vpack.c.b16 %v1318, %v1316
      %v1371 = vpack.c.b16 %v1321, %v1319
      %v1372 = vpack.c.b16 %v1322, %v1320
      %v1373 = vpack.c.b16 %v1325, %v1323
      %v1374 = vpack.c.b16 %v1326, %v1324
      %v1375 = vpack.c.b16 %v1329, %v1327
      %v1376 = vpack.c.b16 %v1330, %v1328
      %v1377 = vpack.c.b16 %v1333, %v1331
      %v1378 = vpack.c.b16 %v1334, %v1332
      %v1379 = vpack.c.b16 %v1337, %v1335
      %v1380 = vpack.c.b16 %v1338, %v1336
      %v1381 = vpack.c.b16 %v1341, %v1339
      %v1382 = vpack.c.b16 %v1342, %v1340
      %v1383 = vpack.c.b16 %v1345, %v1343
      %v1384 = vpack.c.b16 %v1346, %v1344
      %v1385 = vpack.c.b16 %v1349, %v1347
      %v1386 = vpack.c.b16 %v1350, %v1348
      %v1387 = vpack.c.b16 %v1353, %v1351
      %v1388 = vpack.c.b16 %v1354, %v1352
      %v1424 = vsel %vm791, %v1242, 0
      %v1427 = vsel %vm791, %v1248, 0
      %1429 = vmatprep.subr.bf16.mxu0 %v1356
      %1430 = vmatpush1.bf16.msra.mxu0 %v1355
      %1431 = vmatprep.subr.bf16.mxu0 %v1358
      %1432 = vmatpush1.bf16.msra.mxu0 %v1357
      %1433 = vmatprep.subr.bf16.mxu0 %v1360
      %1434 = vmatpush1.bf16.msra.mxu0 %v1359
      %1435 = vmatprep.subr.bf16.mxu0 %v1362
      %1436 = vmatpush1.bf16.msra.mxu0 %v1361
      %1437 = vmatprep.subr.bf16.mxu0 %v1364
      %1438 = vmatpush1.bf16.msra.mxu0 %v1363
      %1439 = vmatprep.subr.bf16.mxu0 %v1366
      %1440 = vmatpush1.bf16.msra.mxu0 %v1365
      %1441 = vmatprep.subr.bf16.mxu0 %v1368
      %1442 = vmatpush1.bf16.msra.mxu0 %v1367
      %1443 = vmatprep.subr.bf16.mxu0 %v1370
      %1444 = vmatpush1.bf16.msra.mxu0 %v1369
      %1445 = vmatprep.subr.bf16.mxu0 %v1372
      %1446 = vmatpush1.bf16.msra.mxu0 %v1371
      %1447 = vmatprep.subr.bf16.mxu0 %v1374
      %1448 = vmatpush1.bf16.msra.mxu0 %v1373
      %1449 = vmatprep.subr.bf16.mxu0 %v1376
      %1450 = vmatpush1.bf16.msra.mxu0 %v1375
      %1451 = vmatprep.subr.bf16.mxu0 %v1378
      %1452 = vmatpush1.bf16.msra.mxu0 %v1377
      %1453 = vmatprep.subr.bf16.mxu0 %v1380
      %1454 = vmatpush1.bf16.msra.mxu0 %v1379
      %1455 = vmatprep.subr.bf16.mxu0 %v1382
      %1456 = vmatpush1.bf16.msra.mxu0 %v1381
      %1457 = vmatprep.subr.bf16.mxu0 %v1384
      %1458 = vmatpush1.bf16.msra.mxu0 %v1383
      %1459 = vmatprep.subr.bf16.mxu0 %v1386
      %1460 = vmatpush1.bf16.msra.mxu0 %v1385
      %1461 = vmatprep.mubr.bf16.mxu0 %v1239
      %1462 = vmatmul.mubr.bf16.gmra.mrb[0].mxu0 %v1236
      %v1463 = vpop.f32.mrb[0].mxu0
      %v1464 = vadd.f32 0.0, %v1463
      %v1465 = vpop.f32.mrb[0].mxu0
      %v1466 = vadd.f32 0.0, %v1465
      %v1467 = vpop.f32.mrb[0].mxu0
      %v1468 = vadd.f32 0.0, %v1467
      %v1469 = vpop.f32.mrb[0].mxu0
      %v1470 = vadd.f32 0.0, %v1469
      %1471 = vmatprep.mubr.bf16.mxu0 %v1246
      %1472 = vmatmul.mubr.bf16.gmra.mrb[0].mxu0 %v1244
      %v1473 = vpop.f32.mrb[0].mxu0
      %v1474 = vadd.f32 0.0, %v1473
      %v1475 = vpop.f32.mrb[0].mxu0
      %v1476 = vadd.f32 0.0, %v1475
      %v1477 = vpop.f32.mrb[0].mxu0
      %v1478 = vadd.f32 0.0, %v1477
      %v1479 = vpop.f32.mrb[0].mxu0
      %v1480 = vadd.f32 0.0, %v1479
      %1481 = vdwg.mxu0
      %1482 = vmatprep.subr.bf16.mxu0 %v1388
      %1483 = vmatpush1.bf16.msra.mxu0 %v1387
      %1484 = vmatprep.subr.bf16.mxu0 0
      %1485 = vmatpush1.bf16.msra.mxu0 0
      %1486 = vmatprep.subr.bf16.mxu0 0
      %1487 = vmatpush1.bf16.msra.mxu0 0
      %1488 = vmatprep.subr.bf16.mxu0 0
      %1489 = vmatpush1.bf16.msra.mxu0 0
      %1490 = vmatprep.subr.bf16.mxu0 0
      %1491 = vmatpush1.bf16.msra.mxu0 0
      %1492 = vmatprep.subr.bf16.mxu0 0
      %1493 = vmatpush1.bf16.msra.mxu0 0
      %1494 = vmatprep.subr.bf16.mxu0 0
      %1495 = vmatpush1.bf16.msra.mxu0 0
      %1496 = vmatprep.subr.bf16.mxu0 0
      %1497 = vmatpush1.bf16.msra.mxu0 0
      %1498 = vmatprep.subr.bf16.mxu0 0
      %1499 = vmatpush1.bf16.msra.mxu0 0
      %1500 = vmatprep.subr.bf16.mxu0 0
      %1501 = vmatpush1.bf16.msra.mxu0 0
      %1502 = vmatprep.subr.bf16.mxu0 0
      %1503 = vmatpush1.bf16.msra.mxu0 0
      %1504 = vmatprep.subr.bf16.mxu0 0
      %1505 = vmatpush1.bf16.msra.mxu0 0
      %1506 = vmatprep.subr.bf16.mxu0 0
      %1507 = vmatpush1.bf16.msra.mxu0 0
      %1508 = vmatprep.subr.bf16.mxu0 0
      %1509 = vmatpush1.bf16.msra.mxu0 0
      %1510 = vmatprep.subr.bf16.mxu0 0
      %1511 = vmatpush1.bf16.msra.mxu0 0
      %1512 = vmatprep.subr.bf16.mxu0 0
      %1513 = vmatpush1.bf16.msra.mxu0 0
      %1514 = vmatprep.mubr.bf16.mxu0 0
      %1515 = vmatmul.mubr.bf16.gmra.mrb[0].mxu0 %v1424
      %v1516 = vpop.f32.mrb[0].mxu0
      %v1517 = vadd.f32 %v1464, %v1516
      %v1518 = vpop.f32.mrb[0].mxu0
      %v1519 = vadd.f32 %v1466, %v1518
      %v1520 = vpop.f32.mrb[0].mxu0
      %v1521 = vadd.f32 %v1468, %v1520
      %v1522 = vpop.f32.mrb[0].mxu0
      %v1523 = vadd.f32 %v1470, %v1522
      %1524 = vmatprep.mubr.bf16.mxu0 0
      %1525 = vmatmul.mubr.bf16.gmra.mrb[0].mxu0 %v1427
      %v1526 = vpop.f32.mrb[0].mxu0
      %v1527 = vadd.f32 %v1474, %v1526
      %v1528 = vpop.f32.mrb[0].mxu0
      %v1529 = vadd.f32 %v1476, %v1528
      %v1530 = vpop.f32.mrb[0].mxu0
      %v1531 = vadd.f32 %v1478, %v1530
      %v1532 = vpop.f32.mrb[0].mxu0
      %v1533 = vadd.f32 %v1480, %v1532
      %1534 = vdwg.mxu0
      %v1535 = vadd.f32 %v1170, %v1517
      %v1536 = vadd.f32 %v1172, %v1519
      %v1537 = vadd.f32 %v1174, %v1521
      %v1538 = vadd.f32 %v1176, %v1523
      %v1539 = vadd.f32 %v1180, %v1527
      %v1540 = vadd.f32 %v1182, %v1529
      %v1541 = vadd.f32 %v1184, %v1531
      %v1542 = vadd.f32 %v1186, %v1533
      %s1543 = smul.u32 %s17, 8
      %s1544 = smul.addr %s1543, 8
      %s1545 = scalar_lea.vmem %s6, %s1544
      %1546 = vst [vmem:[%s1545] sm:$0xff] %v1535
      %1547 = vst [vmem:[%s1545 + $0x8] sm:$0xff] %v1536
      %1548 = vst [vmem:[%s1545 + $0x10] sm:$0xff] %v1537
      %1549 = vst [vmem:[%s1545 + $0x18] sm:$0xff] %v1538
      %1550 = vst [vmem:[%s1545 + $0x20] sm:$0xff] %v1539
      %1551 = vst [vmem:[%s1545 + $0x28] sm:$0xff] %v1540
      %1552 = vst [vmem:[%s1545 + $0x30] sm:$0xff] %v1541
      %1553 = vst [vmem:[%s1545 + $0x38] sm:$0xff] %v1542
      %v1554 = vld [vmem:[#allocation3] ss:$2 sm:$0x3]
      %v1555 = vadd.f32 %v1535, %v1537
      %v1556 = vadd.f32 %v1555, %v1539
      %v1557 = vadd.f32 %v1556, %v1541
      %v1558 = vrot.slane %v1557, 4
      %v1559 = vadd.f32 %v1557, %v1558
      %v1560 = vrot.slane %v1559, 2
      %v1561 = vadd.f32 %v1559, %v1560
      %v1562 = vrot.slane %v1561, 1
      %v1563 = vadd.f32 %v1561, %v1562
      %v1564 = vadd.f32 %v1536, %v1538
      %v1565 = vadd.f32 %v1564, %v1540
      %v1566 = vadd.f32 %v1565, %v1542
      %v1567 = vrot.slane %v1566, 4
      %v1568 = vadd.f32 %v1566, %v1567
      %v1569 = vrot.slane %v1568, 2
      %v1570 = vadd.f32 %v1568, %v1569
      %v1571 = vrot.slane %v1570, 1
      %v1572 = vadd.f32 %v1570, %v1571
      %v1575 = vcombine.low %v1563, %v1572
      %v1577 = vunpack.c.l.s4 1966171168
      %v1578 = vunpack.c.0.s8 %v1577
      %v1579 = vlaneseq
      %v1580 = vshrl.u32 %v1579, 7
      %v1581 = vsub.s32 %v1578, %v1580
      %v1582 = vrot.slane %v1575, %v1581
      %v1584 = vunpack.c.l.s4 1966171168
      %v1585 = vunpack.c.0.s8 %v1584
      %v1586 = vlaneseq
      %v1587 = vshrl.u32 %v1586, 7
      %v1588 = vsub.s32 %v1585, %v1587
      %v1589 = vrot.slane %v1582, %v1588
      %v1591 = vadd.f32 %v1554, %v1589
      %v1592 = vlaneseq
      %vm1593 = vcmp.ge.s32.totalorder %v1592, 0
      %vm1594 = vcmp.lt.s32.totalorder %v1592, 256
      %vm1595 = vmand %vm1593, %vm1594
      %1596 = vst.msk [vmem:[#allocation3] ss:$2 sm:$0x3] %vm1595, %v1591
      %s1597 = scalar_lea.vmem [#allocation3], 1
      %v1598 = vld [vmem:[%s1597] ss:$2 sm:$0x3]
      %v1599 = vmul.f32 %v1535, %v1535
      %v1600 = vmul.f32 %v1536, %v1536
      %v1601 = vmul.f32 %v1537, %v1537
      %v1602 = vmul.f32 %v1538, %v1538
      %v1603 = vmul.f32 %v1539, %v1539
      %v1604 = vmul.f32 %v1540, %v1540
      %v1605 = vmul.f32 %v1541, %v1541
      %v1606 = vmul.f32 %v1542, %v1542
      %v1607 = vadd.f32 %v1599, %v1601
      %v1608 = vadd.f32 %v1607, %v1603
      %v1609 = vadd.f32 %v1608, %v1605
      %v1610 = vrot.slane %v1609, 4
      %v1611 = vadd.f32 %v1609, %v1610
      %v1612 = vrot.slane %v1611, 2
      %v1613 = vadd.f32 %v1611, %v1612
      %v1614 = vrot.slane %v1613, 1
      %v1615 = vadd.f32 %v1613, %v1614
      %v1616 = vadd.f32 %v1600, %v1602
      %v1617 = vadd.f32 %v1616, %v1604
      %v1618 = vadd.f32 %v1617, %v1606
      %v1619 = vrot.slane %v1618, 4
      %v1620 = vadd.f32 %v1618, %v1619
      %v1621 = vrot.slane %v1620, 2
      %v1622 = vadd.f32 %v1620, %v1621
      %v1623 = vrot.slane %v1622, 1
      %v1624 = vadd.f32 %v1622, %v1623
      %v1627 = vcombine.low %v1615, %v1624
      %v1629 = vunpack.c.l.s4 1966171168
      %v1630 = vunpack.c.0.s8 %v1629
      %v1631 = vlaneseq
      %v1632 = vshrl.u32 %v1631, 7
      %v1633 = vsub.s32 %v1630, %v1632
      %v1634 = vrot.slane %v1627, %v1633
      %v1636 = vunpack.c.l.s4 1966171168
      %v1637 = vunpack.c.0.s8 %v1636
      %v1638 = vlaneseq
      %v1639 = vshrl.u32 %v1638, 7
      %v1640 = vsub.s32 %v1637, %v1639
      %v1641 = vrot.slane %v1634, %v1640
      %v1643 = vadd.f32 %v1598, %v1641
      %1644 = vst.msk [vmem:[%s1597] ss:$2 sm:$0x3] %vm1595, %v1643
      %p1645 = scmp.eq.s32.totalorder %s17, 1
      // Predicated region
      $region49: #{up_forward.3} parent=43 // pred_check
        %p1646 = pneg %p1645
      $region50: #{up_forward.3} parent=43 // pred_check_branch
        %1648 = sbr.rel (%p1646) target = $region52
      $region51: #{up_forward.3} parent=43 // pred_region
        %v1649 = vlaneseq
        %v1650 = vshrl.u32 %v1649, 7
        %v1651 = vadd.s32 %v1650, 8
        %v1652 = vadd.s32 %v1650, 16
        %v1653 = vadd.s32 %v1650, 24
        %v1654 = vadd.s32 %v1650, 32
        %v1655 = vadd.s32 %v1650, 40
        %v1656 = vadd.s32 %v1650, 48
        %v1657 = vadd.s32 %v1650, 56
        %v1658 = vadd.s32 %v1650, 64
        %v1659 = vadd.s32 %v1650, 72
        %v1660 = vadd.s32 %v1650, 80
        %v1661 = vadd.s32 %v1650, 88
        %v1662 = vadd.s32 %v1650, 96
        %v1663 = vadd.s32 %v1650, 104
        %v1664 = vadd.s32 %v1650, 112
        %v1665 = vadd.s32 %v1650, 120
        %v1666 = vadd.s32 %v1650, 128
        %v1667 = vadd.s32 %v1650, 136
        %v1668 = vadd.s32 %v1650, 144
        %v1669 = vadd.s32 %v1650, 152
        %v1670 = vadd.s32 %v1650, 160
        %v1671 = vadd.s32 %v1650, 168
        %v1672 = vadd.s32 %v1650, 176
        %v1673 = vadd.s32 %v1650, 184
        %v1674 = vadd.s32 %v1650, 192
        %v1675 = vadd.s32 %v1650, 200
        %v1676 = vadd.s32 %v1650, 208
        %v1677 = vadd.s32 %v1650, 216
        %v1678 = vadd.s32 %v1650, 224
        %v1679 = vadd.s32 %v1650, 232
        %v1680 = vadd.s32 %v1650, 240
        %v1681 = vadd.s32 %v1650, 248
        %vm1682 = vcmp.lt.s32.totalorder %v1650, 0
        %v1683 = vsub.s32 0, %v1650
        %v1684 = vsel %vm1682, %v1683, %v1650
        %v1685 = vshrl.u32 %v1684, 3
        %v1686 = vand.u32 %v1684, 7
        %v1687 = vsub.s32 0, %v1686
        %v1688 = vsel %vm1682, %v1687, %v1686
        %vm1689 = vcmp.lt.s32.totalorder %v1651, 0
        %v1690 = vsub.s32 0, %v1651
        %v1691 = vsel %vm1689, %v1690, %v1651
        %v1692 = vshrl.u32 %v1691, 3
        %v1693 = vand.u32 %v1691, 7
        %v1694 = vsub.s32 0, %v1693
        %v1695 = vsel %vm1689, %v1694, %v1693
        %vm1696 = vcmp.lt.s32.totalorder %v1652, 0
        %v1697 = vsub.s32 0, %v1652
        %v1698 = vsel %vm1696, %v1697, %v1652
        %v1699 = vshrl.u32 %v1698, 3
        %v1700 = vand.u32 %v1698, 7
        %v1701 = vsub.s32 0, %v1700
        %v1702 = vsel %vm1696, %v1701, %v1700
        %vm1703 = vcmp.lt.s32.totalorder %v1653, 0
        %v1704 = vsub.s32 0, %v1653
        %v1705 = vsel %vm1703, %v1704, %v1653
        %v1706 = vshrl.u32 %v1705, 3
        %v1707 = vand.u32 %v1705, 7
        %v1708 = vsub.s32 0, %v1707
        %v1709 = vsel %vm1703, %v1708, %v1707
        %vm1710 = vcmp.lt.s32.totalorder %v1654, 0
        %v1711 = vsub.s32 0, %v1654
        %v1712 = vsel %vm1710, %v1711, %v1654
        %v1713 = vshrl.u32 %v1712, 3
        %v1714 = vand.u32 %v1712, 7
        %v1715 = vsub.s32 0, %v1714
        %v1716 = vsel %vm1710, %v1715, %v1714
        %vm1717 = vcmp.lt.s32.totalorder %v1655, 0
        %v1718 = vsub.s32 0, %v1655
        %v1719 = vsel %vm1717, %v1718, %v1655
        %v1720 = vshrl.u32 %v1719, 3
        %v1721 = vand.u32 %v1719, 7
        %v1722 = vsub.s32 0, %v1721
        %v1723 = vsel %vm1717, %v1722, %v1721
        %vm1724 = vcmp.lt.s32.totalorder %v1656, 0
        %v1725 = vsub.s32 0, %v1656
        %v1726 = vsel %vm1724, %v1725, %v1656
        %v1727 = vshrl.u32 %v1726, 3
        %v1728 = vand.u32 %v1726, 7
        %v1729 = vsub.s32 0, %v1728
        %v1730 = vsel %vm1724, %v1729, %v1728
        %vm1731 = vcmp.lt.s32.totalorder %v1657, 0
        %v1732 = vsub.s32 0, %v1657
        %v1733 = vsel %vm1731, %v1732, %v1657
        %v1734 = vshrl.u32 %v1733, 3
        %v1735 = vand.u32 %v1733, 7
        %v1736 = vsub.s32 0, %v1735
        %v1737 = vsel %vm1731, %v1736, %v1735
        %vm1738 = vcmp.lt.s32.totalorder %v1658, 0
        %v1739 = vsub.s32 0, %v1658
        %v1740 = vsel %vm1738, %v1739, %v1658
        %v1741 = vshrl.u32 %v1740, 3
        %v1742 = vand.u32 %v1740, 7
        %v1743 = vsub.s32 0, %v1742
        %v1744 = vsel %vm1738, %v1743, %v1742
        %vm1745 = vcmp.lt.s32.totalorder %v1659, 0
        %v1746 = vsub.s32 0, %v1659
        %v1747 = vsel %vm1745, %v1746, %v1659
        %v1748 = vshrl.u32 %v1747, 3
        %v1749 = vand.u32 %v1747, 7
        %v1750 = vsub.s32 0, %v1749
        %v1751 = vsel %vm1745, %v1750, %v1749
        %vm1752 = vcmp.lt.s32.totalorder %v1660, 0
        %v1753 = vsub.s32 0, %v1660
        %v1754 = vsel %vm1752, %v1753, %v1660
        %v1755 = vshrl.u32 %v1754, 3
        %v1756 = vand.u32 %v1754, 7
        %v1757 = vsub.s32 0, %v1756
        %v1758 = vsel %vm1752, %v1757, %v1756
        %vm1759 = vcmp.lt.s32.totalorder %v1661, 0
        %v1760 = vsub.s32 0, %v1661
        %v1761 = vsel %vm1759, %v1760, %v1661
        %v1762 = vshrl.u32 %v1761, 3
        %v1763 = vand.u32 %v1761, 7
        %v1764 = vsub.s32 0, %v1763
        %v1765 = vsel %vm1759, %v1764, %v1763
        %vm1766 = vcmp.lt.s32.totalorder %v1662, 0
        %v1767 = vsub.s32 0, %v1662
        %v1768 = vsel %vm1766, %v1767, %v1662
        %v1769 = vshrl.u32 %v1768, 3
        %v1770 = vand.u32 %v1768, 7
        %v1771 = vsub.s32 0, %v1770
        %v1772 = vsel %vm1766, %v1771, %v1770
        %vm1773 = vcmp.lt.s32.totalorder %v1663, 0
        %v1774 = vsub.s32 0, %v1663
        %v1775 = vsel %vm1773, %v1774, %v1663
        %v1776 = vshrl.u32 %v1775, 3
        %v1777 = vand.u32 %v1775, 7
        %v1778 = vsub.s32 0, %v1777
        %v1779 = vsel %vm1773, %v1778, %v1777
        %vm1780 = vcmp.lt.s32.totalorder %v1664, 0
        %v1781 = vsub.s32 0, %v1664
        %v1782 = vsel %vm1780, %v1781, %v1664
        %v1783 = vshrl.u32 %v1782, 3
        %v1784 = vand.u32 %v1782, 7
        %v1785 = vsub.s32 0, %v1784
        %v1786 = vsel %vm1780, %v1785, %v1784
        %vm1787 = vcmp.lt.s32.totalorder %v1665, 0
        %v1788 = vsub.s32 0, %v1665
        %v1789 = vsel %vm1787, %v1788, %v1665
        %v1790 = vshrl.u32 %v1789, 3
        %v1791 = vand.u32 %v1789, 7
        %v1792 = vsub.s32 0, %v1791
        %v1793 = vsel %vm1787, %v1792, %v1791
        %vm1794 = vcmp.lt.s32.totalorder %v1666, 0
        %v1795 = vsub.s32 0, %v1666
        %v1796 = vsel %vm1794, %v1795, %v1666
        %v1797 = vshrl.u32 %v1796, 3
        %v1798 = vand.u32 %v1796, 7
        %v1799 = vsub.s32 0, %v1798
        %v1800 = vsel %vm1794, %v1799, %v1798
        %vm1801 = vcmp.lt.s32.totalorder %v1667, 0
        %v1802 = vsub.s32 0, %v1667
        %v1803 = vsel %vm1801, %v1802, %v1667
        %v1804 = vshrl.u32 %v1803, 3
        %v1805 = vand.u32 %v1803, 7
        %v1806 = vsub.s32 0, %v1805
        %v1807 = vsel %vm1801, %v1806, %v1805
        %vm1808 = vcmp.lt.s32.totalorder %v1668, 0
        %v1809 = vsub.s32 0, %v1668
        %v1810 = vsel %vm1808, %v1809, %v1668
        %v1811 = vshrl.u32 %v1810, 3
        %v1812 = vand.u32 %v1810, 7
        %v1813 = vsub.s32 0, %v1812
        %v1814 = vsel %vm1808, %v1813, %v1812
        %vm1815 = vcmp.lt.s32.totalorder %v1669, 0
        %v1816 = vsub.s32 0, %v1669
        %v1817 = vsel %vm1815, %v1816, %v1669
        %v1818 = vshrl.u32 %v1817, 3
        %v1819 = vand.u32 %v1817, 7
        %v1820 = vsub.s32 0, %v1819
        %v1821 = vsel %vm1815, %v1820, %v1819
        %vm1822 = vcmp.lt.s32.totalorder %v1670, 0
        %v1823 = vsub.s32 0, %v1670
        %v1824 = vsel %vm1822, %v1823, %v1670
        %v1825 = vshrl.u32 %v1824, 3
        %v1826 = vand.u32 %v1824, 7
        %v1827 = vsub.s32 0, %v1826
        %v1828 = vsel %vm1822, %v1827, %v1826
        %vm1829 = vcmp.lt.s32.totalorder %v1671, 0
        %v1830 = vsub.s32 0, %v1671
        %v1831 = vsel %vm1829, %v1830, %v1671
        %v1832 = vshrl.u32 %v1831, 3
        %v1833 = vand.u32 %v1831, 7
        %v1834 = vsub.s32 0, %v1833
        %v1835 = vsel %vm1829, %v1834, %v1833
        %vm1836 = vcmp.lt.s32.totalorder %v1672, 0
        %v1837 = vsub.s32 0, %v1672
        %v1838 = vsel %vm1836, %v1837, %v1672
        %v1839 = vshrl.u32 %v1838, 3
        %v1840 = vand.u32 %v1838, 7
        %v1841 = vsub.s32 0, %v1840
        %v1842 = vsel %vm1836, %v1841, %v1840
        %vm1843 = vcmp.lt.s32.totalorder %v1673, 0
        %v1844 = vsub.s32 0, %v1673
        %v1845 = vsel %vm1843, %v1844, %v1673
        %v1846 = vshrl.u32 %v1845, 3
        %v1847 = vand.u32 %v1845, 7
        %v1848 = vsub.s32 0, %v1847
        %v1849 = vsel %vm1843, %v1848, %v1847
        %vm1850 = vcmp.lt.s32.totalorder %v1674, 0
        %v1851 = vsub.s32 0, %v1674
        %v1852 = vsel %vm1850, %v1851, %v1674
        %v1853 = vshrl.u32 %v1852, 3
        %v1854 = vand.u32 %v1852, 7
        %v1855 = vsub.s32 0, %v1854
        %v1856 = vsel %vm1850, %v1855, %v1854
        %vm1857 = vcmp.lt.s32.totalorder %v1675, 0
        %v1858 = vsub.s32 0, %v1675
        %v1859 = vsel %vm1857, %v1858, %v1675
        %v1860 = vshrl.u32 %v1859, 3
        %v1861 = vand.u32 %v1859, 7
        %v1862 = vsub.s32 0, %v1861
        %v1863 = vsel %vm1857, %v1862, %v1861
        %vm1864 = vcmp.lt.s32.totalorder %v1676, 0
        %v1865 = vsub.s32 0, %v1676
        %v1866 = vsel %vm1864, %v1865, %v1676
        %v1867 = vshrl.u32 %v1866, 3
        %v1868 = vand.u32 %v1866, 7
        %v1869 = vsub.s32 0, %v1868
        %v1870 = vsel %vm1864, %v1869, %v1868
        %vm1871 = vcmp.lt.s32.totalorder %v1677, 0
        %v1872 = vsub.s32 0, %v1677
        %v1873 = vsel %vm1871, %v1872, %v1677
        %v1874 = vshrl.u32 %v1873, 3
        %v1875 = vand.u32 %v1873, 7
        %v1876 = vsub.s32 0, %v1875
        %v1877 = vsel %vm1871, %v1876, %v1875
        %vm1878 = vcmp.lt.s32.totalorder %v1678, 0
        %v1879 = vsub.s32 0, %v1678
        %v1880 = vsel %vm1878, %v1879, %v1678
        %v1881 = vshrl.u32 %v1880, 3
        %v1882 = vand.u32 %v1880, 7
        %v1883 = vsub.s32 0, %v1882
        %v1884 = vsel %vm1878, %v1883, %v1882
        %vm1885 = vcmp.lt.s32.totalorder %v1679, 0
        %v1886 = vsub.s32 0, %v1679
        %v1887 = vsel %vm1885, %v1886, %v1679
        %v1888 = vshrl.u32 %v1887, 3
        %v1889 = vand.u32 %v1887, 7
        %v1890 = vsub.s32 0, %v1889
        %v1891 = vsel %vm1885, %v1890, %v1889
        %vm1892 = vcmp.lt.s32.totalorder %v1680, 0
        %v1893 = vsub.s32 0, %v1680
        %v1894 = vsel %vm1892, %v1893, %v1680
        %v1895 = vshrl.u32 %v1894, 3
        %v1896 = vand.u32 %v1894, 7
        %v1897 = vsub.s32 0, %v1896
        %v1898 = vsel %vm1892, %v1897, %v1896
        %vm1899 = vcmp.lt.s32.totalorder %v1681, 0
        %v1900 = vsub.s32 0, %v1681
        %v1901 = vsel %vm1899, %v1900, %v1681
        %v1902 = vshrl.u32 %v1901, 3
        %v1903 = vand.u32 %v1901, 7
        %v1904 = vsub.s32 0, %v1903
        %v1905 = vsel %vm1899, %v1904, %v1903
        %vm1906 = vcmp.ne.s32.totalorder %v1688, 0
        %vm1907 = vcmp.ne.s32.totalorder %v1695, 0
        %vm1908 = vcmp.ne.s32.totalorder %v1702, 0
        %vm1909 = vcmp.ne.s32.totalorder %v1709, 0
        %vm1910 = vcmp.ne.s32.totalorder %v1716, 0
        %vm1911 = vcmp.ne.s32.totalorder %v1723, 0
        %vm1912 = vcmp.ne.s32.totalorder %v1730, 0
        %vm1913 = vcmp.ne.s32.totalorder %v1737, 0
        %vm1914 = vcmp.ne.s32.totalorder %v1744, 0
        %vm1915 = vcmp.ne.s32.totalorder %v1751, 0
        %vm1916 = vcmp.ne.s32.totalorder %v1758, 0
        %vm1917 = vcmp.ne.s32.totalorder %v1765, 0
        %vm1918 = vcmp.ne.s32.totalorder %v1772, 0
        %vm1919 = vcmp.ne.s32.totalorder %v1779, 0
        %vm1920 = vcmp.ne.s32.totalorder %v1786, 0
        %vm1921 = vcmp.ne.s32.totalorder %v1793, 0
        %vm1922 = vcmp.ne.s32.totalorder %v1800, 0
        %vm1923 = vcmp.ne.s32.totalorder %v1807, 0
        %vm1924 = vcmp.ne.s32.totalorder %v1814, 0
        %vm1925 = vcmp.ne.s32.totalorder %v1821, 0
        %vm1926 = vcmp.ne.s32.totalorder %v1828, 0
        %vm1927 = vcmp.ne.s32.totalorder %v1835, 0
        %vm1928 = vcmp.ne.s32.totalorder %v1842, 0
        %vm1929 = vcmp.ne.s32.totalorder %v1849, 0
        %vm1930 = vcmp.ne.s32.totalorder %v1856, 0
        %vm1931 = vcmp.ne.s32.totalorder %v1863, 0
        %vm1932 = vcmp.ne.s32.totalorder %v1870, 0
        %vm1933 = vcmp.ne.s32.totalorder %v1877, 0
        %vm1934 = vcmp.ne.s32.totalorder %v1884, 0
        %vm1935 = vcmp.ne.s32.totalorder %v1891, 0
        %vm1936 = vcmp.ne.s32.totalorder %v1898, 0
        %vm1937 = vcmp.ne.s32.totalorder %v1905, 0
        %vm1938 = vcmp.lt.s32.totalorder %v1688, 0
        %vm1939 = vcmp.lt.s32.totalorder %v1695, 0
        %vm1940 = vcmp.lt.s32.totalorder %v1702, 0
        %vm1941 = vcmp.lt.s32.totalorder %v1709, 0
        %vm1942 = vcmp.lt.s32.totalorder %v1716, 0
        %vm1943 = vcmp.lt.s32.totalorder %v1723, 0
        %vm1944 = vcmp.lt.s32.totalorder %v1730, 0
        %vm1945 = vcmp.lt.s32.totalorder %v1737, 0
        %vm1946 = vcmp.lt.s32.totalorder %v1744, 0
        %vm1947 = vcmp.lt.s32.totalorder %v1751, 0
        %vm1948 = vcmp.lt.s32.totalorder %v1758, 0
        %vm1949 = vcmp.lt.s32.totalorder %v1765, 0
        %vm1950 = vcmp.lt.s32.totalorder %v1772, 0
        %vm1951 = vcmp.lt.s32.totalorder %v1779, 0
        %vm1952 = vcmp.lt.s32.totalorder %v1786, 0
        %vm1953 = vcmp.lt.s32.totalorder %v1793, 0
        %vm1954 = vcmp.lt.s32.totalorder %v1800, 0
        %vm1955 = vcmp.lt.s32.totalorder %v1807, 0
        %vm1956 = vcmp.lt.s32.totalorder %v1814, 0
        %vm1957 = vcmp.lt.s32.totalorder %v1821, 0
        %vm1958 = vcmp.lt.s32.totalorder %v1828, 0
        %vm1959 = vcmp.lt.s32.totalorder %v1835, 0
        %vm1960 = vcmp.lt.s32.totalorder %v1842, 0
        %vm1961 = vcmp.lt.s32.totalorder %v1849, 0
        %vm1962 = vcmp.lt.s32.totalorder %v1856, 0
        %vm1963 = vcmp.lt.s32.totalorder %v1863, 0
        %vm1964 = vcmp.lt.s32.totalorder %v1870, 0
        %vm1965 = vcmp.lt.s32.totalorder %v1877, 0
        %vm1966 = vcmp.lt.s32.totalorder %v1884, 0
        %vm1967 = vcmp.lt.s32.totalorder %v1891, 0
        %vm1968 = vcmp.lt.s32.totalorder %v1898, 0
        %vm1969 = vcmp.lt.s32.totalorder %v1905, 0
        %vm1970 = vmand %vm1938, %vm1906
        %vm1971 = vmand %vm1939, %vm1907
        %vm1972 = vmand %vm1940, %vm1908
        %vm1973 = vmand %vm1941, %vm1909
        %vm1974 = vmand %vm1942, %vm1910
        %vm1975 = vmand %vm1943, %vm1911
        %vm1976 = vmand %vm1944, %vm1912
        %vm1977 = vmand %vm1945, %vm1913
        %vm1978 = vmand %vm1946, %vm1914
        %vm1979 = vmand %vm1947, %vm1915
        %vm1980 = vmand %vm1948, %vm1916
        %vm1981 = vmand %vm1949, %vm1917
        %vm1982 = vmand %vm1950, %vm1918
        %vm1983 = vmand %vm1951, %vm1919
        %vm1984 = vmand %vm1952, %vm1920
        %vm1985 = vmand %vm1953, %vm1921
        %vm1986 = vmand %vm1954, %vm1922
        %vm1987 = vmand %vm1955, %vm1923
        %vm1988 = vmand %vm1956, %vm1924
        %vm1989 = vmand %vm1957, %vm1925
        %vm1990 = vmand %vm1958, %vm1926
        %vm1991 = vmand %vm1959, %vm1927
        %vm1992 = vmand %vm1960, %vm1928
        %vm1993 = vmand %vm1961, %vm1929
        %vm1994 = vmand %vm1962, %vm1930
        %vm1995 = vmand %vm1963, %vm1931
        %vm1996 = vmand %vm1964, %vm1932
        %vm1997 = vmand %vm1965, %vm1933
        %vm1998 = vmand %vm1966, %vm1934
        %vm1999 = vmand %vm1967, %vm1935
        %vm2000 = vmand %vm1968, %vm1936
        %vm2001 = vmand %vm1969, %vm1937
        %v2002 = vadd.s32 %v1688, 8
        %v2003 = vadd.s32 %v1695, 8
        %v2004 = vadd.s32 %v1702, 8
        %v2005 = vadd.s32 %v1709, 8
        %v2006 = vadd.s32 %v1716, 8
        %v2007 = vadd.s32 %v1723, 8
        %v2008 = vadd.s32 %v1730, 8
        %v2009 = vadd.s32 %v1737, 8
        %v2010 = vadd.s32 %v1744, 8
        %v2011 = vadd.s32 %v1751, 8
        %v2012 = vadd.s32 %v1758, 8
        %v2013 = vadd.s32 %v1765, 8
        %v2014 = vadd.s32 %v1772, 8
        %v2015 = vadd.s32 %v1779, 8
        %v2016 = vadd.s32 %v1786, 8
        %v2017 = vadd.s32 %v1793, 8
        %v2018 = vadd.s32 %v1800, 8
        %v2019 = vadd.s32 %v1807, 8
        %v2020 = vadd.s32 %v1814, 8
        %v2021 = vadd.s32 %v1821, 8
        %v2022 = vadd.s32 %v1828, 8
        %v2023 = vadd.s32 %v1835, 8
        %v2024 = vadd.s32 %v1842, 8
        %v2025 = vadd.s32 %v1849, 8
        %v2026 = vadd.s32 %v1856, 8
        %v2027 = vadd.s32 %v1863, 8
        %v2028 = vadd.s32 %v1870, 8
        %v2029 = vadd.s32 %v1877, 8
        %v2030 = vadd.s32 %v1884, 8
        %v2031 = vadd.s32 %v1891, 8
        %v2032 = vadd.s32 %v1898, 8
        %v2033 = vadd.s32 %v1905, 8
        %v2034 = vsel %vm1970, %v2002, %v1688
        %v2035 = vsel %vm1971, %v2003, %v1695
        %v2036 = vsel %vm1972, %v2004, %v1702
        %v2037 = vsel %vm1973, %v2005, %v1709
        %v2038 = vsel %vm1974, %v2006, %v1716
        %v2039 = vsel %vm1975, %v2007, %v1723
        %v2040 = vsel %vm1976, %v2008, %v1730
        %v2041 = vsel %vm1977, %v2009, %v1737
        %v2042 = vsel %vm1978, %v2010, %v1744
        %v2043 = vsel %vm1979, %v2011, %v1751
        %v2044 = vsel %vm1980, %v2012, %v1758
        %v2045 = vsel %vm1981, %v2013, %v1765
        %v2046 = vsel %vm1982, %v2014, %v1772
        %v2047 = vsel %vm1983, %v2015, %v1779
        %v2048 = vsel %vm1984, %v2016, %v1786
        %v2049 = vsel %vm1985, %v2017, %v1793
        %v2050 = vsel %vm1986, %v2018, %v1800
        %v2051 = vsel %vm1987, %v2019, %v1807
        %v2052 = vsel %vm1988, %v2020, %v1814
        %v2053 = vsel %vm1989, %v2021, %v1821
        %v2054 = vsel %vm1990, %v2022, %v1828
        %v2055 = vsel %vm1991, %v2023, %v1835
        %v2056 = vsel %vm1992, %v2024, %v1842
        %v2057 = vsel %vm1993, %v2025, %v1849
        %v2058 = vsel %vm1994, %v2026, %v1856
        %v2059 = vsel %vm1995, %v2027, %v1863
        %v2060 = vsel %vm1996, %v2028, %v1870
        %v2061 = vsel %vm1997, %v2029, %v1877
        %v2062 = vsel %vm1998, %v2030, %v1884
        %v2063 = vsel %vm1999, %v2031, %v1891
        %v2064 = vsel %vm2000, %v2032, %v1898
        %v2065 = vsel %vm2001, %v2033, %v1905
        %v2066 = vlaneseq
        %v2067 = vand.u32 %v2066, 127
        %v2068 = vadd.s32 %v2067, 128
        %vm2069 = vcmp.lt.s32.totalorder %v2067, 0
        %v2070 = vsub.s32 0, %v2067
        %v2071 = vsel %vm2069, %v2070, %v2067
        %v2072 = vshrl.u32 %v2071, 3
        %v2073 = vand.u32 %v2071, 7
        %v2074 = vsub.s32 0, %v2073
        %v2075 = vsel %vm2069, %v2074, %v2073
        %vm2076 = vcmp.lt.s32.totalorder %v2068, 0
        %v2077 = vsub.s32 0, %v2068
        %v2078 = vsel %vm2076, %v2077, %v2068
        %v2079 = vshrl.u32 %v2078, 3
        %v2080 = vand.u32 %v2078, 7
        %v2081 = vsub.s32 0, %v2080
        %v2082 = vsel %vm2076, %v2081, %v2080
        %vm2083 = vcmp.ne.s32.totalorder %v2075, 0
        %vm2084 = vcmp.ne.s32.totalorder %v2082, 0
        %vm2085 = vcmp.lt.s32.totalorder %v2075, 0
        %vm2086 = vcmp.lt.s32.totalorder %v2082, 0
        %vm2087 = vmand %vm2085, %vm2083
        %vm2088 = vmand %vm2086, %vm2084
        %v2089 = vadd.s32 %v2075, 8
        %v2090 = vadd.s32 %v2082, 8
        %v2091 = vsel %vm2087, %v2089, %v2075
        %v2092 = vsel %vm2088, %v2090, %v2082
        %vm2093 = vcmp.eq.s32.totalorder %v2034, %v2091
        %vm2094 = vcmp.eq.s32.totalorder %v2034, %v2092
        %vm2095 = vcmp.eq.s32.totalorder %v2035, %v2091
        %vm2096 = vcmp.eq.s32.totalorder %v2035, %v2092
        %vm2097 = vcmp.eq.s32.totalorder %v2036, %v2091
        %vm2098 = vcmp.eq.s32.totalorder %v2036, %v2092
        %vm2099 = vcmp.eq.s32.totalorder %v2037, %v2091
        %vm2100 = vcmp.eq.s32.totalorder %v2037, %v2092
        %vm2101 = vcmp.eq.s32.totalorder %v2038, %v2091
        %vm2102 = vcmp.eq.s32.totalorder %v2038, %v2092
        %vm2103 = vcmp.eq.s32.totalorder %v2039, %v2091
        %vm2104 = vcmp.eq.s32.totalorder %v2039, %v2092
        %vm2105 = vcmp.eq.s32.totalorder %v2040, %v2091
        %vm2106 = vcmp.eq.s32.totalorder %v2040, %v2092
        %vm2107 = vcmp.eq.s32.totalorder %v2041, %v2091
        %vm2108 = vcmp.eq.s32.totalorder %v2041, %v2092
        %vm2109 = vcmp.eq.s32.totalorder %v2042, %v2091
        %vm2110 = vcmp.eq.s32.totalorder %v2042, %v2092
        %vm2111 = vcmp.eq.s32.totalorder %v2043, %v2091
        %vm2112 = vcmp.eq.s32.totalorder %v2043, %v2092
        %vm2113 = vcmp.eq.s32.totalorder %v2044, %v2091
        %vm2114 = vcmp.eq.s32.totalorder %v2044, %v2092
        %vm2115 = vcmp.eq.s32.totalorder %v2045, %v2091
        %vm2116 = vcmp.eq.s32.totalorder %v2045, %v2092
        %vm2117 = vcmp.eq.s32.totalorder %v2046, %v2091
        %vm2118 = vcmp.eq.s32.totalorder %v2046, %v2092
        %vm2119 = vcmp.eq.s32.totalorder %v2047, %v2091
        %vm2120 = vcmp.eq.s32.totalorder %v2047, %v2092
        %vm2121 = vcmp.eq.s32.totalorder %v2048, %v2091
        %vm2122 = vcmp.eq.s32.totalorder %v2048, %v2092
        %vm2123 = vcmp.eq.s32.totalorder %v2049, %v2091
        %vm2124 = vcmp.eq.s32.totalorder %v2049, %v2092
        %vm2125 = vcmp.eq.s32.totalorder %v2050, %v2091
        %vm2126 = vcmp.eq.s32.totalorder %v2050, %v2092
        %vm2127 = vcmp.eq.s32.totalorder %v2051, %v2091
        %vm2128 = vcmp.eq.s32.totalorder %v2051, %v2092
        %vm2129 = vcmp.eq.s32.totalorder %v2052, %v2091
        %vm2130 = vcmp.eq.s32.totalorder %v2052, %v2092
        %vm2131 = vcmp.eq.s32.totalorder %v2053, %v2091
        %vm2132 = vcmp.eq.s32.totalorder %v2053, %v2092
        %vm2133 = vcmp.eq.s32.totalorder %v2054, %v2091
        %vm2134 = vcmp.eq.s32.totalorder %v2054, %v2092
        %vm2135 = vcmp.eq.s32.totalorder %v2055, %v2091
        %vm2136 = vcmp.eq.s32.totalorder %v2055, %v2092
        %vm2137 = vcmp.eq.s32.totalorder %v2056, %v2091
        %vm2138 = vcmp.eq.s32.totalorder %v2056, %v2092
        %vm2139 = vcmp.eq.s32.totalorder %v2057, %v2091
        %vm2140 = vcmp.eq.s32.totalorder %v2057, %v2092
        %vm2141 = vcmp.eq.s32.totalorder %v2058, %v2091
        %vm2142 = vcmp.eq.s32.totalorder %v2058, %v2092
        %vm2143 = vcmp.eq.s32.totalorder %v2059, %v2091
        %vm2144 = vcmp.eq.s32.totalorder %v2059, %v2092
        %vm2145 = vcmp.eq.s32.totalorder %v2060, %v2091
        %vm2146 = vcmp.eq.s32.totalorder %v2060, %v2092
        %vm2147 = vcmp.eq.s32.totalorder %v2061, %v2091
        %vm2148 = vcmp.eq.s32.totalorder %v2061, %v2092
        %vm2149 = vcmp.eq.s32.totalorder %v2062, %v2091
        %vm2150 = vcmp.eq.s32.totalorder %v2062, %v2092
        %vm2151 = vcmp.eq.s32.totalorder %v2063, %v2091
        %vm2152 = vcmp.eq.s32.totalorder %v2063, %v2092
        %vm2153 = vcmp.eq.s32.totalorder %v2064, %v2091
        %vm2154 = vcmp.eq.s32.totalorder %v2064, %v2092
        %vm2155 = vcmp.eq.s32.totalorder %v2065, %v2091
        %vm2156 = vcmp.eq.s32.totalorder %v2065, %v2092
        %v2157 = vsel %vm2093, 1, 0
        %v2158 = vsel %vm2094, 1, 0
        %v2159 = vsel %vm2095, 1, 0
        %v2160 = vsel %vm2096, 1, 0
        %v2161 = vsel %vm2097, 1, 0
        %v2162 = vsel %vm2098, 1, 0
        %v2163 = vsel %vm2099, 1, 0
        %v2164 = vsel %vm2100, 1, 0
        %v2165 = vsel %vm2101, 1, 0
        %v2166 = vsel %vm2102, 1, 0
        %v2167 = vsel %vm2103, 1, 0
        %v2168 = vsel %vm2104, 1, 0
        %v2169 = vsel %vm2105, 1, 0
        %v2170 = vsel %vm2106, 1, 0
        %v2171 = vsel %vm2107, 1, 0
        %v2172 = vsel %vm2108, 1, 0
        %v2173 = vsel %vm2109, 1, 0
        %v2174 = vsel %vm2110, 1, 0
        %v2175 = vsel %vm2111, 1, 0
        %v2176 = vsel %vm2112, 1, 0
        %v2177 = vsel %vm2113, 1, 0
        %v2178 = vsel %vm2114, 1, 0
        %v2179 = vsel %vm2115, 1, 0
        %v2180 = vsel %vm2116, 1, 0
        %v2181 = vsel %vm2117, 1, 0
        %v2182 = vsel %vm2118, 1, 0
        %v2183 = vsel %vm2119, 1, 0
        %v2184 = vsel %vm2120, 1, 0
        %v2185 = vsel %vm2121, 1, 0
        %v2186 = vsel %vm2122, 1, 0
        %v2187 = vsel %vm2123, 1, 0
        %v2188 = vsel %vm2124, 1, 0
        %v2189 = vsel %vm2125, 1, 0
        %v2190 = vsel %vm2126, 1, 0
        %v2191 = vsel %vm2127, 1, 0
        %v2192 = vsel %vm2128, 1, 0
        %v2193 = vsel %vm2129, 1, 0
        %v2194 = vsel %vm2130, 1, 0
        %v2195 = vsel %vm2131, 1, 0
        %v2196 = vsel %vm2132, 1, 0
        %v2197 = vsel %vm2133, 1, 0
        %v2198 = vsel %vm2134, 1, 0
        %v2199 = vsel %vm2135, 1, 0
        %v2200 = vsel %vm2136, 1, 0
        %v2201 = vsel %vm2137, 1, 0
        %v2202 = vsel %vm2138, 1, 0
        %v2203 = vsel %vm2139, 1, 0
        %v2204 = vsel %vm2140, 1, 0
        %v2205 = vsel %vm2141, 1, 0
        %v2206 = vsel %vm2142, 1, 0
        %v2207 = vsel %vm2143, 1, 0
        %v2208 = vsel %vm2144, 1, 0
        %v2209 = vsel %vm2145, 1, 0
        %v2210 = vsel %vm2146, 1, 0
        %v2211 = vsel %vm2147, 1, 0
        %v2212 = vsel %vm2148, 1, 0
        %v2213 = vsel %vm2149, 1, 0
        %v2214 = vsel %vm2150, 1, 0
        %v2215 = vsel %vm2151, 1, 0
        %v2216 = vsel %vm2152, 1, 0
        %v2217 = vsel %vm2153, 1, 0
        %v2218 = vsel %vm2154, 1, 0
        %v2219 = vsel %vm2155, 1, 0
        %v2220 = vsel %vm2156, 1, 0
        %v2221 = vcvt.s32.f32 %v2157
        %v2222 = vcvt.s32.f32 %v2158
        %v2223 = vcvt.s32.f32 %v2159
        %v2224 = vcvt.s32.f32 %v2160
        %v2225 = vcvt.s32.f32 %v2161
        %v2226 = vcvt.s32.f32 %v2162
        %v2227 = vcvt.s32.f32 %v2163
        %v2228 = vcvt.s32.f32 %v2164
        %v2229 = vcvt.s32.f32 %v2165
        %v2230 = vcvt.s32.f32 %v2166
        %v2231 = vcvt.s32.f32 %v2167
        %v2232 = vcvt.s32.f32 %v2168
        %v2233 = vcvt.s32.f32 %v2169
        %v2234 = vcvt.s32.f32 %v2170
        %v2235 = vcvt.s32.f32 %v2171
        %v2236 = vcvt.s32.f32 %v2172
        %v2237 = vcvt.s32.f32 %v2173
        %v2238 = vcvt.s32.f32 %v2174
        %v2239 = vcvt.s32.f32 %v2175
        %v2240 = vcvt.s32.f32 %v2176
        %v2241 = vcvt.s32.f32 %v2177
        %v2242 = vcvt.s32.f32 %v2178
        %v2243 = vcvt.s32.f32 %v2179
        %v2244 = vcvt.s32.f32 %v2180
        %v2245 = vcvt.s32.f32 %v2181
        %v2246 = vcvt.s32.f32 %v2182
        %v2247 = vcvt.s32.f32 %v2183
        %v2248 = vcvt.s32.f32 %v2184
        %v2249 = vcvt.s32.f32 %v2185
        %v2250 = vcvt.s32.f32 %v2186
        %v2251 = vcvt.s32.f32 %v2187
        %v2252 = vcvt.s32.f32 %v2188
        %v2253 = vcvt.s32.f32 %v2189
        %v2254 = vcvt.s32.f32 %v2190
        %v2255 = vcvt.s32.f32 %v2191
        %v2256 = vcvt.s32.f32 %v2192
        %v2257 = vcvt.s32.f32 %v2193
        %v2258 = vcvt.s32.f32 %v2194
        %v2259 = vcvt.s32.f32 %v2195
        %v2260 = vcvt.s32.f32 %v2196
        %v2261 = vcvt.s32.f32 %v2197
        %v2262 = vcvt.s32.f32 %v2198
        %v2263 = vcvt.s32.f32 %v2199
        %v2264 = vcvt.s32.f32 %v2200
        %v2265 = vcvt.s32.f32 %v2201
        %v2266 = vcvt.s32.f32 %v2202
        %v2267 = vcvt.s32.f32 %v2203
        %v2268 = vcvt.s32.f32 %v2204
        %v2269 = vcvt.s32.f32 %v2205
        %v2270 = vcvt.s32.f32 %v2206
        %v2271 = vcvt.s32.f32 %v2207
        %v2272 = vcvt.s32.f32 %v2208
        %v2273 = vcvt.s32.f32 %v2209
        %v2274 = vcvt.s32.f32 %v2210
        %v2275 = vcvt.s32.f32 %v2211
        %v2276 = vcvt.s32.f32 %v2212
        %v2277 = vcvt.s32.f32 %v2213
        %v2278 = vcvt.s32.f32 %v2214
        %v2279 = vcvt.s32.f32 %v2215
        %v2280 = vcvt.s32.f32 %v2216
        %v2281 = vcvt.s32.f32 %v2217
        %v2282 = vcvt.s32.f32 %v2218
        %v2283 = vcvt.s32.f32 %v2219
        %v2284 = vcvt.s32.f32 %v2220
        %v2285 = vld [vmem:[#allocation3] sm:$0xf]
        %v2288 = vunpack.c.l.s4 1983009808
        %v2289 = vunpack.c.0.s8 %v2288
        %v2290 = vlaneseq
        %v2291 = vshrl.u32 %v2290, 7
        %v2292 = vsub.s32 %v2289, %v2291
        %v2293 = vrot.slane %v2285, %v2292
        %v2294 = vcombine.high %v2293, %v2293
        %2297 = vmatprep.subr.mxu0 %v2222
        %2298 = vmatpush1.msra.mxu0 %v2221
        %2299 = vmatprep.subr.mxu0 %v2224
        %2300 = vmatpush1.msra.mxu0 %v2223
        %2301 = vmatprep.subr.mxu0 %v2226
        %2302 = vmatpush1.msra.mxu0 %v2225
        %2303 = vmatprep.subr.mxu0 %v2228
        %2304 = vmatpush1.msra.mxu0 %v2227
        %2305 = vmatprep.subr.mxu0 %v2230
        %2306 = vmatpush1.msra.mxu0 %v2229
        %2307 = vmatprep.subr.mxu0 %v2232
        %2308 = vmatpush1.msra.mxu0 %v2231
        %2309 = vmatprep.subr.mxu0 %v2234
        %2310 = vmatpush1.msra.mxu0 %v2233
        %2311 = vmatprep.subr.mxu0 %v2236
        %2312 = vmatpush1.msra.mxu0 %v2235
        %2313 = vmatprep.subr.mxu0 %v2238
        %2314 = vmatpush1.msra.mxu0 %v2237
        %2315 = vmatprep.subr.mxu0 %v2240
        %2316 = vmatpush1.msra.mxu0 %v2239
        %2317 = vmatprep.subr.mxu0 %v2242
        %2318 = vmatpush1.msra.mxu0 %v2241
        %2319 = vmatprep.subr.mxu0 %v2244
        %2320 = vmatpush1.msra.mxu0 %v2243
        %2321 = vmatprep.subr.mxu0 %v2246
        %2322 = vmatpush1.msra.mxu0 %v2245
        %2323 = vmatprep.subr.mxu0 %v2248
        %2324 = vmatpush1.msra.mxu0 %v2247
        %2325 = vmatprep.subr.mxu0 %v2250
        %2326 = vmatpush1.msra.mxu0 %v2249
        %2327 = vmatprep.subr.mxu0 %v2252
        %2328 = vmatpush1.msra.mxu0 %v2251
        %2329 = vmatprep.subr.mxu0 %v2254
        %2330 = vmatpush1.msra.mxu0 %v2253
        %2331 = vmatprep.subr.mxu0 %v2256
        %2332 = vmatpush1.msra.mxu0 %v2255
        %2333 = vmatprep.subr.mxu0 %v2258
        %2334 = vmatpush1.msra.mxu0 %v2257
        %2335 = vmatprep.subr.mxu0 %v2260
        %2336 = vmatpush1.msra.mxu0 %v2259
        %2337 = vmatprep.subr.mxu0 %v2262
        %2338 = vmatpush1.msra.mxu0 %v2261
        %2339 = vmatprep.subr.mxu0 %v2264
        %2340 = vmatpush1.msra.mxu0 %v2263
        %2341 = vmatprep.subr.mxu0 %v2266
        %2342 = vmatpush1.msra.mxu0 %v2265
        %2343 = vmatprep.subr.mxu0 %v2268
        %2344 = vmatpush1.msra.mxu0 %v2267
        %2345 = vmatprep.subr.mxu0 %v2270
        %2346 = vmatpush1.msra.mxu0 %v2269
        %2347 = vmatprep.subr.mxu0 %v2272
        %2348 = vmatpush1.msra.mxu0 %v2271
        %2349 = vmatprep.subr.mxu0 %v2274
        %2350 = vmatpush1.msra.mxu0 %v2273
        %2351 = vmatprep.subr.mxu0 %v2276
        %2352 = vmatpush1.msra.mxu0 %v2275
        %2353 = vmatprep.subr.mxu0 %v2278
        %2354 = vmatpush1.msra.mxu0 %v2277
        %2355 = vmatprep.subr.mxu0 %v2280
        %2356 = vmatpush1.msra.mxu0 %v2279
        %2357 = vmatprep.subr.mxu0 %v2282
        %2358 = vmatpush1.msra.mxu0 %v2281
        %2359 = vmatprep.subr.mxu0 %v2284
        %2360 = vmatpush1.msra.mxu0 %v2283
        %2361 = vmatprep.mubr.f32.mxu0 %v2294
        %2362 = vmatmul.mubr.f32.gmra.mrb[0].mxu0 %v2293
        %v2363 = vpop.f32.mrb[0].mxu0
        %v2364 = vadd.f32 0.0, %v2363
        %v2365 = vpop.f32.mrb[0].mxu0
        %v2366 = vadd.f32 0.0, %v2365
        %2367 = vdwg.mxu0
        %v2368 = vmul.f32 %v2364, 0.00048828125
        %v2369 = vmul.f32 %v2366, 0.00048828125
        %v2370 = vmul.f32 %v2368, %v2368
        %v2371 = vmul.f32 %v2369, %v2369
        %v2374 = vrot.slane %v2370, 7
        %v2375 = vrot.slane %v2371, 7
        %v2378 = vsub.f32 %v2368, %v2374
        %v2379 = vsub.f32 %v2369, %v2375
        %v2380 = vmax.f32 %v2378, 0.0
        %v2381 = vmax.f32 %v2379, 0.0
        %v2382 = vld [vmem:[%s4] sm:$0x3]
        %v2383 = vadd.f32 %v2380, 1e-05
        %v2384 = vadd.f32 %v2381, 1e-05
        %v2385 = vrsqrt.pop %v2383
        %v2386 = vrsqrt.pop %v2384
        %v2389 = vcombine.low %v2385, %v2386
        %v2391 = vunpack.c.l.s4 1966171168
        %v2392 = vunpack.c.0.s8 %v2391
        %v2393 = vlaneseq
        %v2394 = vshrl.u32 %v2393, 7
        %v2395 = vsub.s32 %v2392, %v2394
        %v2396 = vrot.slane %v2389, %v2395
        %v2397 = vcombine.high %v2396, %v2396
        %v2399 = vunpack.c.l.s4 1966171168
        %v2400 = vunpack.c.0.s8 %v2399
        %v2401 = vlaneseq
        %v2402 = vshrl.u32 %v2401, 7
        %v2403 = vsub.s32 %v2400, %v2402
        %v2404 = vrot.slane %v2397, %v2403
        %v2406 = vmul.f32 %v2382, %v2404
        %v2407 = vld [vmem:[%s5] sm:$0x3]
        %v2409 = vlaneseq
        %v2410 = vshrl.u32 %v2409, 7
        %v2411 = vsub.s32 0, %v2410
        %v2412 = vrot.slane %v2406, %v2411
        %v2413 = vlaneseq
        %v2414 = vshrl.u32 %v2413, 7
        %v2415 = vsub.s32 1, %v2414
        %v2416 = vrot.slane %v2406, %v2415
        %v2419 = vmul.f32 %v2368, %v2412
        %v2420 = vmul.f32 %v2369, %v2416
        %v2423 = vcombine.low %v2419, %v2420
        %v2425 = vunpack.c.l.s4 1966171168
        %v2426 = vunpack.c.0.s8 %v2425
        %v2427 = vlaneseq
        %v2428 = vshrl.u32 %v2427, 7
        %v2429 = vsub.s32 %v2426, %v2428
        %v2430 = vrot.slane %v2423, %v2429
        %v2432 = vunpack.c.l.s4 1966171168
        %v2433 = vunpack.c.0.s8 %v2432
        %v2434 = vlaneseq
        %v2435 = vshrl.u32 %v2434, 7
        %v2436 = vsub.s32 %v2433, %v2435
        %v2437 = vrot.slane %v2430, %v2436
        %v2439 = vsub.f32 %v2407, %v2437
        %v2440 = vld [vmem:[%s6] sm:$0xff]
        %v2441 = vld [vmem:[%s6 + $0x8] sm:$0xff]
        %v2442 = vld [vmem:[%s6 + $0x10] sm:$0xff]
        %v2443 = vld [vmem:[%s6 + $0x18] sm:$0xff]
        %v2444 = vld [vmem:[%s6 + $0x20] sm:$0xff]
        %v2445 = vld [vmem:[%s6 + $0x28] sm:$0xff]
        %v2446 = vld [vmem:[%s6 + $0x30] sm:$0xff]
        %v2447 = vld [vmem:[%s6 + $0x38] sm:$0xff]
        %v2448 = vld [vmem:[%s6 + $0x40] sm:$0xff]
        %v2449 = vld [vmem:[%s6 + $0x48] sm:$0xff]
        %v2450 = vld [vmem:[%s6 + $0x50] sm:$0xff]
        %v2451 = vld [vmem:[%s6 + $0x58] sm:$0xff]
        %v2452 = vld [vmem:[%s6 + $0x60] sm:$0xff]
        %v2453 = vld [vmem:[%s6 + $0x68] sm:$0xff]
        %v2454 = vld [vmem:[%s6 + $0x70] sm:$0xff]
        %v2455 = vld [vmem:[%s6 + $0x78] sm:$0xff]
        %v2456 = vmul.f32 %v2440, %v2412
        %v2457 = vmul.f32 %v2441, %v2416
        %v2458 = vmul.f32 %v2442, %v2412
        %v2459 = vmul.f32 %v2443, %v2416
        %v2460 = vmul.f32 %v2444, %v2412
        %v2461 = vmul.f32 %v2445, %v2416
        %v2462 = vmul.f32 %v2446, %v2412
        %v2463 = vmul.f32 %v2447, %v2416
        %v2464 = vmul.f32 %v2448, %v2412
        %v2465 = vmul.f32 %v2449, %v2416
        %v2466 = vmul.f32 %v2450, %v2412
        %v2467 = vmul.f32 %v2451, %v2416
        %v2468 = vmul.f32 %v2452, %v2412
        %v2469 = vmul.f32 %v2453, %v2416
        %v2470 = vmul.f32 %v2454, %v2412
        %v2471 = vmul.f32 %v2455, %v2416
        %v2473 = vlaneseq
        %v2474 = vshrl.u32 %v2473, 7
        %v2475 = vsub.s32 0, %v2474
        %v2476 = vrot.slane %v2439, %v2475
        %v2477 = vlaneseq
        %v2478 = vshrl.u32 %v2477, 7
        %v2479 = vsub.s32 1, %v2478
        %v2480 = vrot.slane %v2439, %v2479
        %v2483 = vadd.f32 %v2456, %v2476
        %v2484 = vadd.f32 %v2457, %v2480
        %v2485 = vadd.f32 %v2458, %v2476
        %v2486 = vadd.f32 %v2459, %v2480
        %v2487 = vadd.f32 %v2460, %v2476
        %v2488 = vadd.f32 %v2461, %v2480
        %v2489 = vadd.f32 %v2462, %v2476
        %v2490 = vadd.f32 %v2463, %v2480
        %v2491 = vadd.f32 %v2464, %v2476
        %v2492 = vadd.f32 %v2465, %v2480
        %v2493 = vadd.f32 %v2466, %v2476
        %v2494 = vadd.f32 %v2467, %v2480
        %v2495 = vadd.f32 %v2468, %v2476
        %v2496 = vadd.f32 %v2469, %v2480
        %v2497 = vadd.f32 %v2470, %v2476
        %v2498 = vadd.f32 %v2471, %v2480
        %v2499 = vmax.f32 %v2483, 0.0
        %v2500 = vmax.f32 %v2484, 0.0
        %v2501 = vmax.f32 %v2485, 0.0
        %v2502 = vmax.f32 %v2486, 0.0
        %v2503 = vmax.f32 %v2487, 0.0
        %v2504 = vmax.f32 %v2488, 0.0
        %v2505 = vmax.f32 %v2489, 0.0
        %v2506 = vmax.f32 %v2490, 0.0
        %v2507 = vmax.f32 %v2491, 0.0
        %v2508 = vmax.f32 %v2492, 0.0
        %v2509 = vmax.f32 %v2493, 0.0
        %v2510 = vmax.f32 %v2494, 0.0
        %v2511 = vmax.f32 %v2495, 0.0
        %v2512 = vmax.f32 %v2496, 0.0
        %v2513 = vmax.f32 %v2497, 0.0
        %v2514 = vmax.f32 %v2498, 0.0
        %2515 = vst [vmem:[%s6] sm:$0xff] %v2499
        %2516 = vst [vmem:[%s6 + $0x8] sm:$0xff] %v2500
        %2517 = vst [vmem:[%s6 + $0x10] sm:$0xff] %v2501
        %2518 = vst [vmem:[%s6 + $0x18] sm:$0xff] %v2502
        %2519 = vst [vmem:[%s6 + $0x20] sm:$0xff] %v2503
        %2520 = vst [vmem:[%s6 + $0x28] sm:$0xff] %v2504
        %2521 = vst [vmem:[%s6 + $0x30] sm:$0xff] %v2505
        %2522 = vst [vmem:[%s6 + $0x38] sm:$0xff] %v2506
        %2523 = vst [vmem:[%s6 + $0x40] sm:$0xff] %v2507
        %2524 = vst [vmem:[%s6 + $0x48] sm:$0xff] %v2508
        %2525 = vst [vmem:[%s6 + $0x50] sm:$0xff] %v2509
        %2526 = vst [vmem:[%s6 + $0x58] sm:$0xff] %v2510
        %2527 = vst [vmem:[%s6 + $0x60] sm:$0xff] %v2511
        %2528 = vst [vmem:[%s6 + $0x68] sm:$0xff] %v2512
        %2529 = vst [vmem:[%s6 + $0x70] sm:$0xff] %v2513
        %2530 = vst [vmem:[%s6 + $0x78] sm:$0xff] %v2514
      $region52: #{up_forward.3} parent=43 // pred_fallthru
        _
      // Predicated region
      $region53: #{up_forward.3} parent=43 // pred_check
        %p2531 = pneg %p161
      $region54: #{up_forward.3} parent=43 // pred_check_branch
        %2533 = sbr.rel (%p2531) target = $region56
      $region55: #{up_forward.3} parent=43 // pred_region
        _
      $region56: #{up_forward.3} parent=43 // pred_fallthru
        _
      // Predicated region
      $region57: #{up_forward.3} parent=43 // pred_check
        %p2534 = pneg %p161
      $region58: #{up_forward.3} parent=43 // pred_check_branch
        %2536 = sbr.rel (%p2534) target = $region60
      $region59: #{up_forward.3} parent=43 // pred_region
        _
      $region60: #{up_forward.3} parent=43 // pred_fallthru
        _
    $region44: #{up_forward.3} parent=5 // pred_fallthru
      _
    %p2537 = scmp.le.s32.totalorder 2, %s12
    // Predicated region
    $region61: #{up_forward.3} parent=5 // pred_check
      %p2538 = pneg %p2537
    $region62: #{up_forward.3} parent=5 // pred_check_branch
      %2540 = sbr.rel (%p2538) target = $region64
    $region63: #{up_forward.3} parent=5 // pred_region
      %s2541 = ssub.s32 %s12, 2
    $region64: #{up_forward.3} parent=5 // pred_fallthru
      _
  $region6: #{up_forward.3} parent=0 // loop_footer
    %s16 = sadd.s32 1, %s12
  $region7: #{up_forward.3} parent=0 // loop_footer_branch
    %11 = sbr.rel target = $region3
  $region8: #{up_forward.3} parent=0 // loop_exit
    _

</llo_original>
